<compile_context>
chip_gen: v6e
topology: v6e:2x2x1
jax: 0.10.0
libtpu: 0.0.40
codegen_flags: <defaults>
</compile_context>

<pallas_src>
import functools
import math

import jax
import jax.numpy as jnp
from jax.experimental import pallas as pl
from jax.experimental.pallas import tpu as pltpu


# Per-grid-step byte budget for the streamed input+output tile (single
# buffer).  Double-buffered this stays under ~8 MiB, comfortably inside the
# scoped-VMEM defaults of v5e/v6e/v7x, while amortizing the ~0.35 us
# per-grid-step pipeline overhead.
_TILE_BYTES_TARGET = 2 * 1024 * 1024


def _lcm(a, b):
    return a * b // math.gcd(a, b)


def _conv1x1_bn_kernel(w_ref, b_ref, x_ref, o_ref, *, stride):
    """y = W @ subsample(x) + bias, lane-dense flat output.

    w_ref : (Cout, Cin)          1x1 conv weight with BN scale folded in
    b_ref : (Cout, 1)            folded BN bias (broadcast over lanes)
    x_ref : (Cin, [G,] Hin, Win) input rows at full W (stride folded here)
    o_ref : (Cout, L)            flat output, L = G * Hout * Wout
    """
    x = x_ref[...]
    cin = x.shape[0]
    h_in, w_in = x.shape[-2], x.shape[-1]
    x = x.reshape(-1, h_in, w_in)                         # (Cin*G, Hin, Win)
    if stride > 1:
        ho, wo = h_in // stride, w_in // stride
        # Strided spatial subsample on the VMEM-resident value: split the dim
        # and take index 0 (rows/cols 0, s, 2s, ...).  Keeps HBM traffic at a
        # single read of the input rows — no wrapper-side ::stride slice.
        x = x.reshape(-1, ho, stride, w_in)[:, :, 0, :]   # H subsample
        x = x.reshape(-1, ho, wo, stride)[:, :, :, 0]     # W subsample
    x = x.reshape(cin, -1)                                # (Cin, L)
    y = jnp.dot(w_ref[...], x, preferred_element_type=jnp.float32)
    o_ref[...] = (y + b_ref[...]).astype(o_ref.dtype)


def _select_rows_per_step(ho, wo, cin, cout, stride, n):
    """Output rows per grid step for the row-blocked (general) path.

    Non-full blocks must keep the flat output lane-dense ((rows*wo) % 128 == 0)
    and the input row-block sublane-aligned ((rows*stride) % 8 == 0).
    """
    unit = _lcm(128 // math.gcd(wo, 128), 8 // math.gcd(stride, 8))
    wp = wo * stride
    row_bytes = 4 * (cin * stride * wp + cout * wo)       # in + out per out-row
    rows = max(1, _TILE_BYTES_TARGET // row_bytes)
    if n == 1:
        # v7x megacore: aim for >= 2 grid blocks so both TensorCores get work.
        rows = min(rows, -(-ho // 2))
    rows = (rows // unit) * unit
    if rows <= 0 or rows >= ho:
        rows = ho                                         # full block: always legal
    return rows


def _select_batches_per_step(n, m, cin, cout, hp, wp):
    """Batches per grid step for the batch-packed (small feature map) path."""
    unit = 128 // math.gcd(m, 128)                        # keep (tn*m) % 128 == 0
    img_bytes = 4 * (cin * hp * wp + cout * m)
    tn = max(1, _TILE_BYTES_TARGET // img_bytes)
    tn = max(unit, (tn // unit) * unit)
    if tn >= n:
        tn = n
        if n > unit:                                      # leave >= 2 blocks (v7x)
            half = ((-(-n // 2)) // unit) * unit
            if 0 < half < n:
                tn = half
    return tn


@functools.partial(jax.jit, static_argnames=("stride", "eps"))
def _downsample_forward(x_nchw, weight, running_mean, running_var, gamma, beta,
                        *, stride, eps=1e-5):
    """1x1 strided conv (bias=False) + inference BatchNorm2d, NCHW in/out.

    x_nchw : (N, Cin, H, W) float32
    weight : (Cout, Cin)    1x1 conv weight (spatial dims squeezed)
    running_mean, running_var : (Cout,) BN buffers
    gamma, beta : optional (Cout,) BN affine params (None => affine=False)
    """
    n, cin, h, w = x_nchw.shape
    cout = weight.shape[0]
    dtype = x_nchw.dtype

    ho = -(-h // stride)
    wo = -(-w // stride)
    m = ho * wo
    hp, wp = ho * stride, wo * stride

    # Pad H/W up to stride multiples only when needed (rare; padded values
    # are never read by the strided conv, so zeros are fine).
    if (hp, wp) != (h, w):
        x_nchw = jnp.pad(x_nchw, ((0, 0), (0, 0), (0, hp - h), (0, wp - w)))

    # Fold inference BatchNorm into the conv weight and a per-channel bias.
    inv_std = 1.0 / jnp.sqrt(running_var.astype(jnp.float32) + eps)
    scale = inv_std if gamma is None else gamma.astype(jnp.float32) * inv_std
    w_scaled = weight.astype(jnp.float32) * scale[:, None]          # (Cout, Cin)
    bias = -running_mean.astype(jnp.float32) * scale
    if beta is not None:
        bias = bias + beta.astype(jnp.float32)
    bias = bias.reshape(cout, 1)

    kernel = functools.partial(_conv1x1_bn_kernel, stride=stride)
    cost = pl.CostEstimate(
        flops=2 * n * m * cin * cout,
        transcendentals=0,
        # Bytes actually DMA'd: full input rows are read (see header comment),
        # flat output is written, plus the tiny folded weight/bias.
        bytes_accessed=4 * (n * cin * hp * wp + n * cout * m + cout * cin + cout),
    )

    if m < 128 and n >= 2:
        # Small feature maps: Ho*Wo alone under-fills a 128-lane vreg, so
        # collapse the batch into the lane axis (channels-major) for
        # lane-dense, unmasked stores.  The wrapper transposes touch only a
        # tiny tensor on this path.
        x_cf = jnp.transpose(x_nchw, (1, 0, 2, 3))                  # (Cin, N, Hp, Wp)
        tn = _select_batches_per_step(n, m, cin, cout, hp, wp)
        grid = (pl.cdiv(n, tn),)
        out_flat = pl.pallas_call(
            kernel,
            out_shape=jax.ShapeDtypeStruct((cout, n * m), dtype),
            grid_spec=pltpu.PrefetchScalarGridSpec(
                num_scalar_prefetch=0,
                grid=grid,
                in_specs=[
                    pl.BlockSpec((cout, cin), lambda i: (0, 0)),        # weight
                    pl.BlockSpec((cout, 1), lambda i: (0, 0)),          # bias
                    pl.BlockSpec((cin, tn, hp, wp), lambda i: (0, i, 0, 0)),
                ],
                out_specs=pl.BlockSpec((cout, tn * m), lambda i: (0, i)),
            ),
            compiler_params=pltpu.CompilerParams(
                dimension_semantics=("parallel",)),
            cost_estimate=cost,
        )(w_scaled, bias, x_cf)
        out = out_flat.reshape(cout, n, ho, wo)
        return jnp.transpose(out, (1, 0, 2, 3))

    # General path: NCHW-native, channels on sublanes, grid over
    # (batch, output-row blocks); stride handled in-kernel; flat lane-dense
    # (N, Cout, Ho*Wo) output.
    rows = _select_rows_per_step(ho, wo, cin, cout, stride, n)
    grid = (n, pl.cdiv(ho, rows))
    out_flat = pl.pallas_call(
        kernel,
        out_shape=jax.ShapeDtypeStruct((n, cout, m), dtype),
        grid_spec=pltpu.PrefetchScalarGridSpec(
            num_scalar_prefetch=0,
            grid=grid,
            in_specs=[
                pl.BlockSpec((cout, cin), lambda b, i: (0, 0)),         # weight
                pl.BlockSpec((cout, 1), lambda b, i: (0, 0)),           # bias
                pl.BlockSpec((None, cin, rows * stride, wp),
                             lambda b, i: (b, 0, i, 0)),                # x rows
            ],
            out_specs=pl.BlockSpec((None, cout, rows * wo),
                                   lambda b, i: (b, 0, i)),
        ),
        compiler_params=pltpu.CompilerParams(
            dimension_semantics=("parallel", "parallel")),
        cost_estimate=cost,
    )(w_scaled, bias, x_nchw)
    return out_flat.reshape(n, cout, ho, wo)


def identity_module(x_nchw, params, *, inp, oup, stride):
    """Full Identity.forward: passthrough when no downsample is needed."""
    if stride == 1 and inp == oup:
        return x_nchw  # nn.Identity path — no compute, no kernel
    return _downsample_forward(
        x_nchw,
        params["weight"],
        params["running_mean"],
        params["running_var"],
        params.get("gamma"),   # None => affine=False (supernet=True default)
        params.get("beta"),
        stride=stride,
    )


if __name__ == "__main__":
    key = jax.random.PRNGKey(0)
    kx, kw, km, kv = jax.random.split(key, 4)

    N, INP, OUP, H, W, STRIDE = 2, 4, 8, 16, 16, 2
    EPS = 1e-5

    x = jax.random.normal(kx, (N, INP, H, W), dtype=jnp.float32)
    params = {
        "weight": jax.random.normal(kw, (OUP, INP), dtype=jnp.float32) * 0.1,
        "running_mean": 0.1 * jax.random.normal(km, (OUP,), dtype=jnp.float32),
        "running_var": jax.random.uniform(kv, (OUP,), dtype=jnp.float32,
                                          minval=0.5, maxval=1.5),
    }
    # TODO(synk): training-mode BatchNorm (batch statistics) not implemented;
    # inference-mode running stats are used (matches module.eval()).

    def reference(xin, p, stride):
        xs = xin[:, :, ::stride, ::stride]
        y = jnp.einsum("oi,nihw->nohw", p["weight"], xs, precision="highest")
        inv = 1.0 / jnp.sqrt(p["running_var"] + EPS)
        return (y - p["running_mean"][None, :, None, None]) * inv[None, :, None, None]

    # Tolerance accommodates MXU f32 pass behavior + the folded-BN algebra.
    TOL = 2e-3

    # 1) Downsample, small feature map -> batch-packed lane-dense kernel.
    out = identity_module(x, params, inp=INP, oup=OUP, stride=STRIDE)
    jax.block_until_ready(out)
    assert out.shape == (N, OUP, H // STRIDE, W // STRIDE), out.shape
    ref = reference(x, params, STRIDE)
    assert jnp.allclose(out, ref, rtol=TOL, atol=TOL), float(jnp.max(jnp.abs(out - ref)))

    # 2) Downsample, larger single-sample map -> row-blocked kernel
    #    (stride folded in-kernel, >=2 grid blocks for megacore).
    x2 = jax.random.normal(kx, (1, INP, 32, 32), dtype=jnp.float32)
    out2 = identity_module(x2, params, inp=INP, oup=OUP, stride=STRIDE)
    jax.block_until_ready(out2)
    assert out2.shape == (1, OUP, 16, 16), out2.shape
    ref2 = reference(x2, params, STRIDE)
    assert jnp.allclose(out2, ref2, rtol=TOL, atol=TOL), float(jnp.max(jnp.abs(out2 - ref2)))

    # 3) stride == 1 but inp != oup -> 1x1 conv + BN with no subsample.
    out3 = identity_module(x, params, inp=INP, oup=OUP, stride=1)
    jax.block_until_ready(out3)
    ref3 = reference(x, params, 1)
    assert jnp.allclose(out3, ref3, rtol=TOL, atol=TOL), float(jnp.max(jnp.abs(out3 - ref3)))

    # 4) Pure identity path (stride == 1, inp == oup) — passthrough, no kernel.
    out_id = identity_module(x, params, inp=INP, oup=INP, stride=1)
    jax.block_until_ready(out_id)
    assert out_id.shape == x.shape

    print("KERNEL_OK")
</pallas_src>

<mosaic_0001>
module attributes {stable_mosaic.version = 11 : i64} {
  func.func @_conv1x1_bn_kernel(%arg0: i32, %arg1: memref<8x4xf32, #tpu.memory_space<vmem>>, %arg2: memref<8x1xf32, #tpu.memory_space<vmem>>, %arg3: memref<4x2x16x16xf32, #tpu.memory_space<vmem>>, %arg4: memref<8x128xf32, #tpu.memory_space<vmem>>) attributes {dimension_semantics = [#tpu.dimension_semantics<parallel>], iteration_bounds = array<i64: 1>, scalar_prefetch = 0 : i64, scratch_operands = 0 : i64, tpu.core_type = #tpu.core_type<tc>, window_params = [{pipeline_mode = #tpu.pipeline_mode<synchronous>, transform_indices = @transform_0, window_bounds = array<i64: 8, 4>}, {pipeline_mode = #tpu.pipeline_mode<synchronous>, transform_indices = @transform_1, window_bounds = array<i64: 8, 1>}, {transform_indices = @transform_2, window_bounds = array<i64: 4, 2, 16, 16>}, {transform_indices = @transform_3, window_bounds = array<i64: 8, 128>}]} {
    %c0 = arith.constant 0 : index
    %c0_0 = arith.constant 0 : index
    %c0_1 = arith.constant 0 : index
    %c0_2 = arith.constant 0 : index
    %0 = vector.load %arg3[%c0, %c0_0, %c0_1, %c0_2] : memref<4x2x16x16xf32, #tpu.memory_space<vmem>>, vector<4x2x16x16xf32>
    %1 = vector.shape_cast %0 : vector<4x2x16x16xf32> to vector<8x16x16xf32>
    %2 = vector.shape_cast %1 : vector<8x16x16xf32> to vector<8x8x2x16xf32>
    %3 = vector.extract_strided_slice %2 {offsets = [0, 0, 0, 0], sizes = [8, 8, 1, 16], strides = [1, 1, 1, 1]} : vector<8x8x2x16xf32> to vector<8x8x1x16xf32>
    %4 = vector.shape_cast %3 : vector<8x8x1x16xf32> to vector<8x8x16xf32>
    %5 = vector.shape_cast %4 : vector<8x8x16xf32> to vector<8x8x8x2xf32>
    %6 = vector.extract_strided_slice %5 {offsets = [0, 0, 0, 0], sizes = [8, 8, 8, 1], strides = [1, 1, 1, 1]} : vector<8x8x8x2xf32> to vector<8x8x8x1xf32>
    %7 = vector.shape_cast %6 : vector<8x8x8x1xf32> to vector<8x8x8xf32>
    %8 = vector.shape_cast %7 : vector<8x8x8xf32> to vector<4x128xf32>
    %c0_3 = arith.constant 0 : index
    %c0_4 = arith.constant 0 : index
    %9 = vector.load %arg1[%c0_3, %c0_4] : memref<8x4xf32, #tpu.memory_space<vmem>>, vector<8x4xf32>
    %cst = arith.constant dense<0.000000e+00> : vector<8x128xf32>
    %10 = tpu.matmul %9, %8, %cst {dimension_numbers = #tpu.dot_dimension_numbers<[1], [0], [0], [1], [0, 0, 1, 1], [], []>} : vector<8x4xf32>, vector<4x128xf32>, vector<8x128xf32> -> vector<8x128xf32>
    %c0_5 = arith.constant 0 : index
    %c0_6 = arith.constant 0 : index
    %11 = vector.load %arg2[%c0_5, %c0_6] : memref<8x1xf32, #tpu.memory_space<vmem>>, vector<8x1xf32>
    %12 = vector.broadcast %11 : vector<8x1xf32> to vector<8x128xf32>
    %13 = arith.addf %10, %12 : vector<8x128xf32>
    %c0_7 = arith.constant 0 : index
    %c0_8 = arith.constant 0 : index
    %14 = vector.load %arg4[%c0_7, %c0_8] : memref<8x128xf32, #tpu.memory_space<vmem>>, vector<8x128xf32>
    tpu.vector_store %arg4[%c0_7, %c0_8], %13 {strides = array<i32>} : memref<8x128xf32, #tpu.memory_space<vmem>>, vector<8x128xf32>,
    return
  }
  func.func @transform_0(%arg0: i32) -> (i32, i32) {
    %c0_i32 = arith.constant 0 : i32
    %c0_i32_0 = arith.constant 0 : i32
    %c0_i32_1 = arith.constant 0 : i32
    return %c0_i32, %c0_i32_0 : i32, i32
  }
  func.func @transform_1(%arg0: i32) -> (i32, i32) {
    %c0_i32 = arith.constant 0 : i32
    %c0_i32_0 = arith.constant 0 : i32
    %c0_i32_1 = arith.constant 0 : i32
    return %c0_i32, %c0_i32_0 : i32, i32
  }
  func.func @transform_2(%arg0: i32) -> (i32, i32, i32, i32) {
    %c0_i32 = arith.constant 0 : i32
    %c0_i32_0 = arith.constant 0 : i32
    %c0_i32_1 = arith.constant 0 : i32
    %c0_i32_2 = arith.constant 0 : i32
    return %c0_i32, %arg0, %c0_i32_0, %c0_i32_1 : i32, i32, i32, i32
  }
  func.func @transform_3(%arg0: i32) -> (i32, i32) {
    %c0_i32 = arith.constant 0 : i32
    %c0_i32_0 = arith.constant 0 : i32
    return %c0_i32, %arg0 : i32, i32
  }
}

</mosaic_0001>

<llo_original>
// kernel: _downsample_forward.1
$region0: #{_downsample_forward.1}
  #allocation0 [shape = 'u32[]', space=smem, size = 0x4, offset = 0x4, fixed_abs, tag = 'smem constant byte address 0x4 - core index']
  #allocation1 [shape = 'u32[144,128]{1,0:T(1,128)}', space=vmem, size = 0x12000, scoped, tag = 'internal scratch']
  %s0 = inlined_call_operand.vmem [shape: f32[8,4], index: 0, kind: input, shape index: {}]
  %s1 = inlined_call_operand.vmem [shape: f32[8,1], index: 1, kind: input, shape index: {}]
  %s2 = inlined_call_operand.vmem [shape: f32[4,2,16,16], index: 2, kind: input, shape index: {}]
  %s3 = inlined_call_operand.vmem [shape: f32[8,128], index: 3, kind: output, shape index: {}]
  %s4 = sld [smem:[#allocation0]]
  $region22: #{_downsample_forward.1} parent=0
    _
  %s6 = ssub.s32 1, %s4
  %s7 = scalar_select 0, %s6, %s4
  // Predicated region
  $region2: #{_downsample_forward.1} parent=0 // pred_check
    _
  $region3: #{_downsample_forward.1} parent=0 // pred_check_branch
    %9 = sbr.rel (0) target = $region5
  $region4: #{_downsample_forward.1} parent=0 // pred_region
    _
  $region5: #{_downsample_forward.1} parent=0 // pred_fallthru
    _
  // Predicated region
  $region6: #{_downsample_forward.1} parent=0 // pred_check
    _
  $region7: #{_downsample_forward.1} parent=0 // pred_check_branch
    %11 = sbr.rel (0) target = $region9
  $region8: #{_downsample_forward.1} parent=0 // pred_region
    _
  $region9: #{_downsample_forward.1} parent=0 // pred_fallthru
    _
  // Predicated region
  $region10: #{_downsample_forward.1} parent=0 // pred_check
    _
  $region11: #{_downsample_forward.1} parent=0 // pred_check_branch
    %13 = sbr.rel (0) target = $region13
  $region12: #{_downsample_forward.1} parent=0 // pred_region
    _
  $region13: #{_downsample_forward.1} parent=0 // pred_fallthru
    _
  %v14 = vld [vmem:[%s2] sm:$0xff]
  %v15 = vld [vmem:[%s2 + $0x8] sm:$0xff]
  %v16 = vld [vmem:[%s2 + $0x10] sm:$0xff]
  %v17 = vld [vmem:[%s2 + $0x18] sm:$0xff]
  %v18 = vld [vmem:[%s2 + $0x20] sm:$0xff]
  %v19 = vld [vmem:[%s2 + $0x28] sm:$0xff]
  %v20 = vld [vmem:[%s2 + $0x30] sm:$0xff]
  %v21 = vld [vmem:[%s2 + $0x38] sm:$0xff]
  %v22 = vld [vmem:[%s2 + $0x40] sm:$0xff]
  %v23 = vld [vmem:[%s2 + $0x48] sm:$0xff]
  %v24 = vld [vmem:[%s2 + $0x50] sm:$0xff]
  %v25 = vld [vmem:[%s2 + $0x58] sm:$0xff]
  %v26 = vld [vmem:[%s2 + $0x60] sm:$0xff]
  %v27 = vld [vmem:[%s2 + $0x68] sm:$0xff]
  %v28 = vld [vmem:[%s2 + $0x70] sm:$0xff]
  %v29 = vld [vmem:[%s2 + $0x78] sm:$0xff]
  %v46 = vcombine.high %v14, %v14
  %v48 = vunpack.c.l.s4 1983009808
  %v49 = vunpack.c.0.s8 %v48
  %v50 = vlaneseq
  %v51 = vshrl.u32 %v50, 7
  %v52 = vsub.s32 %v49, %v51
  %v53 = vrot.slane %v14, %v52
  %v55 = vunpack.c.l.s4 1983009808
  %v56 = vunpack.c.0.s8 %v55
  %v57 = vlaneseq
  %v58 = vshrl.u32 %v57, 7
  %v59 = vsub.s32 %v56, %v58
  %v60 = vrot.slane %v46, %v59
  %v61 = vcombine.high %v53, %v53
  %v62 = vcombine.high %v60, %v60
  %v63 = vcombine.high %v15, %v15
  %v65 = vunpack.c.l.s4 1983009808
  %v66 = vunpack.c.0.s8 %v65
  %v67 = vlaneseq
  %v68 = vshrl.u32 %v67, 7
  %v69 = vsub.s32 %v66, %v68
  %v70 = vrot.slane %v15, %v69
  %v72 = vunpack.c.l.s4 1983009808
  %v73 = vunpack.c.0.s8 %v72
  %v74 = vlaneseq
  %v75 = vshrl.u32 %v74, 7
  %v76 = vsub.s32 %v73, %v75
  %v77 = vrot.slane %v63, %v76
  %v78 = vcombine.high %v70, %v70
  %v79 = vcombine.high %v77, %v77
  %v80 = vcombine.high %v16, %v16
  %v82 = vunpack.c.l.s4 1983009808
  %v83 = vunpack.c.0.s8 %v82
  %v84 = vlaneseq
  %v85 = vshrl.u32 %v84, 7
  %v86 = vsub.s32 %v83, %v85
  %v87 = vrot.slane %v16, %v86
  %v89 = vunpack.c.l.s4 1983009808
  %v90 = vunpack.c.0.s8 %v89
  %v91 = vlaneseq
  %v92 = vshrl.u32 %v91, 7
  %v93 = vsub.s32 %v90, %v92
  %v94 = vrot.slane %v80, %v93
  %v95 = vcombine.high %v87, %v87
  %v96 = vcombine.high %v94, %v94
  %v97 = vcombine.high %v17, %v17
  %v99 = vunpack.c.l.s4 1983009808
  %v100 = vunpack.c.0.s8 %v99
  %v101 = vlaneseq
  %v102 = vshrl.u32 %v101, 7
  %v103 = vsub.s32 %v100, %v102
  %v104 = vrot.slane %v17, %v103
  %v106 = vunpack.c.l.s4 1983009808
  %v107 = vunpack.c.0.s8 %v106
  %v108 = vlaneseq
  %v109 = vshrl.u32 %v108, 7
  %v110 = vsub.s32 %v107, %v109
  %v111 = vrot.slane %v97, %v110
  %v112 = vcombine.high %v104, %v104
  %v113 = vcombine.high %v111, %v111
  %v114 = vcombine.high %v18, %v18
  %v116 = vunpack.c.l.s4 1983009808
  %v117 = vunpack.c.0.s8 %v116
  %v118 = vlaneseq
  %v119 = vshrl.u32 %v118, 7
  %v120 = vsub.s32 %v117, %v119
  %v121 = vrot.slane %v18, %v120
  %v123 = vunpack.c.l.s4 1983009808
  %v124 = vunpack.c.0.s8 %v123
  %v125 = vlaneseq
  %v126 = vshrl.u32 %v125, 7
  %v127 = vsub.s32 %v124, %v126
  %v128 = vrot.slane %v114, %v127
  %v129 = vcombine.high %v121, %v121
  %v130 = vcombine.high %v128, %v128
  %v131 = vcombine.high %v19, %v19
  %v133 = vunpack.c.l.s4 1983009808
  %v134 = vunpack.c.0.s8 %v133
  %v135 = vlaneseq
  %v136 = vshrl.u32 %v135, 7
  %v137 = vsub.s32 %v134, %v136
  %v138 = vrot.slane %v19, %v137
  %v140 = vunpack.c.l.s4 1983009808
  %v141 = vunpack.c.0.s8 %v140
  %v142 = vlaneseq
  %v143 = vshrl.u32 %v142, 7
  %v144 = vsub.s32 %v141, %v143
  %v145 = vrot.slane %v131, %v144
  %v146 = vcombine.high %v138, %v138
  %v147 = vcombine.high %v145, %v145
  %v148 = vcombine.high %v20, %v20
  %v150 = vunpack.c.l.s4 1983009808
  %v151 = vunpack.c.0.s8 %v150
  %v152 = vlaneseq
  %v153 = vshrl.u32 %v152, 7
  %v154 = vsub.s32 %v151, %v153
  %v155 = vrot.slane %v20, %v154
  %v157 = vunpack.c.l.s4 1983009808
  %v158 = vunpack.c.0.s8 %v157
  %v159 = vlaneseq
  %v160 = vshrl.u32 %v159, 7
  %v161 = vsub.s32 %v158, %v160
  %v162 = vrot.slane %v148, %v161
  %v163 = vcombine.high %v155, %v155
  %v164 = vcombine.high %v162, %v162
  %v165 = vcombine.high %v21, %v21
  %v167 = vunpack.c.l.s4 1983009808
  %v168 = vunpack.c.0.s8 %v167
  %v169 = vlaneseq
  %v170 = vshrl.u32 %v169, 7
  %v171 = vsub.s32 %v168, %v170
  %v172 = vrot.slane %v21, %v171
  %v174 = vunpack.c.l.s4 1983009808
  %v175 = vunpack.c.0.s8 %v174
  %v176 = vlaneseq
  %v177 = vshrl.u32 %v176, 7
  %v178 = vsub.s32 %v175, %v177
  %v179 = vrot.slane %v165, %v178
  %v180 = vcombine.high %v172, %v172
  %v181 = vcombine.high %v179, %v179
  %v182 = vcombine.high %v22, %v22
  %v184 = vunpack.c.l.s4 1983009808
  %v185 = vunpack.c.0.s8 %v184
  %v186 = vlaneseq
  %v187 = vshrl.u32 %v186, 7
  %v188 = vsub.s32 %v185, %v187
  %v189 = vrot.slane %v22, %v188
  %v191 = vunpack.c.l.s4 1983009808
  %v192 = vunpack.c.0.s8 %v191
  %v193 = vlaneseq
  %v194 = vshrl.u32 %v193, 7
  %v195 = vsub.s32 %v192, %v194
  %v196 = vrot.slane %v182, %v195
  %v197 = vcombine.high %v189, %v189
  %v198 = vcombine.high %v196, %v196
  %v199 = vcombine.high %v23, %v23
  %v201 = vunpack.c.l.s4 1983009808
  %v202 = vunpack.c.0.s8 %v201
  %v203 = vlaneseq
  %v204 = vshrl.u32 %v203, 7
  %v205 = vsub.s32 %v202, %v204
  %v206 = vrot.slane %v23, %v205
  %v208 = vunpack.c.l.s4 1983009808
  %v209 = vunpack.c.0.s8 %v208
  %v210 = vlaneseq
  %v211 = vshrl.u32 %v210, 7
  %v212 = vsub.s32 %v209, %v211
  %v213 = vrot.slane %v199, %v212
  %v214 = vcombine.high %v206, %v206
  %v215 = vcombine.high %v213, %v213
  %v216 = vcombine.high %v24, %v24
  %v218 = vunpack.c.l.s4 1983009808
  %v219 = vunpack.c.0.s8 %v218
  %v220 = vlaneseq
  %v221 = vshrl.u32 %v220, 7
  %v222 = vsub.s32 %v219, %v221
  %v223 = vrot.slane %v24, %v222
  %v225 = vunpack.c.l.s4 1983009808
  %v226 = vunpack.c.0.s8 %v225
  %v227 = vlaneseq
  %v228 = vshrl.u32 %v227, 7
  %v229 = vsub.s32 %v226, %v228
  %v230 = vrot.slane %v216, %v229
  %v231 = vcombine.high %v223, %v223
  %v232 = vcombine.high %v230, %v230
  %v233 = vcombine.high %v25, %v25
  %v235 = vunpack.c.l.s4 1983009808
  %v236 = vunpack.c.0.s8 %v235
  %v237 = vlaneseq
  %v238 = vshrl.u32 %v237, 7
  %v239 = vsub.s32 %v236, %v238
  %v240 = vrot.slane %v25, %v239
  %v242 = vunpack.c.l.s4 1983009808
  %v243 = vunpack.c.0.s8 %v242
  %v244 = vlaneseq
  %v245 = vshrl.u32 %v244, 7
  %v246 = vsub.s32 %v243, %v245
  %v247 = vrot.slane %v233, %v246
  %v248 = vcombine.high %v240, %v240
  %v249 = vcombine.high %v247, %v247
  %v250 = vcombine.high %v26, %v26
  %v252 = vunpack.c.l.s4 1983009808
  %v253 = vunpack.c.0.s8 %v252
  %v254 = vlaneseq
  %v255 = vshrl.u32 %v254, 7
  %v256 = vsub.s32 %v253, %v255
  %v257 = vrot.slane %v26, %v256
  %v259 = vunpack.c.l.s4 1983009808
  %v260 = vunpack.c.0.s8 %v259
  %v261 = vlaneseq
  %v262 = vshrl.u32 %v261, 7
  %v263 = vsub.s32 %v260, %v262
  %v264 = vrot.slane %v250, %v263
  %v265 = vcombine.high %v257, %v257
  %v266 = vcombine.high %v264, %v264
  %v267 = vcombine.high %v27, %v27
  %v269 = vunpack.c.l.s4 1983009808
  %v270 = vunpack.c.0.s8 %v269
  %v271 = vlaneseq
  %v272 = vshrl.u32 %v271, 7
  %v273 = vsub.s32 %v270, %v272
  %v274 = vrot.slane %v27, %v273
  %v276 = vunpack.c.l.s4 1983009808
  %v277 = vunpack.c.0.s8 %v276
  %v278 = vlaneseq
  %v279 = vshrl.u32 %v278, 7
  %v280 = vsub.s32 %v277, %v279
  %v281 = vrot.slane %v267, %v280
  %v282 = vcombine.high %v274, %v274
  %v283 = vcombine.high %v281, %v281
  %v284 = vcombine.high %v28, %v28
  %v286 = vunpack.c.l.s4 1983009808
  %v287 = vunpack.c.0.s8 %v286
  %v288 = vlaneseq
  %v289 = vshrl.u32 %v288, 7
  %v290 = vsub.s32 %v287, %v289
  %v291 = vrot.slane %v28, %v290
  %v293 = vunpack.c.l.s4 1983009808
  %v294 = vunpack.c.0.s8 %v293
  %v295 = vlaneseq
  %v296 = vshrl.u32 %v295, 7
  %v297 = vsub.s32 %v294, %v296
  %v298 = vrot.slane %v284, %v297
  %v299 = vcombine.high %v291, %v291
  %v300 = vcombine.high %v298, %v298
  %v301 = vcombine.high %v29, %v29
  %v303 = vunpack.c.l.s4 1983009808
  %v304 = vunpack.c.0.s8 %v303
  %v305 = vlaneseq
  %v306 = vshrl.u32 %v305, 7
  %v307 = vsub.s32 %v304, %v306
  %v308 = vrot.slane %v29, %v307
  %v310 = vunpack.c.l.s4 1983009808
  %v311 = vunpack.c.0.s8 %v310
  %v312 = vlaneseq
  %v313 = vshrl.u32 %v312, 7
  %v314 = vsub.s32 %v311, %v313
  %v315 = vrot.slane %v301, %v314
  %v316 = vcombine.high %v308, %v308
  %v317 = vcombine.high %v315, %v315
  %382 = vrot.lane.b32.xlu0 %v53, 126
  %v383 = vpop.permute.xlu0 %382
  %384 = vrot.lane.b32.xlu0 %v61, 126
  %v385 = vpop.permute.xlu0 %384
  %386 = vrot.lane.b32.xlu0 %v60, 126
  %v387 = vpop.permute.xlu0 %386
  %388 = vrot.lane.b32.xlu0 %v62, 126
  %v389 = vpop.permute.xlu0 %388
  %390 = vrot.lane.b32.xlu0 %v70, 126
  %v391 = vpop.permute.xlu0 %390
  %392 = vrot.lane.b32.xlu0 %v78, 126
  %v393 = vpop.permute.xlu0 %392
  %394 = vrot.lane.b32.xlu0 %v77, 126
  %v395 = vpop.permute.xlu0 %394
  %396 = vrot.lane.b32.xlu0 %v79, 126
  %v397 = vpop.permute.xlu0 %396
  %398 = vrot.lane.b32.xlu0 %v87, 126
  %v399 = vpop.permute.xlu0 %398
  %400 = vrot.lane.b32.xlu0 %v95, 126
  %v401 = vpop.permute.xlu0 %400
  %402 = vrot.lane.b32.xlu0 %v94, 126
  %v403 = vpop.permute.xlu0 %402
  %404 = vrot.lane.b32.xlu0 %v96, 126
  %v405 = vpop.permute.xlu0 %404
  %406 = vrot.lane.b32.xlu0 %v104, 126
  %v407 = vpop.permute.xlu0 %406
  %408 = vrot.lane.b32.xlu0 %v112, 126
  %v409 = vpop.permute.xlu0 %408
  %410 = vrot.lane.b32.xlu0 %v111, 126
  %v411 = vpop.permute.xlu0 %410
  %412 = vrot.lane.b32.xlu0 %v113, 126
  %v413 = vpop.permute.xlu0 %412
  %414 = vrot.lane.b32.xlu0 %v121, 126
  %v415 = vpop.permute.xlu0 %414
  %416 = vrot.lane.b32.xlu0 %v129, 126
  %v417 = vpop.permute.xlu0 %416
  %418 = vrot.lane.b32.xlu0 %v128, 126
  %v419 = vpop.permute.xlu0 %418
  %420 = vrot.lane.b32.xlu0 %v130, 126
  %v421 = vpop.permute.xlu0 %420
  %422 = vrot.lane.b32.xlu0 %v138, 126
  %v423 = vpop.permute.xlu0 %422
  %424 = vrot.lane.b32.xlu0 %v146, 126
  %v425 = vpop.permute.xlu0 %424
  %426 = vrot.lane.b32.xlu0 %v145, 126
  %v427 = vpop.permute.xlu0 %426
  %428 = vrot.lane.b32.xlu0 %v147, 126
  %v429 = vpop.permute.xlu0 %428
  %430 = vrot.lane.b32.xlu0 %v155, 126
  %v431 = vpop.permute.xlu0 %430
  %432 = vrot.lane.b32.xlu0 %v163, 126
  %v433 = vpop.permute.xlu0 %432
  %434 = vrot.lane.b32.xlu0 %v162, 126
  %v435 = vpop.permute.xlu0 %434
  %436 = vrot.lane.b32.xlu0 %v164, 126
  %v437 = vpop.permute.xlu0 %436
  %438 = vrot.lane.b32.xlu0 %v172, 126
  %v439 = vpop.permute.xlu0 %438
  %440 = vrot.lane.b32.xlu0 %v180, 126
  %v441 = vpop.permute.xlu0 %440
  %442 = vrot.lane.b32.xlu0 %v179, 126
  %v443 = vpop.permute.xlu0 %442
  %444 = vrot.lane.b32.xlu0 %v181, 126
  %v445 = vpop.permute.xlu0 %444
  %446 = vrot.lane.b32.xlu0 %v189, 126
  %v447 = vpop.permute.xlu0 %446
  %448 = vrot.lane.b32.xlu0 %v197, 126
  %v449 = vpop.permute.xlu0 %448
  %450 = vrot.lane.b32.xlu0 %v196, 126
  %v451 = vpop.permute.xlu0 %450
  %452 = vrot.lane.b32.xlu0 %v198, 126
  %v453 = vpop.permute.xlu0 %452
  %454 = vrot.lane.b32.xlu0 %v206, 126
  %v455 = vpop.permute.xlu0 %454
  %456 = vrot.lane.b32.xlu0 %v214, 126
  %v457 = vpop.permute.xlu0 %456
  %458 = vrot.lane.b32.xlu0 %v213, 126
  %v459 = vpop.permute.xlu0 %458
  %460 = vrot.lane.b32.xlu0 %v215, 126
  %v461 = vpop.permute.xlu0 %460
  %462 = vrot.lane.b32.xlu0 %v223, 126
  %v463 = vpop.permute.xlu0 %462
  %464 = vrot.lane.b32.xlu0 %v231, 126
  %v465 = vpop.permute.xlu0 %464
  %466 = vrot.lane.b32.xlu0 %v230, 126
  %v467 = vpop.permute.xlu0 %466
  %468 = vrot.lane.b32.xlu0 %v232, 126
  %v469 = vpop.permute.xlu0 %468
  %470 = vrot.lane.b32.xlu0 %v240, 126
  %v471 = vpop.permute.xlu0 %470
  %472 = vrot.lane.b32.xlu0 %v248, 126
  %v473 = vpop.permute.xlu0 %472
  %474 = vrot.lane.b32.xlu0 %v247, 126
  %v475 = vpop.permute.xlu0 %474
  %476 = vrot.lane.b32.xlu0 %v249, 126
  %v477 = vpop.permute.xlu0 %476
  %478 = vrot.lane.b32.xlu0 %v257, 126
  %v479 = vpop.permute.xlu0 %478
  %480 = vrot.lane.b32.xlu0 %v265, 126
  %v481 = vpop.permute.xlu0 %480
  %482 = vrot.lane.b32.xlu0 %v264, 126
  %v483 = vpop.permute.xlu0 %482
  %484 = vrot.lane.b32.xlu0 %v266, 126
  %v485 = vpop.permute.xlu0 %484
  %486 = vrot.lane.b32.xlu0 %v274, 126
  %v487 = vpop.permute.xlu0 %486
  %488 = vrot.lane.b32.xlu0 %v282, 126
  %v489 = vpop.permute.xlu0 %488
  %490 = vrot.lane.b32.xlu0 %v281, 126
  %v491 = vpop.permute.xlu0 %490
  %492 = vrot.lane.b32.xlu0 %v283, 126
  %v493 = vpop.permute.xlu0 %492
  %494 = vrot.lane.b32.xlu0 %v291, 126
  %v495 = vpop.permute.xlu0 %494
  %496 = vrot.lane.b32.xlu0 %v299, 126
  %v497 = vpop.permute.xlu0 %496
  %498 = vrot.lane.b32.xlu0 %v298, 126
  %v499 = vpop.permute.xlu0 %498
  %500 = vrot.lane.b32.xlu0 %v300, 126
  %v501 = vpop.permute.xlu0 %500
  %502 = vrot.lane.b32.xlu0 %v308, 126
  %v503 = vpop.permute.xlu0 %502
  %504 = vrot.lane.b32.xlu0 %v316, 126
  %v505 = vpop.permute.xlu0 %504
  %506 = vrot.lane.b32.xlu0 %v315, 126
  %v507 = vpop.permute.xlu0 %506
  %508 = vrot.lane.b32.xlu0 %v317, 126
  %v509 = vpop.permute.xlu0 %508
  %574 = vrot.lane.b32.xlu0 %v53, 124
  %v575 = vpop.permute.xlu0 %574
  %576 = vrot.lane.b32.xlu0 %v61, 124
  %v577 = vpop.permute.xlu0 %576
  %578 = vrot.lane.b32.xlu0 %v60, 124
  %v579 = vpop.permute.xlu0 %578
  %580 = vrot.lane.b32.xlu0 %v62, 124
  %v581 = vpop.permute.xlu0 %580
  %582 = vrot.lane.b32.xlu0 %v70, 124
  %v583 = vpop.permute.xlu0 %582
  %584 = vrot.lane.b32.xlu0 %v78, 124
  %v585 = vpop.permute.xlu0 %584
  %586 = vrot.lane.b32.xlu0 %v77, 124
  %v587 = vpop.permute.xlu0 %586
  %588 = vrot.lane.b32.xlu0 %v79, 124
  %v589 = vpop.permute.xlu0 %588
  %590 = vrot.lane.b32.xlu0 %v87, 124
  %v591 = vpop.permute.xlu0 %590
  %592 = vrot.lane.b32.xlu0 %v95, 124
  %v593 = vpop.permute.xlu0 %592
  %594 = vrot.lane.b32.xlu0 %v94, 124
  %v595 = vpop.permute.xlu0 %594
  %596 = vrot.lane.b32.xlu0 %v96, 124
  %v597 = vpop.permute.xlu0 %596
  %598 = vrot.lane.b32.xlu0 %v104, 124
  %v599 = vpop.permute.xlu0 %598
  %600 = vrot.lane.b32.xlu0 %v112, 124
  %v601 = vpop.permute.xlu0 %600
  %602 = vrot.lane.b32.xlu0 %v111, 124
  %v603 = vpop.permute.xlu0 %602
  %604 = vrot.lane.b32.xlu0 %v113, 124
  %v605 = vpop.permute.xlu0 %604
  %606 = vrot.lane.b32.xlu0 %v121, 124
  %v607 = vpop.permute.xlu0 %606
  %608 = vrot.lane.b32.xlu0 %v129, 124
  %v609 = vpop.permute.xlu0 %608
  %610 = vrot.lane.b32.xlu0 %v128, 124
  %v611 = vpop.permute.xlu0 %610
  %612 = vrot.lane.b32.xlu0 %v130, 124
  %v613 = vpop.permute.xlu0 %612
  %614 = vrot.lane.b32.xlu0 %v138, 124
  %v615 = vpop.permute.xlu0 %614
  %616 = vrot.lane.b32.xlu0 %v146, 124
  %v617 = vpop.permute.xlu0 %616
  %618 = vrot.lane.b32.xlu0 %v145, 124
  %v619 = vpop.permute.xlu0 %618
  %620 = vrot.lane.b32.xlu0 %v147, 124
  %v621 = vpop.permute.xlu0 %620
  %622 = vrot.lane.b32.xlu0 %v155, 124
  %v623 = vpop.permute.xlu0 %622
  %624 = vrot.lane.b32.xlu0 %v163, 124
  %v625 = vpop.permute.xlu0 %624
  %626 = vrot.lane.b32.xlu0 %v162, 124
  %v627 = vpop.permute.xlu0 %626
  %628 = vrot.lane.b32.xlu0 %v164, 124
  %v629 = vpop.permute.xlu0 %628
  %630 = vrot.lane.b32.xlu0 %v172, 124
  %v631 = vpop.permute.xlu0 %630
  %632 = vrot.lane.b32.xlu0 %v180, 124
  %v633 = vpop.permute.xlu0 %632
  %634 = vrot.lane.b32.xlu0 %v179, 124
  %v635 = vpop.permute.xlu0 %634
  %636 = vrot.lane.b32.xlu0 %v181, 124
  %v637 = vpop.permute.xlu0 %636
  %638 = vrot.lane.b32.xlu0 %v189, 124
  %v639 = vpop.permute.xlu0 %638
  %640 = vrot.lane.b32.xlu0 %v197, 124
  %v641 = vpop.permute.xlu0 %640
  %642 = vrot.lane.b32.xlu0 %v196, 124
  %v643 = vpop.permute.xlu0 %642
  %644 = vrot.lane.b32.xlu0 %v198, 124
  %v645 = vpop.permute.xlu0 %644
  %646 = vrot.lane.b32.xlu0 %v206, 124
  %v647 = vpop.permute.xlu0 %646
  %648 = vrot.lane.b32.xlu0 %v214, 124
  %v649 = vpop.permute.xlu0 %648
  %650 = vrot.lane.b32.xlu0 %v213, 124
  %v651 = vpop.permute.xlu0 %650
  %652 = vrot.lane.b32.xlu0 %v215, 124
  %v653 = vpop.permute.xlu0 %652
  %654 = vrot.lane.b32.xlu0 %v223, 124
  %v655 = vpop.permute.xlu0 %654
  %656 = vrot.lane.b32.xlu0 %v231, 124
  %v657 = vpop.permute.xlu0 %656
  %658 = vrot.lane.b32.xlu0 %v230, 124
  %v659 = vpop.permute.xlu0 %658
  %660 = vrot.lane.b32.xlu0 %v232, 124
  %v661 = vpop.permute.xlu0 %660
  %662 = vrot.lane.b32.xlu0 %v240, 124
  %v663 = vpop.permute.xlu0 %662
  %664 = vrot.lane.b32.xlu0 %v248, 124
  %v665 = vpop.permute.xlu0 %664
  %666 = vrot.lane.b32.xlu0 %v247, 124
  %v667 = vpop.permute.xlu0 %666
  %668 = vrot.lane.b32.xlu0 %v249, 124
  %v669 = vpop.permute.xlu0 %668
  %670 = vrot.lane.b32.xlu0 %v257, 124
  %v671 = vpop.permute.xlu0 %670
  %672 = vrot.lane.b32.xlu0 %v265, 124
  %v673 = vpop.permute.xlu0 %672
  %674 = vrot.lane.b32.xlu0 %v264, 124
  %v675 = vpop.permute.xlu0 %674
  %676 = vrot.lane.b32.xlu0 %v266, 124
  %v677 = vpop.permute.xlu0 %676
  %678 = vrot.lane.b32.xlu0 %v274, 124
  %v679 = vpop.permute.xlu0 %678
  %680 = vrot.lane.b32.xlu0 %v282, 124
  %v681 = vpop.permute.xlu0 %680
  %682 = vrot.lane.b32.xlu0 %v281, 124
  %v683 = vpop.permute.xlu0 %682
  %684 = vrot.lane.b32.xlu0 %v283, 124
  %v685 = vpop.permute.xlu0 %684
  %686 = vrot.lane.b32.xlu0 %v291, 124
  %v687 = vpop.permute.xlu0 %686
  %688 = vrot.lane.b32.xlu0 %v299, 124
  %v689 = vpop.permute.xlu0 %688
  %690 = vrot.lane.b32.xlu0 %v298, 124
  %v691 = vpop.permute.xlu0 %690
  %692 = vrot.lane.b32.xlu0 %v300, 124
  %v693 = vpop.permute.xlu0 %692
  %694 = vrot.lane.b32.xlu0 %v308, 124
  %v695 = vpop.permute.xlu0 %694
  %696 = vrot.lane.b32.xlu0 %v316, 124
  %v697 = vpop.permute.xlu0 %696
  %698 = vrot.lane.b32.xlu0 %v315, 124
  %v699 = vpop.permute.xlu0 %698
  %700 = vrot.lane.b32.xlu0 %v317, 124
  %v701 = vpop.permute.xlu0 %700
  %766 = vrot.lane.b32.xlu0 %v53, 122
  %v767 = vpop.permute.xlu0 %766
  %768 = vrot.lane.b32.xlu0 %v61, 122
  %v769 = vpop.permute.xlu0 %768
  %770 = vrot.lane.b32.xlu0 %v60, 122
  %v771 = vpop.permute.xlu0 %770
  %772 = vrot.lane.b32.xlu0 %v62, 122
  %v773 = vpop.permute.xlu0 %772
  %774 = vrot.lane.b32.xlu0 %v70, 122
  %v775 = vpop.permute.xlu0 %774
  %776 = vrot.lane.b32.xlu0 %v78, 122
  %v777 = vpop.permute.xlu0 %776
  %778 = vrot.lane.b32.xlu0 %v77, 122
  %v779 = vpop.permute.xlu0 %778
  %780 = vrot.lane.b32.xlu0 %v79, 122
  %v781 = vpop.permute.xlu0 %780
  %782 = vrot.lane.b32.xlu0 %v87, 122
  %v783 = vpop.permute.xlu0 %782
  %784 = vrot.lane.b32.xlu0 %v95, 122
  %v785 = vpop.permute.xlu0 %784
  %786 = vrot.lane.b32.xlu0 %v94, 122
  %v787 = vpop.permute.xlu0 %786
  %788 = vrot.lane.b32.xlu0 %v96, 122
  %v789 = vpop.permute.xlu0 %788
  %790 = vrot.lane.b32.xlu0 %v104, 122
  %v791 = vpop.permute.xlu0 %790
  %792 = vrot.lane.b32.xlu0 %v112, 122
  %v793 = vpop.permute.xlu0 %792
  %794 = vrot.lane.b32.xlu0 %v111, 122
  %v795 = vpop.permute.xlu0 %794
  %796 = vrot.lane.b32.xlu0 %v113, 122
  %v797 = vpop.permute.xlu0 %796
  %798 = vrot.lane.b32.xlu0 %v121, 122
  %v799 = vpop.permute.xlu0 %798
  %800 = vrot.lane.b32.xlu0 %v129, 122
  %v801 = vpop.permute.xlu0 %800
  %802 = vrot.lane.b32.xlu0 %v128, 122
  %v803 = vpop.permute.xlu0 %802
  %804 = vrot.lane.b32.xlu0 %v130, 122
  %v805 = vpop.permute.xlu0 %804
  %806 = vrot.lane.b32.xlu0 %v138, 122
  %v807 = vpop.permute.xlu0 %806
  %808 = vrot.lane.b32.xlu0 %v146, 122
  %v809 = vpop.permute.xlu0 %808
  %810 = vrot.lane.b32.xlu0 %v145, 122
  %v811 = vpop.permute.xlu0 %810
  %812 = vrot.lane.b32.xlu0 %v147, 122
  %v813 = vpop.permute.xlu0 %812
  %814 = vrot.lane.b32.xlu0 %v155, 122
  %v815 = vpop.permute.xlu0 %814
  %816 = vrot.lane.b32.xlu0 %v163, 122
  %v817 = vpop.permute.xlu0 %816
  %818 = vrot.lane.b32.xlu0 %v162, 122
  %v819 = vpop.permute.xlu0 %818
  %820 = vrot.lane.b32.xlu0 %v164, 122
  %v821 = vpop.permute.xlu0 %820
  %822 = vrot.lane.b32.xlu0 %v172, 122
  %v823 = vpop.permute.xlu0 %822
  %824 = vrot.lane.b32.xlu0 %v180, 122
  %v825 = vpop.permute.xlu0 %824
  %826 = vrot.lane.b32.xlu0 %v179, 122
  %v827 = vpop.permute.xlu0 %826
  %828 = vrot.lane.b32.xlu0 %v181, 122
  %v829 = vpop.permute.xlu0 %828
  %830 = vrot.lane.b32.xlu0 %v189, 122
  %v831 = vpop.permute.xlu0 %830
  %832 = vrot.lane.b32.xlu0 %v197, 122
  %v833 = vpop.permute.xlu0 %832
  %834 = vrot.lane.b32.xlu0 %v196, 122
  %v835 = vpop.permute.xlu0 %834
  %836 = vrot.lane.b32.xlu0 %v198, 122
  %v837 = vpop.permute.xlu0 %836
  %838 = vrot.lane.b32.xlu0 %v206, 122
  %v839 = vpop.permute.xlu0 %838
  %840 = vrot.lane.b32.xlu0 %v214, 122
  %v841 = vpop.permute.xlu0 %840
  %842 = vrot.lane.b32.xlu0 %v213, 122
  %v843 = vpop.permute.xlu0 %842
  %844 = vrot.lane.b32.xlu0 %v215, 122
  %v845 = vpop.permute.xlu0 %844
  %846 = vrot.lane.b32.xlu0 %v223, 122
  %v847 = vpop.permute.xlu0 %846
  %848 = vrot.lane.b32.xlu0 %v231, 122
  %v849 = vpop.permute.xlu0 %848
  %850 = vrot.lane.b32.xlu0 %v230, 122
  %v851 = vpop.permute.xlu0 %850
  %852 = vrot.lane.b32.xlu0 %v232, 122
  %v853 = vpop.permute.xlu0 %852
  %854 = vrot.lane.b32.xlu0 %v240, 122
  %v855 = vpop.permute.xlu0 %854
  %856 = vrot.lane.b32.xlu0 %v248, 122
  %v857 = vpop.permute.xlu0 %856
  %858 = vrot.lane.b32.xlu0 %v247, 122
  %v859 = vpop.permute.xlu0 %858
  %860 = vrot.lane.b32.xlu0 %v249, 122
  %v861 = vpop.permute.xlu0 %860
  %862 = vrot.lane.b32.xlu0 %v257, 122
  %v863 = vpop.permute.xlu0 %862
  %864 = vrot.lane.b32.xlu0 %v265, 122
  %v865 = vpop.permute.xlu0 %864
  %866 = vrot.lane.b32.xlu0 %v264, 122
  %v867 = vpop.permute.xlu0 %866
  %868 = vrot.lane.b32.xlu0 %v266, 122
  %v869 = vpop.permute.xlu0 %868
  %870 = vrot.lane.b32.xlu0 %v274, 122
  %v871 = vpop.permute.xlu0 %870
  %872 = vrot.lane.b32.xlu0 %v282, 122
  %v873 = vpop.permute.xlu0 %872
  %874 = vrot.lane.b32.xlu0 %v281, 122
  %v875 = vpop.permute.xlu0 %874
  %876 = vrot.lane.b32.xlu0 %v283, 122
  %v877 = vpop.permute.xlu0 %876
  %878 = vrot.lane.b32.xlu0 %v291, 122
  %v879 = vpop.permute.xlu0 %878
  %880 = vrot.lane.b32.xlu0 %v299, 122
  %v881 = vpop.permute.xlu0 %880
  %882 = vrot.lane.b32.xlu0 %v298, 122
  %v883 = vpop.permute.xlu0 %882
  %884 = vrot.lane.b32.xlu0 %v300, 122
  %v885 = vpop.permute.xlu0 %884
  %886 = vrot.lane.b32.xlu0 %v308, 122
  %v887 = vpop.permute.xlu0 %886
  %888 = vrot.lane.b32.xlu0 %v316, 122
  %v889 = vpop.permute.xlu0 %888
  %890 = vrot.lane.b32.xlu0 %v315, 122
  %v891 = vpop.permute.xlu0 %890
  %892 = vrot.lane.b32.xlu0 %v317, 122
  %v893 = vpop.permute.xlu0 %892
  %958 = vrot.lane.b32.xlu0 %v53, 120
  %v959 = vpop.permute.xlu0 %958
  %960 = vrot.lane.b32.xlu0 %v61, 120
  %v961 = vpop.permute.xlu0 %960
  %962 = vrot.lane.b32.xlu0 %v60, 120
  %v963 = vpop.permute.xlu0 %962
  %964 = vrot.lane.b32.xlu0 %v62, 120
  %v965 = vpop.permute.xlu0 %964
  %966 = vrot.lane.b32.xlu0 %v70, 120
  %v967 = vpop.permute.xlu0 %966
  %968 = vrot.lane.b32.xlu0 %v78, 120
  %v969 = vpop.permute.xlu0 %968
  %970 = vrot.lane.b32.xlu0 %v77, 120
  %v971 = vpop.permute.xlu0 %970
  %972 = vrot.lane.b32.xlu0 %v79, 120
  %v973 = vpop.permute.xlu0 %972
  %974 = vrot.lane.b32.xlu0 %v87, 120
  %v975 = vpop.permute.xlu0 %974
  %976 = vrot.lane.b32.xlu0 %v95, 120
  %v977 = vpop.permute.xlu0 %976
  %978 = vrot.lane.b32.xlu0 %v94, 120
  %v979 = vpop.permute.xlu0 %978
  %980 = vrot.lane.b32.xlu0 %v96, 120
  %v981 = vpop.permute.xlu0 %980
  %982 = vrot.lane.b32.xlu0 %v104, 120
  %v983 = vpop.permute.xlu0 %982
  %984 = vrot.lane.b32.xlu0 %v112, 120
  %v985 = vpop.permute.xlu0 %984
  %986 = vrot.lane.b32.xlu0 %v111, 120
  %v987 = vpop.permute.xlu0 %986
  %988 = vrot.lane.b32.xlu0 %v113, 120
  %v989 = vpop.permute.xlu0 %988
  %990 = vrot.lane.b32.xlu0 %v121, 120
  %v991 = vpop.permute.xlu0 %990
  %992 = vrot.lane.b32.xlu0 %v129, 120
  %v993 = vpop.permute.xlu0 %992
  %994 = vrot.lane.b32.xlu0 %v128, 120
  %v995 = vpop.permute.xlu0 %994
  %996 = vrot.lane.b32.xlu0 %v130, 120
  %v997 = vpop.permute.xlu0 %996
  %998 = vrot.lane.b32.xlu0 %v138, 120
  %v999 = vpop.permute.xlu0 %998
  %1000 = vrot.lane.b32.xlu0 %v146, 120
  %v1001 = vpop.permute.xlu0 %1000
  %1002 = vrot.lane.b32.xlu0 %v145, 120
  %v1003 = vpop.permute.xlu0 %1002
  %1004 = vrot.lane.b32.xlu0 %v147, 120
  %v1005 = vpop.permute.xlu0 %1004
  %1006 = vrot.lane.b32.xlu0 %v155, 120
  %v1007 = vpop.permute.xlu0 %1006
  %1008 = vrot.lane.b32.xlu0 %v163, 120
  %v1009 = vpop.permute.xlu0 %1008
  %1010 = vrot.lane.b32.xlu0 %v162, 120
  %v1011 = vpop.permute.xlu0 %1010
  %1012 = vrot.lane.b32.xlu0 %v164, 120
  %v1013 = vpop.permute.xlu0 %1012
  %1014 = vrot.lane.b32.xlu0 %v172, 120
  %v1015 = vpop.permute.xlu0 %1014
  %1016 = vrot.lane.b32.xlu0 %v180, 120
  %v1017 = vpop.permute.xlu0 %1016
  %1018 = vrot.lane.b32.xlu0 %v179, 120
  %v1019 = vpop.permute.xlu0 %1018
  %1020 = vrot.lane.b32.xlu0 %v181, 120
  %v1021 = vpop.permute.xlu0 %1020
  %1022 = vrot.lane.b32.xlu0 %v189, 120
  %v1023 = vpop.permute.xlu0 %1022
  %1024 = vrot.lane.b32.xlu0 %v197, 120
  %v1025 = vpop.permute.xlu0 %1024
  %1026 = vrot.lane.b32.xlu0 %v196, 120
  %v1027 = vpop.permute.xlu0 %1026
  %1028 = vrot.lane.b32.xlu0 %v198, 120
  %v1029 = vpop.permute.xlu0 %1028
  %1030 = vrot.lane.b32.xlu0 %v206, 120
  %v1031 = vpop.permute.xlu0 %1030
  %1032 = vrot.lane.b32.xlu0 %v214, 120
  %v1033 = vpop.permute.xlu0 %1032
  %1034 = vrot.lane.b32.xlu0 %v213, 120
  %v1035 = vpop.permute.xlu0 %1034
  %1036 = vrot.lane.b32.xlu0 %v215, 120
  %v1037 = vpop.permute.xlu0 %1036
  %1038 = vrot.lane.b32.xlu0 %v223, 120
  %v1039 = vpop.permute.xlu0 %1038
  %1040 = vrot.lane.b32.xlu0 %v231, 120
  %v1041 = vpop.permute.xlu0 %1040
  %1042 = vrot.lane.b32.xlu0 %v230, 120
  %v1043 = vpop.permute.xlu0 %1042
  %1044 = vrot.lane.b32.xlu0 %v232, 120
  %v1045 = vpop.permute.xlu0 %1044
  %1046 = vrot.lane.b32.xlu0 %v240, 120
  %v1047 = vpop.permute.xlu0 %1046
  %1048 = vrot.lane.b32.xlu0 %v248, 120
  %v1049 = vpop.permute.xlu0 %1048
  %1050 = vrot.lane.b32.xlu0 %v247, 120
  %v1051 = vpop.permute.xlu0 %1050
  %1052 = vrot.lane.b32.xlu0 %v249, 120
  %v1053 = vpop.permute.xlu0 %1052
  %1054 = vrot.lane.b32.xlu0 %v257, 120
  %v1055 = vpop.permute.xlu0 %1054
  %1056 = vrot.lane.b32.xlu0 %v265, 120
  %v1057 = vpop.permute.xlu0 %1056
  %1058 = vrot.lane.b32.xlu0 %v264, 120
  %v1059 = vpop.permute.xlu0 %1058
  %1060 = vrot.lane.b32.xlu0 %v266, 120
  %v1061 = vpop.permute.xlu0 %1060
  %1062 = vrot.lane.b32.xlu0 %v274, 120
  %v1063 = vpop.permute.xlu0 %1062
  %1064 = vrot.lane.b32.xlu0 %v282, 120
  %v1065 = vpop.permute.xlu0 %1064
  %1066 = vrot.lane.b32.xlu0 %v281, 120
  %v1067 = vpop.permute.xlu0 %1066
  %1068 = vrot.lane.b32.xlu0 %v283, 120
  %v1069 = vpop.permute.xlu0 %1068
  %1070 = vrot.lane.b32.xlu0 %v291, 120
  %v1071 = vpop.permute.xlu0 %1070
  %1072 = vrot.lane.b32.xlu0 %v299, 120
  %v1073 = vpop.permute.xlu0 %1072
  %1074 = vrot.lane.b32.xlu0 %v298, 120
  %v1075 = vpop.permute.xlu0 %1074
  %1076 = vrot.lane.b32.xlu0 %v300, 120
  %v1077 = vpop.permute.xlu0 %1076
  %1078 = vrot.lane.b32.xlu0 %v308, 120
  %v1079 = vpop.permute.xlu0 %1078
  %1080 = vrot.lane.b32.xlu0 %v316, 120
  %v1081 = vpop.permute.xlu0 %1080
  %1082 = vrot.lane.b32.xlu0 %v315, 120
  %v1083 = vpop.permute.xlu0 %1082
  %1084 = vrot.lane.b32.xlu0 %v317, 120
  %v1085 = vpop.permute.xlu0 %1084
  %1150 = vrot.lane.b32.xlu0 %v53, 118
  %v1151 = vpop.permute.xlu0 %1150
  %1152 = vrot.lane.b32.xlu0 %v61, 118
  %v1153 = vpop.permute.xlu0 %1152
  %1154 = vrot.lane.b32.xlu0 %v60, 118
  %v1155 = vpop.permute.xlu0 %1154
  %1156 = vrot.lane.b32.xlu0 %v62, 118
  %v1157 = vpop.permute.xlu0 %1156
  %1158 = vrot.lane.b32.xlu0 %v70, 118
  %v1159 = vpop.permute.xlu0 %1158
  %1160 = vrot.lane.b32.xlu0 %v78, 118
  %v1161 = vpop.permute.xlu0 %1160
  %1162 = vrot.lane.b32.xlu0 %v77, 118
  %v1163 = vpop.permute.xlu0 %1162
  %1164 = vrot.lane.b32.xlu0 %v79, 118
  %v1165 = vpop.permute.xlu0 %1164
  %1166 = vrot.lane.b32.xlu0 %v87, 118
  %v1167 = vpop.permute.xlu0 %1166
  %1168 = vrot.lane.b32.xlu0 %v95, 118
  %v1169 = vpop.permute.xlu0 %1168
  %1170 = vrot.lane.b32.xlu0 %v94, 118
  %v1171 = vpop.permute.xlu0 %1170
  %1172 = vrot.lane.b32.xlu0 %v96, 118
  %v1173 = vpop.permute.xlu0 %1172
  %1174 = vrot.lane.b32.xlu0 %v104, 118
  %v1175 = vpop.permute.xlu0 %1174
  %1176 = vrot.lane.b32.xlu0 %v112, 118
  %v1177 = vpop.permute.xlu0 %1176
  %1178 = vrot.lane.b32.xlu0 %v111, 118
  %v1179 = vpop.permute.xlu0 %1178
  %1180 = vrot.lane.b32.xlu0 %v113, 118
  %v1181 = vpop.permute.xlu0 %1180
  %1182 = vrot.lane.b32.xlu0 %v121, 118
  %v1183 = vpop.permute.xlu0 %1182
  %1184 = vrot.lane.b32.xlu0 %v129, 118
  %v1185 = vpop.permute.xlu0 %1184
  %1186 = vrot.lane.b32.xlu0 %v128, 118
  %v1187 = vpop.permute.xlu0 %1186
  %1188 = vrot.lane.b32.xlu0 %v130, 118
  %v1189 = vpop.permute.xlu0 %1188
  %1190 = vrot.lane.b32.xlu0 %v138, 118
  %v1191 = vpop.permute.xlu0 %1190
  %1192 = vrot.lane.b32.xlu0 %v146, 118
  %v1193 = vpop.permute.xlu0 %1192
  %1194 = vrot.lane.b32.xlu0 %v145, 118
  %v1195 = vpop.permute.xlu0 %1194
  %1196 = vrot.lane.b32.xlu0 %v147, 118
  %v1197 = vpop.permute.xlu0 %1196
  %1198 = vrot.lane.b32.xlu0 %v155, 118
  %v1199 = vpop.permute.xlu0 %1198
  %1200 = vrot.lane.b32.xlu0 %v163, 118
  %v1201 = vpop.permute.xlu0 %1200
  %1202 = vrot.lane.b32.xlu0 %v162, 118
  %v1203 = vpop.permute.xlu0 %1202
  %1204 = vrot.lane.b32.xlu0 %v164, 118
  %v1205 = vpop.permute.xlu0 %1204
  %1206 = vrot.lane.b32.xlu0 %v172, 118
  %v1207 = vpop.permute.xlu0 %1206
  %1208 = vrot.lane.b32.xlu0 %v180, 118
  %v1209 = vpop.permute.xlu0 %1208
  %1210 = vrot.lane.b32.xlu0 %v179, 118
  %v1211 = vpop.permute.xlu0 %1210
  %1212 = vrot.lane.b32.xlu0 %v181, 118
  %v1213 = vpop.permute.xlu0 %1212
  %1214 = vrot.lane.b32.xlu0 %v189, 118
  %v1215 = vpop.permute.xlu0 %1214
  %1216 = vrot.lane.b32.xlu0 %v197, 118
  %v1217 = vpop.permute.xlu0 %1216
  %1218 = vrot.lane.b32.xlu0 %v196, 118
  %v1219 = vpop.permute.xlu0 %1218
  %1220 = vrot.lane.b32.xlu0 %v198, 118
  %v1221 = vpop.permute.xlu0 %1220
  %1222 = vrot.lane.b32.xlu0 %v206, 118
  %v1223 = vpop.permute.xlu0 %1222
  %1224 = vrot.lane.b32.xlu0 %v214, 118
  %v1225 = vpop.permute.xlu0 %1224
  %1226 = vrot.lane.b32.xlu0 %v213, 118
  %v1227 = vpop.permute.xlu0 %1226
  %1228 = vrot.lane.b32.xlu0 %v215, 118
  %v1229 = vpop.permute.xlu0 %1228
  %1230 = vrot.lane.b32.xlu0 %v223, 118
  %v1231 = vpop.permute.xlu0 %1230
  %1232 = vrot.lane.b32.xlu0 %v231, 118
  %v1233 = vpop.permute.xlu0 %1232
  %1234 = vrot.lane.b32.xlu0 %v230, 118
  %v1235 = vpop.permute.xlu0 %1234
  %1236 = vrot.lane.b32.xlu0 %v232, 118
  %v1237 = vpop.permute.xlu0 %1236
  %1238 = vrot.lane.b32.xlu0 %v240, 118
  %v1239 = vpop.permute.xlu0 %1238
  %1240 = vrot.lane.b32.xlu0 %v248, 118
  %v1241 = vpop.permute.xlu0 %1240
  %1242 = vrot.lane.b32.xlu0 %v247, 118
  %v1243 = vpop.permute.xlu0 %1242
  %1244 = vrot.lane.b32.xlu0 %v249, 118
  %v1245 = vpop.permute.xlu0 %1244
  %1246 = vrot.lane.b32.xlu0 %v257, 118
  %v1247 = vpop.permute.xlu0 %1246
  %1248 = vrot.lane.b32.xlu0 %v265, 118
  %v1249 = vpop.permute.xlu0 %1248
  %1250 = vrot.lane.b32.xlu0 %v264, 118
  %v1251 = vpop.permute.xlu0 %1250
  %1252 = vrot.lane.b32.xlu0 %v266, 118
  %v1253 = vpop.permute.xlu0 %1252
  %1254 = vrot.lane.b32.xlu0 %v274, 118
  %v1255 = vpop.permute.xlu0 %1254
  %1256 = vrot.lane.b32.xlu0 %v282, 118
  %v1257 = vpop.permute.xlu0 %1256
  %1258 = vrot.lane.b32.xlu0 %v281, 118
  %v1259 = vpop.permute.xlu0 %1258
  %1260 = vrot.lane.b32.xlu0 %v283, 118
  %v1261 = vpop.permute.xlu0 %1260
  %1262 = vrot.lane.b32.xlu0 %v291, 118
  %v1263 = vpop.permute.xlu0 %1262
  %1264 = vrot.lane.b32.xlu0 %v299, 118
  %v1265 = vpop.permute.xlu0 %1264
  %1266 = vrot.lane.b32.xlu0 %v298, 118
  %v1267 = vpop.permute.xlu0 %1266
  %1268 = vrot.lane.b32.xlu0 %v300, 118
  %v1269 = vpop.permute.xlu0 %1268
  %1270 = vrot.lane.b32.xlu0 %v308, 118
  %v1271 = vpop.permute.xlu0 %1270
  %1272 = vrot.lane.b32.xlu0 %v316, 118
  %v1273 = vpop.permute.xlu0 %1272
  %1274 = vrot.lane.b32.xlu0 %v315, 118
  %v1275 = vpop.permute.xlu0 %1274
  %1276 = vrot.lane.b32.xlu0 %v317, 118
  %v1277 = vpop.permute.xlu0 %1276
  %1342 = vrot.lane.b32.xlu0 %v53, 116
  %v1343 = vpop.permute.xlu0 %1342
  %1344 = vrot.lane.b32.xlu0 %v61, 116
  %v1345 = vpop.permute.xlu0 %1344
  %1346 = vrot.lane.b32.xlu0 %v60, 116
  %v1347 = vpop.permute.xlu0 %1346
  %1348 = vrot.lane.b32.xlu0 %v62, 116
  %v1349 = vpop.permute.xlu0 %1348
  %1350 = vrot.lane.b32.xlu0 %v70, 116
  %v1351 = vpop.permute.xlu0 %1350
  %1352 = vrot.lane.b32.xlu0 %v78, 116
  %v1353 = vpop.permute.xlu0 %1352
  %1354 = vrot.lane.b32.xlu0 %v77, 116
  %v1355 = vpop.permute.xlu0 %1354
  %1356 = vrot.lane.b32.xlu0 %v79, 116
  %v1357 = vpop.permute.xlu0 %1356
  %1358 = vrot.lane.b32.xlu0 %v87, 116
  %v1359 = vpop.permute.xlu0 %1358
  %1360 = vrot.lane.b32.xlu0 %v95, 116
  %v1361 = vpop.permute.xlu0 %1360
  %1362 = vrot.lane.b32.xlu0 %v94, 116
  %v1363 = vpop.permute.xlu0 %1362
  %1364 = vrot.lane.b32.xlu0 %v96, 116
  %v1365 = vpop.permute.xlu0 %1364
  %1366 = vrot.lane.b32.xlu0 %v104, 116
  %v1367 = vpop.permute.xlu0 %1366
  %1368 = vrot.lane.b32.xlu0 %v112, 116
  %v1369 = vpop.permute.xlu0 %1368
  %1370 = vrot.lane.b32.xlu0 %v111, 116
  %v1371 = vpop.permute.xlu0 %1370
  %1372 = vrot.lane.b32.xlu0 %v113, 116
  %v1373 = vpop.permute.xlu0 %1372
  %1374 = vrot.lane.b32.xlu0 %v121, 116
  %v1375 = vpop.permute.xlu0 %1374
  %1376 = vrot.lane.b32.xlu0 %v129, 116
  %v1377 = vpop.permute.xlu0 %1376
  %1378 = vrot.lane.b32.xlu0 %v128, 116
  %v1379 = vpop.permute.xlu0 %1378
  %1380 = vrot.lane.b32.xlu0 %v130, 116
  %v1381 = vpop.permute.xlu0 %1380
  %1382 = vrot.lane.b32.xlu0 %v138, 116
  %v1383 = vpop.permute.xlu0 %1382
  %1384 = vrot.lane.b32.xlu0 %v146, 116
  %v1385 = vpop.permute.xlu0 %1384
  %1386 = vrot.lane.b32.xlu0 %v145, 116
  %v1387 = vpop.permute.xlu0 %1386
  %1388 = vrot.lane.b32.xlu0 %v147, 116
  %v1389 = vpop.permute.xlu0 %1388
  %1390 = vrot.lane.b32.xlu0 %v155, 116
  %v1391 = vpop.permute.xlu0 %1390
  %1392 = vrot.lane.b32.xlu0 %v163, 116
  %v1393 = vpop.permute.xlu0 %1392
  %1394 = vrot.lane.b32.xlu0 %v162, 116
  %v1395 = vpop.permute.xlu0 %1394
  %1396 = vrot.lane.b32.xlu0 %v164, 116
  %v1397 = vpop.permute.xlu0 %1396
  %1398 = vrot.lane.b32.xlu0 %v172, 116
  %v1399 = vpop.permute.xlu0 %1398
  %1400 = vrot.lane.b32.xlu0 %v180, 116
  %v1401 = vpop.permute.xlu0 %1400
  %1402 = vrot.lane.b32.xlu0 %v179, 116
  %v1403 = vpop.permute.xlu0 %1402
  %1404 = vrot.lane.b32.xlu0 %v181, 116
  %v1405 = vpop.permute.xlu0 %1404
  %1406 = vrot.lane.b32.xlu0 %v189, 116
  %v1407 = vpop.permute.xlu0 %1406
  %1408 = vrot.lane.b32.xlu0 %v197, 116
  %v1409 = vpop.permute.xlu0 %1408
  %1410 = vrot.lane.b32.xlu0 %v196, 116
  %v1411 = vpop.permute.xlu0 %1410
  %1412 = vrot.lane.b32.xlu0 %v198, 116
  %v1413 = vpop.permute.xlu0 %1412
  %1414 = vrot.lane.b32.xlu0 %v206, 116
  %v1415 = vpop.permute.xlu0 %1414
  %1416 = vrot.lane.b32.xlu0 %v214, 116
  %v1417 = vpop.permute.xlu0 %1416
  %1418 = vrot.lane.b32.xlu0 %v213, 116
  %v1419 = vpop.permute.xlu0 %1418
  %1420 = vrot.lane.b32.xlu0 %v215, 116
  %v1421 = vpop.permute.xlu0 %1420
  %1422 = vrot.lane.b32.xlu0 %v223, 116
  %v1423 = vpop.permute.xlu0 %1422
  %1424 = vrot.lane.b32.xlu0 %v231, 116
  %v1425 = vpop.permute.xlu0 %1424
  %1426 = vrot.lane.b32.xlu0 %v230, 116
  %v1427 = vpop.permute.xlu0 %1426
  %1428 = vrot.lane.b32.xlu0 %v232, 116
  %v1429 = vpop.permute.xlu0 %1428
  %1430 = vrot.lane.b32.xlu0 %v240, 116
  %v1431 = vpop.permute.xlu0 %1430
  %1432 = vrot.lane.b32.xlu0 %v248, 116
  %v1433 = vpop.permute.xlu0 %1432
  %1434 = vrot.lane.b32.xlu0 %v247, 116
  %v1435 = vpop.permute.xlu0 %1434
  %1436 = vrot.lane.b32.xlu0 %v249, 116
  %v1437 = vpop.permute.xlu0 %1436
  %1438 = vrot.lane.b32.xlu0 %v257, 116
  %v1439 = vpop.permute.xlu0 %1438
  %1440 = vrot.lane.b32.xlu0 %v265, 116
  %v1441 = vpop.permute.xlu0 %1440
  %1442 = vrot.lane.b32.xlu0 %v264, 116
  %v1443 = vpop.permute.xlu0 %1442
  %1444 = vrot.lane.b32.xlu0 %v266, 116
  %v1445 = vpop.permute.xlu0 %1444
  %1446 = vrot.lane.b32.xlu0 %v274, 116
  %v1447 = vpop.permute.xlu0 %1446
  %1448 = vrot.lane.b32.xlu0 %v282, 116
  %v1449 = vpop.permute.xlu0 %1448
  %1450 = vrot.lane.b32.xlu0 %v281, 116
  %v1451 = vpop.permute.xlu0 %1450
  %1452 = vrot.lane.b32.xlu0 %v283, 116
  %v1453 = vpop.permute.xlu0 %1452
  %1454 = vrot.lane.b32.xlu0 %v291, 116
  %v1455 = vpop.permute.xlu0 %1454
  %1456 = vrot.lane.b32.xlu0 %v299, 116
  %v1457 = vpop.permute.xlu0 %1456
  %1458 = vrot.lane.b32.xlu0 %v298, 116
  %v1459 = vpop.permute.xlu0 %1458
  %1460 = vrot.lane.b32.xlu0 %v300, 116
  %v1461 = vpop.permute.xlu0 %1460
  %1462 = vrot.lane.b32.xlu0 %v308, 116
  %v1463 = vpop.permute.xlu0 %1462
  %1464 = vrot.lane.b32.xlu0 %v316, 116
  %v1465 = vpop.permute.xlu0 %1464
  %1466 = vrot.lane.b32.xlu0 %v315, 116
  %v1467 = vpop.permute.xlu0 %1466
  %1468 = vrot.lane.b32.xlu0 %v317, 116
  %v1469 = vpop.permute.xlu0 %1468
  %1534 = vrot.lane.b32.xlu0 %v53, 114
  %v1535 = vpop.permute.xlu0 %1534
  %1536 = vrot.lane.b32.xlu0 %v61, 114
  %v1537 = vpop.permute.xlu0 %1536
  %1538 = vrot.lane.b32.xlu0 %v60, 114
  %v1539 = vpop.permute.xlu0 %1538
  %1540 = vrot.lane.b32.xlu0 %v62, 114
  %v1541 = vpop.permute.xlu0 %1540
  %1542 = vrot.lane.b32.xlu0 %v70, 114
  %v1543 = vpop.permute.xlu0 %1542
  %1544 = vrot.lane.b32.xlu0 %v78, 114
  %v1545 = vpop.permute.xlu0 %1544
  %1546 = vrot.lane.b32.xlu0 %v77, 114
  %v1547 = vpop.permute.xlu0 %1546
  %1548 = vrot.lane.b32.xlu0 %v79, 114
  %v1549 = vpop.permute.xlu0 %1548
  %1550 = vrot.lane.b32.xlu0 %v87, 114
  %v1551 = vpop.permute.xlu0 %1550
  %1552 = vrot.lane.b32.xlu0 %v95, 114
  %v1553 = vpop.permute.xlu0 %1552
  %1554 = vrot.lane.b32.xlu0 %v94, 114
  %v1555 = vpop.permute.xlu0 %1554
  %1556 = vrot.lane.b32.xlu0 %v96, 114
  %v1557 = vpop.permute.xlu0 %1556
  %1558 = vrot.lane.b32.xlu0 %v104, 114
  %v1559 = vpop.permute.xlu0 %1558
  %1560 = vrot.lane.b32.xlu0 %v112, 114
  %v1561 = vpop.permute.xlu0 %1560
  %1562 = vrot.lane.b32.xlu0 %v111, 114
  %v1563 = vpop.permute.xlu0 %1562
  %1564 = vrot.lane.b32.xlu0 %v113, 114
  %v1565 = vpop.permute.xlu0 %1564
  %1566 = vrot.lane.b32.xlu0 %v121, 114
  %v1567 = vpop.permute.xlu0 %1566
  %1568 = vrot.lane.b32.xlu0 %v129, 114
  %v1569 = vpop.permute.xlu0 %1568
  %1570 = vrot.lane.b32.xlu0 %v128, 114
  %v1571 = vpop.permute.xlu0 %1570
  %1572 = vrot.lane.b32.xlu0 %v130, 114
  %v1573 = vpop.permute.xlu0 %1572
  %1574 = vrot.lane.b32.xlu0 %v138, 114
  %v1575 = vpop.permute.xlu0 %1574
  %1576 = vrot.lane.b32.xlu0 %v146, 114
  %v1577 = vpop.permute.xlu0 %1576
  %1578 = vrot.lane.b32.xlu0 %v145, 114
  %v1579 = vpop.permute.xlu0 %1578
  %1580 = vrot.lane.b32.xlu0 %v147, 114
  %v1581 = vpop.permute.xlu0 %1580
  %1582 = vrot.lane.b32.xlu0 %v155, 114
  %v1583 = vpop.permute.xlu0 %1582
  %1584 = vrot.lane.b32.xlu0 %v163, 114
  %v1585 = vpop.permute.xlu0 %1584
  %1586 = vrot.lane.b32.xlu0 %v162, 114
  %v1587 = vpop.permute.xlu0 %1586
  %1588 = vrot.lane.b32.xlu0 %v164, 114
  %v1589 = vpop.permute.xlu0 %1588
  %1590 = vrot.lane.b32.xlu0 %v172, 114
  %v1591 = vpop.permute.xlu0 %1590
  %1592 = vrot.lane.b32.xlu0 %v180, 114
  %v1593 = vpop.permute.xlu0 %1592
  %1594 = vrot.lane.b32.xlu0 %v179, 114
  %v1595 = vpop.permute.xlu0 %1594
  %1596 = vrot.lane.b32.xlu0 %v181, 114
  %v1597 = vpop.permute.xlu0 %1596
  %1598 = vrot.lane.b32.xlu0 %v189, 114
  %v1599 = vpop.permute.xlu0 %1598
  %1600 = vrot.lane.b32.xlu0 %v197, 114
  %v1601 = vpop.permute.xlu0 %1600
  %1602 = vrot.lane.b32.xlu0 %v196, 114
  %v1603 = vpop.permute.xlu0 %1602
  %1604 = vrot.lane.b32.xlu0 %v198, 114
  %v1605 = vpop.permute.xlu0 %1604
  %1606 = vrot.lane.b32.xlu0 %v206, 114
  %v1607 = vpop.permute.xlu0 %1606
  %1608 = vrot.lane.b32.xlu0 %v214, 114
  %v1609 = vpop.permute.xlu0 %1608
  %1610 = vrot.lane.b32.xlu0 %v213, 114
  %v1611 = vpop.permute.xlu0 %1610
  %1612 = vrot.lane.b32.xlu0 %v215, 114
  %v1613 = vpop.permute.xlu0 %1612
  %1614 = vrot.lane.b32.xlu0 %v223, 114
  %v1615 = vpop.permute.xlu0 %1614
  %1616 = vrot.lane.b32.xlu0 %v231, 114
  %v1617 = vpop.permute.xlu0 %1616
  %1618 = vrot.lane.b32.xlu0 %v230, 114
  %v1619 = vpop.permute.xlu0 %1618
  %1620 = vrot.lane.b32.xlu0 %v232, 114
  %v1621 = vpop.permute.xlu0 %1620
  %1622 = vrot.lane.b32.xlu0 %v240, 114
  %v1623 = vpop.permute.xlu0 %1622
  %1624 = vrot.lane.b32.xlu0 %v248, 114
  %v1625 = vpop.permute.xlu0 %1624
  %1626 = vrot.lane.b32.xlu0 %v247, 114
  %v1627 = vpop.permute.xlu0 %1626
  %1628 = vrot.lane.b32.xlu0 %v249, 114
  %v1629 = vpop.permute.xlu0 %1628
  %1630 = vrot.lane.b32.xlu0 %v257, 114
  %v1631 = vpop.permute.xlu0 %1630
  %1632 = vrot.lane.b32.xlu0 %v265, 114
  %v1633 = vpop.permute.xlu0 %1632
  %1634 = vrot.lane.b32.xlu0 %v264, 114
  %v1635 = vpop.permute.xlu0 %1634
  %1636 = vrot.lane.b32.xlu0 %v266, 114
  %v1637 = vpop.permute.xlu0 %1636
  %1638 = vrot.lane.b32.xlu0 %v274, 114
  %v1639 = vpop.permute.xlu0 %1638
  %1640 = vrot.lane.b32.xlu0 %v282, 114
  %v1641 = vpop.permute.xlu0 %1640
  %1642 = vrot.lane.b32.xlu0 %v281, 114
  %v1643 = vpop.permute.xlu0 %1642
  %1644 = vrot.lane.b32.xlu0 %v283, 114
  %v1645 = vpop.permute.xlu0 %1644
  %1646 = vrot.lane.b32.xlu0 %v291, 114
  %v1647 = vpop.permute.xlu0 %1646
  %1648 = vrot.lane.b32.xlu0 %v299, 114
  %v1649 = vpop.permute.xlu0 %1648
  %1650 = vrot.lane.b32.xlu0 %v298, 114
  %v1651 = vpop.permute.xlu0 %1650
  %1652 = vrot.lane.b32.xlu0 %v300, 114
  %v1653 = vpop.permute.xlu0 %1652
  %1654 = vrot.lane.b32.xlu0 %v308, 114
  %v1655 = vpop.permute.xlu0 %1654
  %1656 = vrot.lane.b32.xlu0 %v316, 114
  %v1657 = vpop.permute.xlu0 %1656
  %1658 = vrot.lane.b32.xlu0 %v315, 114
  %v1659 = vpop.permute.xlu0 %1658
  %1660 = vrot.lane.b32.xlu0 %v317, 114
  %v1661 = vpop.permute.xlu0 %1660
  %v1726 = vcombine.low %v53, %v383
  %v1728 = vunpack.c.l.s4 1934713408
  %v1729 = vunpack.c.0.s8 %v1728
  %v1730 = vlaneseq
  %v1731 = vshrl.u32 %v1730, 7
  %v1732 = vsub.s32 %v1729, %v1731
  %v1733 = vrot.slane %v1726, %v1732
  %v1734 = vcombine.low %v575, %v767
  %v1736 = vunpack.c.l.s4 1934713408
  %v1737 = vunpack.c.0.s8 %v1736
  %v1738 = vlaneseq
  %v1739 = vshrl.u32 %v1738, 7
  %v1740 = vsub.s32 %v1737, %v1739
  %v1741 = vrot.slane %v1734, %v1740
  %v1742 = vcombine.low %v959, %v1151
  %v1744 = vunpack.c.l.s4 1934713408
  %v1745 = vunpack.c.0.s8 %v1744
  %v1746 = vlaneseq
  %v1747 = vshrl.u32 %v1746, 7
  %v1748 = vsub.s32 %v1745, %v1747
  %v1749 = vrot.slane %v1742, %v1748
  %v1750 = vcombine.low %v1343, %v1535
  %v1752 = vunpack.c.l.s4 1934713408
  %v1753 = vunpack.c.0.s8 %v1752
  %v1754 = vlaneseq
  %v1755 = vshrl.u32 %v1754, 7
  %v1756 = vsub.s32 %v1753, %v1755
  %v1757 = vrot.slane %v1750, %v1756
  %v1758 = vcombine.low %v87, %v399
  %v1760 = vunpack.c.l.s4 1934713408
  %v1761 = vunpack.c.0.s8 %v1760
  %v1762 = vlaneseq
  %v1763 = vshrl.u32 %v1762, 7
  %v1764 = vsub.s32 %v1761, %v1763
  %v1765 = vrot.slane %v1758, %v1764
  %v1766 = vcombine.low %v591, %v783
  %v1768 = vunpack.c.l.s4 1934713408
  %v1769 = vunpack.c.0.s8 %v1768
  %v1770 = vlaneseq
  %v1771 = vshrl.u32 %v1770, 7
  %v1772 = vsub.s32 %v1769, %v1771
  %v1773 = vrot.slane %v1766, %v1772
  %v1774 = vcombine.low %v975, %v1167
  %v1776 = vunpack.c.l.s4 1934713408
  %v1777 = vunpack.c.0.s8 %v1776
  %v1778 = vlaneseq
  %v1779 = vshrl.u32 %v1778, 7
  %v1780 = vsub.s32 %v1777, %v1779
  %v1781 = vrot.slane %v1774, %v1780
  %v1782 = vcombine.low %v1359, %v1551
  %v1784 = vunpack.c.l.s4 1934713408
  %v1785 = vunpack.c.0.s8 %v1784
  %v1786 = vlaneseq
  %v1787 = vshrl.u32 %v1786, 7
  %v1788 = vsub.s32 %v1785, %v1787
  %v1789 = vrot.slane %v1782, %v1788
  %v1790 = vcombine.low %v121, %v415
  %v1792 = vunpack.c.l.s4 1934713408
  %v1793 = vunpack.c.0.s8 %v1792
  %v1794 = vlaneseq
  %v1795 = vshrl.u32 %v1794, 7
  %v1796 = vsub.s32 %v1793, %v1795
  %v1797 = vrot.slane %v1790, %v1796
  %v1798 = vcombine.low %v607, %v799
  %v1800 = vunpack.c.l.s4 1934713408
  %v1801 = vunpack.c.0.s8 %v1800
  %v1802 = vlaneseq
  %v1803 = vshrl.u32 %v1802, 7
  %v1804 = vsub.s32 %v1801, %v1803
  %v1805 = vrot.slane %v1798, %v1804
  %v1806 = vcombine.low %v991, %v1183
  %v1808 = vunpack.c.l.s4 1934713408
  %v1809 = vunpack.c.0.s8 %v1808
  %v1810 = vlaneseq
  %v1811 = vshrl.u32 %v1810, 7
  %v1812 = vsub.s32 %v1809, %v1811
  %v1813 = vrot.slane %v1806, %v1812
  %v1814 = vcombine.low %v1375, %v1567
  %v1816 = vunpack.c.l.s4 1934713408
  %v1817 = vunpack.c.0.s8 %v1816
  %v1818 = vlaneseq
  %v1819 = vshrl.u32 %v1818, 7
  %v1820 = vsub.s32 %v1817, %v1819
  %v1821 = vrot.slane %v1814, %v1820
  %v1822 = vcombine.low %v155, %v431
  %v1824 = vunpack.c.l.s4 1934713408
  %v1825 = vunpack.c.0.s8 %v1824
  %v1826 = vlaneseq
  %v1827 = vshrl.u32 %v1826, 7
  %v1828 = vsub.s32 %v1825, %v1827
  %v1829 = vrot.slane %v1822, %v1828
  %v1830 = vcombine.low %v623, %v815
  %v1832 = vunpack.c.l.s4 1934713408
  %v1833 = vunpack.c.0.s8 %v1832
  %v1834 = vlaneseq
  %v1835 = vshrl.u32 %v1834, 7
  %v1836 = vsub.s32 %v1833, %v1835
  %v1837 = vrot.slane %v1830, %v1836
  %v1838 = vcombine.low %v1007, %v1199
  %v1840 = vunpack.c.l.s4 1934713408
  %v1841 = vunpack.c.0.s8 %v1840
  %v1842 = vlaneseq
  %v1843 = vshrl.u32 %v1842, 7
  %v1844 = vsub.s32 %v1841, %v1843
  %v1845 = vrot.slane %v1838, %v1844
  %v1846 = vcombine.low %v1391, %v1583
  %v1848 = vunpack.c.l.s4 1934713408
  %v1849 = vunpack.c.0.s8 %v1848
  %v1850 = vlaneseq
  %v1851 = vshrl.u32 %v1850, 7
  %v1852 = vsub.s32 %v1849, %v1851
  %v1853 = vrot.slane %v1846, %v1852
  %v1854 = vcombine.low %v189, %v447
  %v1856 = vunpack.c.l.s4 1934713408
  %v1857 = vunpack.c.0.s8 %v1856
  %v1858 = vlaneseq
  %v1859 = vshrl.u32 %v1858, 7
  %v1860 = vsub.s32 %v1857, %v1859
  %v1861 = vrot.slane %v1854, %v1860
  %v1862 = vcombine.low %v639, %v831
  %v1864 = vunpack.c.l.s4 1934713408
  %v1865 = vunpack.c.0.s8 %v1864
  %v1866 = vlaneseq
  %v1867 = vshrl.u32 %v1866, 7
  %v1868 = vsub.s32 %v1865, %v1867
  %v1869 = vrot.slane %v1862, %v1868
  %v1870 = vcombine.low %v1023, %v1215
  %v1872 = vunpack.c.l.s4 1934713408
  %v1873 = vunpack.c.0.s8 %v1872
  %v1874 = vlaneseq
  %v1875 = vshrl.u32 %v1874, 7
  %v1876 = vsub.s32 %v1873, %v1875
  %v1877 = vrot.slane %v1870, %v1876
  %v1878 = vcombine.low %v1407, %v1599
  %v1880 = vunpack.c.l.s4 1934713408
  %v1881 = vunpack.c.0.s8 %v1880
  %v1882 = vlaneseq
  %v1883 = vshrl.u32 %v1882, 7
  %v1884 = vsub.s32 %v1881, %v1883
  %v1885 = vrot.slane %v1878, %v1884
  %v1886 = vcombine.low %v223, %v463
  %v1888 = vunpack.c.l.s4 1934713408
  %v1889 = vunpack.c.0.s8 %v1888
  %v1890 = vlaneseq
  %v1891 = vshrl.u32 %v1890, 7
  %v1892 = vsub.s32 %v1889, %v1891
  %v1893 = vrot.slane %v1886, %v1892
  %v1894 = vcombine.low %v655, %v847
  %v1896 = vunpack.c.l.s4 1934713408
  %v1897 = vunpack.c.0.s8 %v1896
  %v1898 = vlaneseq
  %v1899 = vshrl.u32 %v1898, 7
  %v1900 = vsub.s32 %v1897, %v1899
  %v1901 = vrot.slane %v1894, %v1900
  %v1902 = vcombine.low %v1039, %v1231
  %v1904 = vunpack.c.l.s4 1934713408
  %v1905 = vunpack.c.0.s8 %v1904
  %v1906 = vlaneseq
  %v1907 = vshrl.u32 %v1906, 7
  %v1908 = vsub.s32 %v1905, %v1907
  %v1909 = vrot.slane %v1902, %v1908
  %v1910 = vcombine.low %v1423, %v1615
  %v1912 = vunpack.c.l.s4 1934713408
  %v1913 = vunpack.c.0.s8 %v1912
  %v1914 = vlaneseq
  %v1915 = vshrl.u32 %v1914, 7
  %v1916 = vsub.s32 %v1913, %v1915
  %v1917 = vrot.slane %v1910, %v1916
  %v1918 = vcombine.low %v257, %v479
  %v1920 = vunpack.c.l.s4 1934713408
  %v1921 = vunpack.c.0.s8 %v1920
  %v1922 = vlaneseq
  %v1923 = vshrl.u32 %v1922, 7
  %v1924 = vsub.s32 %v1921, %v1923
  %v1925 = vrot.slane %v1918, %v1924
  %v1926 = vcombine.low %v671, %v863
  %v1928 = vunpack.c.l.s4 1934713408
  %v1929 = vunpack.c.0.s8 %v1928
  %v1930 = vlaneseq
  %v1931 = vshrl.u32 %v1930, 7
  %v1932 = vsub.s32 %v1929, %v1931
  %v1933 = vrot.slane %v1926, %v1932
  %v1934 = vcombine.low %v1055, %v1247
  %v1936 = vunpack.c.l.s4 1934713408
  %v1937 = vunpack.c.0.s8 %v1936
  %v1938 = vlaneseq
  %v1939 = vshrl.u32 %v1938, 7
  %v1940 = vsub.s32 %v1937, %v1939
  %v1941 = vrot.slane %v1934, %v1940
  %v1942 = vcombine.low %v1439, %v1631
  %v1944 = vunpack.c.l.s4 1934713408
  %v1945 = vunpack.c.0.s8 %v1944
  %v1946 = vlaneseq
  %v1947 = vshrl.u32 %v1946, 7
  %v1948 = vsub.s32 %v1945, %v1947
  %v1949 = vrot.slane %v1942, %v1948
  %v1950 = vcombine.low %v291, %v495
  %v1952 = vunpack.c.l.s4 1934713408
  %v1953 = vunpack.c.0.s8 %v1952
  %v1954 = vlaneseq
  %v1955 = vshrl.u32 %v1954, 7
  %v1956 = vsub.s32 %v1953, %v1955
  %v1957 = vrot.slane %v1950, %v1956
  %v1958 = vcombine.low %v687, %v879
  %v1960 = vunpack.c.l.s4 1934713408
  %v1961 = vunpack.c.0.s8 %v1960
  %v1962 = vlaneseq
  %v1963 = vshrl.u32 %v1962, 7
  %v1964 = vsub.s32 %v1961, %v1963
  %v1965 = vrot.slane %v1958, %v1964
  %v1966 = vcombine.low %v1071, %v1263
  %v1968 = vunpack.c.l.s4 1934713408
  %v1969 = vunpack.c.0.s8 %v1968
  %v1970 = vlaneseq
  %v1971 = vshrl.u32 %v1970, 7
  %v1972 = vsub.s32 %v1969, %v1971
  %v1973 = vrot.slane %v1966, %v1972
  %v1974 = vcombine.low %v1455, %v1647
  %v1976 = vunpack.c.l.s4 1934713408
  %v1977 = vunpack.c.0.s8 %v1976
  %v1978 = vlaneseq
  %v1979 = vshrl.u32 %v1978, 7
  %v1980 = vsub.s32 %v1977, %v1979
  %v1981 = vrot.slane %v1974, %v1980
  %v1982 = vcombine.low %v61, %v385
  %v1984 = vunpack.c.l.s4 1934713408
  %v1985 = vunpack.c.0.s8 %v1984
  %v1986 = vlaneseq
  %v1987 = vshrl.u32 %v1986, 7
  %v1988 = vsub.s32 %v1985, %v1987
  %v1989 = vrot.slane %v1982, %v1988
  %v1990 = vcombine.low %v577, %v769
  %v1992 = vunpack.c.l.s4 1934713408
  %v1993 = vunpack.c.0.s8 %v1992
  %v1994 = vlaneseq
  %v1995 = vshrl.u32 %v1994, 7
  %v1996 = vsub.s32 %v1993, %v1995
  %v1997 = vrot.slane %v1990, %v1996
  %v1998 = vcombine.low %v961, %v1153
  %v2000 = vunpack.c.l.s4 1934713408
  %v2001 = vunpack.c.0.s8 %v2000
  %v2002 = vlaneseq
  %v2003 = vshrl.u32 %v2002, 7
  %v2004 = vsub.s32 %v2001, %v2003
  %v2005 = vrot.slane %v1998, %v2004
  %v2006 = vcombine.low %v1345, %v1537
  %v2008 = vunpack.c.l.s4 1934713408
  %v2009 = vunpack.c.0.s8 %v2008
  %v2010 = vlaneseq
  %v2011 = vshrl.u32 %v2010, 7
  %v2012 = vsub.s32 %v2009, %v2011
  %v2013 = vrot.slane %v2006, %v2012
  %v2014 = vcombine.low %v95, %v401
  %v2016 = vunpack.c.l.s4 1934713408
  %v2017 = vunpack.c.0.s8 %v2016
  %v2018 = vlaneseq
  %v2019 = vshrl.u32 %v2018, 7
  %v2020 = vsub.s32 %v2017, %v2019
  %v2021 = vrot.slane %v2014, %v2020
  %v2022 = vcombine.low %v593, %v785
  %v2024 = vunpack.c.l.s4 1934713408
  %v2025 = vunpack.c.0.s8 %v2024
  %v2026 = vlaneseq
  %v2027 = vshrl.u32 %v2026, 7
  %v2028 = vsub.s32 %v2025, %v2027
  %v2029 = vrot.slane %v2022, %v2028
  %v2030 = vcombine.low %v977, %v1169
  %v2032 = vunpack.c.l.s4 1934713408
  %v2033 = vunpack.c.0.s8 %v2032
  %v2034 = vlaneseq
  %v2035 = vshrl.u32 %v2034, 7
  %v2036 = vsub.s32 %v2033, %v2035
  %v2037 = vrot.slane %v2030, %v2036
  %v2038 = vcombine.low %v1361, %v1553
  %v2040 = vunpack.c.l.s4 1934713408
  %v2041 = vunpack.c.0.s8 %v2040
  %v2042 = vlaneseq
  %v2043 = vshrl.u32 %v2042, 7
  %v2044 = vsub.s32 %v2041, %v2043
  %v2045 = vrot.slane %v2038, %v2044
  %v2046 = vcombine.low %v129, %v417
  %v2048 = vunpack.c.l.s4 1934713408
  %v2049 = vunpack.c.0.s8 %v2048
  %v2050 = vlaneseq
  %v2051 = vshrl.u32 %v2050, 7
  %v2052 = vsub.s32 %v2049, %v2051
  %v2053 = vrot.slane %v2046, %v2052
  %v2054 = vcombine.low %v609, %v801
  %v2056 = vunpack.c.l.s4 1934713408
  %v2057 = vunpack.c.0.s8 %v2056
  %v2058 = vlaneseq
  %v2059 = vshrl.u32 %v2058, 7
  %v2060 = vsub.s32 %v2057, %v2059
  %v2061 = vrot.slane %v2054, %v2060
  %v2062 = vcombine.low %v993, %v1185
  %v2064 = vunpack.c.l.s4 1934713408
  %v2065 = vunpack.c.0.s8 %v2064
  %v2066 = vlaneseq
  %v2067 = vshrl.u32 %v2066, 7
  %v2068 = vsub.s32 %v2065, %v2067
  %v2069 = vrot.slane %v2062, %v2068
  %v2070 = vcombine.low %v1377, %v1569
  %v2072 = vunpack.c.l.s4 1934713408
  %v2073 = vunpack.c.0.s8 %v2072
  %v2074 = vlaneseq
  %v2075 = vshrl.u32 %v2074, 7
  %v2076 = vsub.s32 %v2073, %v2075
  %v2077 = vrot.slane %v2070, %v2076
  %v2078 = vcombine.low %v163, %v433
  %v2080 = vunpack.c.l.s4 1934713408
  %v2081 = vunpack.c.0.s8 %v2080
  %v2082 = vlaneseq
  %v2083 = vshrl.u32 %v2082, 7
  %v2084 = vsub.s32 %v2081, %v2083
  %v2085 = vrot.slane %v2078, %v2084
  %v2086 = vcombine.low %v625, %v817
  %v2088 = vunpack.c.l.s4 1934713408
  %v2089 = vunpack.c.0.s8 %v2088
  %v2090 = vlaneseq
  %v2091 = vshrl.u32 %v2090, 7
  %v2092 = vsub.s32 %v2089, %v2091
  %v2093 = vrot.slane %v2086, %v2092
  %v2094 = vcombine.low %v1009, %v1201
  %v2096 = vunpack.c.l.s4 1934713408
  %v2097 = vunpack.c.0.s8 %v2096
  %v2098 = vlaneseq
  %v2099 = vshrl.u32 %v2098, 7
  %v2100 = vsub.s32 %v2097, %v2099
  %v2101 = vrot.slane %v2094, %v2100
  %v2102 = vcombine.low %v1393, %v1585
  %v2104 = vunpack.c.l.s4 1934713408
  %v2105 = vunpack.c.0.s8 %v2104
  %v2106 = vlaneseq
  %v2107 = vshrl.u32 %v2106, 7
  %v2108 = vsub.s32 %v2105, %v2107
  %v2109 = vrot.slane %v2102, %v2108
  %v2110 = vcombine.low %v197, %v449
  %v2112 = vunpack.c.l.s4 1934713408
  %v2113 = vunpack.c.0.s8 %v2112
  %v2114 = vlaneseq
  %v2115 = vshrl.u32 %v2114, 7
  %v2116 = vsub.s32 %v2113, %v2115
  %v2117 = vrot.slane %v2110, %v2116
  %v2118 = vcombine.low %v641, %v833
  %v2120 = vunpack.c.l.s4 1934713408
  %v2121 = vunpack.c.0.s8 %v2120
  %v2122 = vlaneseq
  %v2123 = vshrl.u32 %v2122, 7
  %v2124 = vsub.s32 %v2121, %v2123
  %v2125 = vrot.slane %v2118, %v2124
  %v2126 = vcombine.low %v1025, %v1217
  %v2128 = vunpack.c.l.s4 1934713408
  %v2129 = vunpack.c.0.s8 %v2128
  %v2130 = vlaneseq
  %v2131 = vshrl.u32 %v2130, 7
  %v2132 = vsub.s32 %v2129, %v2131
  %v2133 = vrot.slane %v2126, %v2132
  %v2134 = vcombine.low %v1409, %v1601
  %v2136 = vunpack.c.l.s4 1934713408
  %v2137 = vunpack.c.0.s8 %v2136
  %v2138 = vlaneseq
  %v2139 = vshrl.u32 %v2138, 7
  %v2140 = vsub.s32 %v2137, %v2139
  %v2141 = vrot.slane %v2134, %v2140
  %v2142 = vcombine.low %v231, %v465
  %v2144 = vunpack.c.l.s4 1934713408
  %v2145 = vunpack.c.0.s8 %v2144
  %v2146 = vlaneseq
  %v2147 = vshrl.u32 %v2146, 7
  %v2148 = vsub.s32 %v2145, %v2147
  %v2149 = vrot.slane %v2142, %v2148
  %v2150 = vcombine.low %v657, %v849
  %v2152 = vunpack.c.l.s4 1934713408
  %v2153 = vunpack.c.0.s8 %v2152
  %v2154 = vlaneseq
  %v2155 = vshrl.u32 %v2154, 7
  %v2156 = vsub.s32 %v2153, %v2155
  %v2157 = vrot.slane %v2150, %v2156
  %v2158 = vcombine.low %v1041, %v1233
  %v2160 = vunpack.c.l.s4 1934713408
  %v2161 = vunpack.c.0.s8 %v2160
  %v2162 = vlaneseq
  %v2163 = vshrl.u32 %v2162, 7
  %v2164 = vsub.s32 %v2161, %v2163
  %v2165 = vrot.slane %v2158, %v2164
  %v2166 = vcombine.low %v1425, %v1617
  %v2168 = vunpack.c.l.s4 1934713408
  %v2169 = vunpack.c.0.s8 %v2168
  %v2170 = vlaneseq
  %v2171 = vshrl.u32 %v2170, 7
  %v2172 = vsub.s32 %v2169, %v2171
  %v2173 = vrot.slane %v2166, %v2172
  %v2174 = vcombine.low %v265, %v481
  %v2176 = vunpack.c.l.s4 1934713408
  %v2177 = vunpack.c.0.s8 %v2176
  %v2178 = vlaneseq
  %v2179 = vshrl.u32 %v2178, 7
  %v2180 = vsub.s32 %v2177, %v2179
  %v2181 = vrot.slane %v2174, %v2180
  %v2182 = vcombine.low %v673, %v865
  %v2184 = vunpack.c.l.s4 1934713408
  %v2185 = vunpack.c.0.s8 %v2184
  %v2186 = vlaneseq
  %v2187 = vshrl.u32 %v2186, 7
  %v2188 = vsub.s32 %v2185, %v2187
  %v2189 = vrot.slane %v2182, %v2188
  %v2190 = vcombine.low %v1057, %v1249
  %v2192 = vunpack.c.l.s4 1934713408
  %v2193 = vunpack.c.0.s8 %v2192
  %v2194 = vlaneseq
  %v2195 = vshrl.u32 %v2194, 7
  %v2196 = vsub.s32 %v2193, %v2195
  %v2197 = vrot.slane %v2190, %v2196
  %v2198 = vcombine.low %v1441, %v1633
  %v2200 = vunpack.c.l.s4 1934713408
  %v2201 = vunpack.c.0.s8 %v2200
  %v2202 = vlaneseq
  %v2203 = vshrl.u32 %v2202, 7
  %v2204 = vsub.s32 %v2201, %v2203
  %v2205 = vrot.slane %v2198, %v2204
  %v2206 = vcombine.low %v299, %v497
  %v2208 = vunpack.c.l.s4 1934713408
  %v2209 = vunpack.c.0.s8 %v2208
  %v2210 = vlaneseq
  %v2211 = vshrl.u32 %v2210, 7
  %v2212 = vsub.s32 %v2209, %v2211
  %v2213 = vrot.slane %v2206, %v2212
  %v2214 = vcombine.low %v689, %v881
  %v2216 = vunpack.c.l.s4 1934713408
  %v2217 = vunpack.c.0.s8 %v2216
  %v2218 = vlaneseq
  %v2219 = vshrl.u32 %v2218, 7
  %v2220 = vsub.s32 %v2217, %v2219
  %v2221 = vrot.slane %v2214, %v2220
  %v2222 = vcombine.low %v1073, %v1265
  %v2224 = vunpack.c.l.s4 1934713408
  %v2225 = vunpack.c.0.s8 %v2224
  %v2226 = vlaneseq
  %v2227 = vshrl.u32 %v2226, 7
  %v2228 = vsub.s32 %v2225, %v2227
  %v2229 = vrot.slane %v2222, %v2228
  %v2230 = vcombine.low %v1457, %v1649
  %v2232 = vunpack.c.l.s4 1934713408
  %v2233 = vunpack.c.0.s8 %v2232
  %v2234 = vlaneseq
  %v2235 = vshrl.u32 %v2234, 7
  %v2236 = vsub.s32 %v2233, %v2235
  %v2237 = vrot.slane %v2230, %v2236
  %v2238 = vcombine.low %v60, %v387
  %v2240 = vunpack.c.l.s4 1934713408
  %v2241 = vunpack.c.0.s8 %v2240
  %v2242 = vlaneseq
  %v2243 = vshrl.u32 %v2242, 7
  %v2244 = vsub.s32 %v2241, %v2243
  %v2245 = vrot.slane %v2238, %v2244
  %v2246 = vcombine.low %v579, %v771
  %v2248 = vunpack.c.l.s4 1934713408
  %v2249 = vunpack.c.0.s8 %v2248
  %v2250 = vlaneseq
  %v2251 = vshrl.u32 %v2250, 7
  %v2252 = vsub.s32 %v2249, %v2251
  %v2253 = vrot.slane %v2246, %v2252
  %v2254 = vcombine.low %v963, %v1155
  %v2256 = vunpack.c.l.s4 1934713408
  %v2257 = vunpack.c.0.s8 %v2256
  %v2258 = vlaneseq
  %v2259 = vshrl.u32 %v2258, 7
  %v2260 = vsub.s32 %v2257, %v2259
  %v2261 = vrot.slane %v2254, %v2260
  %v2262 = vcombine.low %v1347, %v1539
  %v2264 = vunpack.c.l.s4 1934713408
  %v2265 = vunpack.c.0.s8 %v2264
  %v2266 = vlaneseq
  %v2267 = vshrl.u32 %v2266, 7
  %v2268 = vsub.s32 %v2265, %v2267
  %v2269 = vrot.slane %v2262, %v2268
  %v2270 = vcombine.low %v94, %v403
  %v2272 = vunpack.c.l.s4 1934713408
  %v2273 = vunpack.c.0.s8 %v2272
  %v2274 = vlaneseq
  %v2275 = vshrl.u32 %v2274, 7
  %v2276 = vsub.s32 %v2273, %v2275
  %v2277 = vrot.slane %v2270, %v2276
  %v2278 = vcombine.low %v595, %v787
  %v2280 = vunpack.c.l.s4 1934713408
  %v2281 = vunpack.c.0.s8 %v2280
  %v2282 = vlaneseq
  %v2283 = vshrl.u32 %v2282, 7
  %v2284 = vsub.s32 %v2281, %v2283
  %v2285 = vrot.slane %v2278, %v2284
  %v2286 = vcombine.low %v979, %v1171
  %v2288 = vunpack.c.l.s4 1934713408
  %v2289 = vunpack.c.0.s8 %v2288
  %v2290 = vlaneseq
  %v2291 = vshrl.u32 %v2290, 7
  %v2292 = vsub.s32 %v2289, %v2291
  %v2293 = vrot.slane %v2286, %v2292
  %v2294 = vcombine.low %v1363, %v1555
  %v2296 = vunpack.c.l.s4 1934713408
  %v2297 = vunpack.c.0.s8 %v2296
  %v2298 = vlaneseq
  %v2299 = vshrl.u32 %v2298, 7
  %v2300 = vsub.s32 %v2297, %v2299
  %v2301 = vrot.slane %v2294, %v2300
  %v2302 = vcombine.low %v128, %v419
  %v2304 = vunpack.c.l.s4 1934713408
  %v2305 = vunpack.c.0.s8 %v2304
  %v2306 = vlaneseq
  %v2307 = vshrl.u32 %v2306, 7
  %v2308 = vsub.s32 %v2305, %v2307
  %v2309 = vrot.slane %v2302, %v2308
  %v2310 = vcombine.low %v611, %v803
  %v2312 = vunpack.c.l.s4 1934713408
  %v2313 = vunpack.c.0.s8 %v2312
  %v2314 = vlaneseq
  %v2315 = vshrl.u32 %v2314, 7
  %v2316 = vsub.s32 %v2313, %v2315
  %v2317 = vrot.slane %v2310, %v2316
  %v2318 = vcombine.low %v995, %v1187
  %v2320 = vunpack.c.l.s4 1934713408
  %v2321 = vunpack.c.0.s8 %v2320
  %v2322 = vlaneseq
  %v2323 = vshrl.u32 %v2322, 7
  %v2324 = vsub.s32 %v2321, %v2323
  %v2325 = vrot.slane %v2318, %v2324
  %v2326 = vcombine.low %v1379, %v1571
  %v2328 = vunpack.c.l.s4 1934713408
  %v2329 = vunpack.c.0.s8 %v2328
  %v2330 = vlaneseq
  %v2331 = vshrl.u32 %v2330, 7
  %v2332 = vsub.s32 %v2329, %v2331
  %v2333 = vrot.slane %v2326, %v2332
  %v2334 = vcombine.low %v162, %v435
  %v2336 = vunpack.c.l.s4 1934713408
  %v2337 = vunpack.c.0.s8 %v2336
  %v2338 = vlaneseq
  %v2339 = vshrl.u32 %v2338, 7
  %v2340 = vsub.s32 %v2337, %v2339
  %v2341 = vrot.slane %v2334, %v2340
  %v2342 = vcombine.low %v627, %v819
  %v2344 = vunpack.c.l.s4 1934713408
  %v2345 = vunpack.c.0.s8 %v2344
  %v2346 = vlaneseq
  %v2347 = vshrl.u32 %v2346, 7
  %v2348 = vsub.s32 %v2345, %v2347
  %v2349 = vrot.slane %v2342, %v2348
  %v2350 = vcombine.low %v1011, %v1203
  %v2352 = vunpack.c.l.s4 1934713408
  %v2353 = vunpack.c.0.s8 %v2352
  %v2354 = vlaneseq
  %v2355 = vshrl.u32 %v2354, 7
  %v2356 = vsub.s32 %v2353, %v2355
  %v2357 = vrot.slane %v2350, %v2356
  %v2358 = vcombine.low %v1395, %v1587
  %v2360 = vunpack.c.l.s4 1934713408
  %v2361 = vunpack.c.0.s8 %v2360
  %v2362 = vlaneseq
  %v2363 = vshrl.u32 %v2362, 7
  %v2364 = vsub.s32 %v2361, %v2363
  %v2365 = vrot.slane %v2358, %v2364
  %v2366 = vcombine.low %v196, %v451
  %v2368 = vunpack.c.l.s4 1934713408
  %v2369 = vunpack.c.0.s8 %v2368
  %v2370 = vlaneseq
  %v2371 = vshrl.u32 %v2370, 7
  %v2372 = vsub.s32 %v2369, %v2371
  %v2373 = vrot.slane %v2366, %v2372
  %v2374 = vcombine.low %v643, %v835
  %v2376 = vunpack.c.l.s4 1934713408
  %v2377 = vunpack.c.0.s8 %v2376
  %v2378 = vlaneseq
  %v2379 = vshrl.u32 %v2378, 7
  %v2380 = vsub.s32 %v2377, %v2379
  %v2381 = vrot.slane %v2374, %v2380
  %v2382 = vcombine.low %v1027, %v1219
  %v2384 = vunpack.c.l.s4 1934713408
  %v2385 = vunpack.c.0.s8 %v2384
  %v2386 = vlaneseq
  %v2387 = vshrl.u32 %v2386, 7
  %v2388 = vsub.s32 %v2385, %v2387
  %v2389 = vrot.slane %v2382, %v2388
  %v2390 = vcombine.low %v1411, %v1603
  %v2392 = vunpack.c.l.s4 1934713408
  %v2393 = vunpack.c.0.s8 %v2392
  %v2394 = vlaneseq
  %v2395 = vshrl.u32 %v2394, 7
  %v2396 = vsub.s32 %v2393, %v2395
  %v2397 = vrot.slane %v2390, %v2396
  %v2398 = vcombine.low %v230, %v467
  %v2400 = vunpack.c.l.s4 1934713408
  %v2401 = vunpack.c.0.s8 %v2400
  %v2402 = vlaneseq
  %v2403 = vshrl.u32 %v2402, 7
  %v2404 = vsub.s32 %v2401, %v2403
  %v2405 = vrot.slane %v2398, %v2404
  %v2406 = vcombine.low %v659, %v851
  %v2408 = vunpack.c.l.s4 1934713408
  %v2409 = vunpack.c.0.s8 %v2408
  %v2410 = vlaneseq
  %v2411 = vshrl.u32 %v2410, 7
  %v2412 = vsub.s32 %v2409, %v2411
  %v2413 = vrot.slane %v2406, %v2412
  %v2414 = vcombine.low %v1043, %v1235
  %v2416 = vunpack.c.l.s4 1934713408
  %v2417 = vunpack.c.0.s8 %v2416
  %v2418 = vlaneseq
  %v2419 = vshrl.u32 %v2418, 7
  %v2420 = vsub.s32 %v2417, %v2419
  %v2421 = vrot.slane %v2414, %v2420
  %v2422 = vcombine.low %v1427, %v1619
  %v2424 = vunpack.c.l.s4 1934713408
  %v2425 = vunpack.c.0.s8 %v2424
  %v2426 = vlaneseq
  %v2427 = vshrl.u32 %v2426, 7
  %v2428 = vsub.s32 %v2425, %v2427
  %v2429 = vrot.slane %v2422, %v2428
  %v2430 = vcombine.low %v264, %v483
  %v2432 = vunpack.c.l.s4 1934713408
  %v2433 = vunpack.c.0.s8 %v2432
  %v2434 = vlaneseq
  %v2435 = vshrl.u32 %v2434, 7
  %v2436 = vsub.s32 %v2433, %v2435
  %v2437 = vrot.slane %v2430, %v2436
  %v2438 = vcombine.low %v675, %v867
  %v2440 = vunpack.c.l.s4 1934713408
  %v2441 = vunpack.c.0.s8 %v2440
  %v2442 = vlaneseq
  %v2443 = vshrl.u32 %v2442, 7
  %v2444 = vsub.s32 %v2441, %v2443
  %v2445 = vrot.slane %v2438, %v2444
  %v2446 = vcombine.low %v1059, %v1251
  %v2448 = vunpack.c.l.s4 1934713408
  %v2449 = vunpack.c.0.s8 %v2448
  %v2450 = vlaneseq
  %v2451 = vshrl.u32 %v2450, 7
  %v2452 = vsub.s32 %v2449, %v2451
  %v2453 = vrot.slane %v2446, %v2452
  %v2454 = vcombine.low %v1443, %v1635
  %v2456 = vunpack.c.l.s4 1934713408
  %v2457 = vunpack.c.0.s8 %v2456
  %v2458 = vlaneseq
  %v2459 = vshrl.u32 %v2458, 7
  %v2460 = vsub.s32 %v2457, %v2459
  %v2461 = vrot.slane %v2454, %v2460
  %v2462 = vcombine.low %v298, %v499
  %v2464 = vunpack.c.l.s4 1934713408
  %v2465 = vunpack.c.0.s8 %v2464
  %v2466 = vlaneseq
  %v2467 = vshrl.u32 %v2466, 7
  %v2468 = vsub.s32 %v2465, %v2467
  %v2469 = vrot.slane %v2462, %v2468
  %v2470 = vcombine.low %v691, %v883
  %v2472 = vunpack.c.l.s4 1934713408
  %v2473 = vunpack.c.0.s8 %v2472
  %v2474 = vlaneseq
  %v2475 = vshrl.u32 %v2474, 7
  %v2476 = vsub.s32 %v2473, %v2475
  %v2477 = vrot.slane %v2470, %v2476
  %v2478 = vcombine.low %v1075, %v1267
  %v2480 = vunpack.c.l.s4 1934713408
  %v2481 = vunpack.c.0.s8 %v2480
  %v2482 = vlaneseq
  %v2483 = vshrl.u32 %v2482, 7
  %v2484 = vsub.s32 %v2481, %v2483
  %v2485 = vrot.slane %v2478, %v2484
  %v2486 = vcombine.low %v1459, %v1651
  %v2488 = vunpack.c.l.s4 1934713408
  %v2489 = vunpack.c.0.s8 %v2488
  %v2490 = vlaneseq
  %v2491 = vshrl.u32 %v2490, 7
  %v2492 = vsub.s32 %v2489, %v2491
  %v2493 = vrot.slane %v2486, %v2492
  %v2494 = vcombine.low %v62, %v389
  %v2496 = vunpack.c.l.s4 1934713408
  %v2497 = vunpack.c.0.s8 %v2496
  %v2498 = vlaneseq
  %v2499 = vshrl.u32 %v2498, 7
  %v2500 = vsub.s32 %v2497, %v2499
  %v2501 = vrot.slane %v2494, %v2500
  %v2502 = vcombine.low %v581, %v773
  %v2504 = vunpack.c.l.s4 1934713408
  %v2505 = vunpack.c.0.s8 %v2504
  %v2506 = vlaneseq
  %v2507 = vshrl.u32 %v2506, 7
  %v2508 = vsub.s32 %v2505, %v2507
  %v2509 = vrot.slane %v2502, %v2508
  %v2510 = vcombine.low %v965, %v1157
  %v2512 = vunpack.c.l.s4 1934713408
  %v2513 = vunpack.c.0.s8 %v2512
  %v2514 = vlaneseq
  %v2515 = vshrl.u32 %v2514, 7
  %v2516 = vsub.s32 %v2513, %v2515
  %v2517 = vrot.slane %v2510, %v2516
  %v2518 = vcombine.low %v1349, %v1541
  %v2520 = vunpack.c.l.s4 1934713408
  %v2521 = vunpack.c.0.s8 %v2520
  %v2522 = vlaneseq
  %v2523 = vshrl.u32 %v2522, 7
  %v2524 = vsub.s32 %v2521, %v2523
  %v2525 = vrot.slane %v2518, %v2524
  %v2526 = vcombine.low %v96, %v405
  %v2528 = vunpack.c.l.s4 1934713408
  %v2529 = vunpack.c.0.s8 %v2528
  %v2530 = vlaneseq
  %v2531 = vshrl.u32 %v2530, 7
  %v2532 = vsub.s32 %v2529, %v2531
  %v2533 = vrot.slane %v2526, %v2532
  %v2534 = vcombine.low %v597, %v789
  %v2536 = vunpack.c.l.s4 1934713408
  %v2537 = vunpack.c.0.s8 %v2536
  %v2538 = vlaneseq
  %v2539 = vshrl.u32 %v2538, 7
  %v2540 = vsub.s32 %v2537, %v2539
  %v2541 = vrot.slane %v2534, %v2540
  %v2542 = vcombine.low %v981, %v1173
  %v2544 = vunpack.c.l.s4 1934713408
  %v2545 = vunpack.c.0.s8 %v2544
  %v2546 = vlaneseq
  %v2547 = vshrl.u32 %v2546, 7
  %v2548 = vsub.s32 %v2545, %v2547
  %v2549 = vrot.slane %v2542, %v2548
  %v2550 = vcombine.low %v1365, %v1557
  %v2552 = vunpack.c.l.s4 1934713408
  %v2553 = vunpack.c.0.s8 %v2552
  %v2554 = vlaneseq
  %v2555 = vshrl.u32 %v2554, 7
  %v2556 = vsub.s32 %v2553, %v2555
  %v2557 = vrot.slane %v2550, %v2556
  %v2558 = vcombine.low %v130, %v421
  %v2560 = vunpack.c.l.s4 1934713408
  %v2561 = vunpack.c.0.s8 %v2560
  %v2562 = vlaneseq
  %v2563 = vshrl.u32 %v2562, 7
  %v2564 = vsub.s32 %v2561, %v2563
  %v2565 = vrot.slane %v2558, %v2564
  %v2566 = vcombine.low %v613, %v805
  %v2568 = vunpack.c.l.s4 1934713408
  %v2569 = vunpack.c.0.s8 %v2568
  %v2570 = vlaneseq
  %v2571 = vshrl.u32 %v2570, 7
  %v2572 = vsub.s32 %v2569, %v2571
  %v2573 = vrot.slane %v2566, %v2572
  %v2574 = vcombine.low %v997, %v1189
  %v2576 = vunpack.c.l.s4 1934713408
  %v2577 = vunpack.c.0.s8 %v2576
  %v2578 = vlaneseq
  %v2579 = vshrl.u32 %v2578, 7
  %v2580 = vsub.s32 %v2577, %v2579
  %v2581 = vrot.slane %v2574, %v2580
  %v2582 = vcombine.low %v1381, %v1573
  %v2584 = vunpack.c.l.s4 1934713408
  %v2585 = vunpack.c.0.s8 %v2584
  %v2586 = vlaneseq
  %v2587 = vshrl.u32 %v2586, 7
  %v2588 = vsub.s32 %v2585, %v2587
  %v2589 = vrot.slane %v2582, %v2588
  %v2590 = vcombine.low %v164, %v437
  %v2592 = vunpack.c.l.s4 1934713408
  %v2593 = vunpack.c.0.s8 %v2592
  %v2594 = vlaneseq
  %v2595 = vshrl.u32 %v2594, 7
  %v2596 = vsub.s32 %v2593, %v2595
  %v2597 = vrot.slane %v2590, %v2596
  %v2598 = vcombine.low %v629, %v821
  %v2600 = vunpack.c.l.s4 1934713408
  %v2601 = vunpack.c.0.s8 %v2600
  %v2602 = vlaneseq
  %v2603 = vshrl.u32 %v2602, 7
  %v2604 = vsub.s32 %v2601, %v2603
  %v2605 = vrot.slane %v2598, %v2604
  %v2606 = vcombine.low %v1013, %v1205
  %v2608 = vunpack.c.l.s4 1934713408
  %v2609 = vunpack.c.0.s8 %v2608
  %v2610 = vlaneseq
  %v2611 = vshrl.u32 %v2610, 7
  %v2612 = vsub.s32 %v2609, %v2611
  %v2613 = vrot.slane %v2606, %v2612
  %v2614 = vcombine.low %v1397, %v1589
  %v2616 = vunpack.c.l.s4 1934713408
  %v2617 = vunpack.c.0.s8 %v2616
  %v2618 = vlaneseq
  %v2619 = vshrl.u32 %v2618, 7
  %v2620 = vsub.s32 %v2617, %v2619
  %v2621 = vrot.slane %v2614, %v2620
  %v2622 = vcombine.low %v198, %v453
  %v2624 = vunpack.c.l.s4 1934713408
  %v2625 = vunpack.c.0.s8 %v2624
  %v2626 = vlaneseq
  %v2627 = vshrl.u32 %v2626, 7
  %v2628 = vsub.s32 %v2625, %v2627
  %v2629 = vrot.slane %v2622, %v2628
  %v2630 = vcombine.low %v645, %v837
  %v2632 = vunpack.c.l.s4 1934713408
  %v2633 = vunpack.c.0.s8 %v2632
  %v2634 = vlaneseq
  %v2635 = vshrl.u32 %v2634, 7
  %v2636 = vsub.s32 %v2633, %v2635
  %v2637 = vrot.slane %v2630, %v2636
  %v2638 = vcombine.low %v1029, %v1221
  %v2640 = vunpack.c.l.s4 1934713408
  %v2641 = vunpack.c.0.s8 %v2640
  %v2642 = vlaneseq
  %v2643 = vshrl.u32 %v2642, 7
  %v2644 = vsub.s32 %v2641, %v2643
  %v2645 = vrot.slane %v2638, %v2644
  %v2646 = vcombine.low %v1413, %v1605
  %v2648 = vunpack.c.l.s4 1934713408
  %v2649 = vunpack.c.0.s8 %v2648
  %v2650 = vlaneseq
  %v2651 = vshrl.u32 %v2650, 7
  %v2652 = vsub.s32 %v2649, %v2651
  %v2653 = vrot.slane %v2646, %v2652
  %v2654 = vcombine.low %v232, %v469
  %v2656 = vunpack.c.l.s4 1934713408
  %v2657 = vunpack.c.0.s8 %v2656
  %v2658 = vlaneseq
  %v2659 = vshrl.u32 %v2658, 7
  %v2660 = vsub.s32 %v2657, %v2659
  %v2661 = vrot.slane %v2654, %v2660
  %v2662 = vcombine.low %v661, %v853
  %v2664 = vunpack.c.l.s4 1934713408
  %v2665 = vunpack.c.0.s8 %v2664
  %v2666 = vlaneseq
  %v2667 = vshrl.u32 %v2666, 7
  %v2668 = vsub.s32 %v2665, %v2667
  %v2669 = vrot.slane %v2662, %v2668
  %v2670 = vcombine.low %v1045, %v1237
  %v2672 = vunpack.c.l.s4 1934713408
  %v2673 = vunpack.c.0.s8 %v2672
  %v2674 = vlaneseq
  %v2675 = vshrl.u32 %v2674, 7
  %v2676 = vsub.s32 %v2673, %v2675
  %v2677 = vrot.slane %v2670, %v2676
  %v2678 = vcombine.low %v1429, %v1621
  %v2680 = vunpack.c.l.s4 1934713408
  %v2681 = vunpack.c.0.s8 %v2680
  %v2682 = vlaneseq
  %v2683 = vshrl.u32 %v2682, 7
  %v2684 = vsub.s32 %v2681, %v2683
  %v2685 = vrot.slane %v2678, %v2684
  %v2686 = vcombine.low %v266, %v485
  %v2688 = vunpack.c.l.s4 1934713408
  %v2689 = vunpack.c.0.s8 %v2688
  %v2690 = vlaneseq
  %v2691 = vshrl.u32 %v2690, 7
  %v2692 = vsub.s32 %v2689, %v2691
  %v2693 = vrot.slane %v2686, %v2692
  %v2694 = vcombine.low %v677, %v869
  %v2696 = vunpack.c.l.s4 1934713408
  %v2697 = vunpack.c.0.s8 %v2696
  %v2698 = vlaneseq
  %v2699 = vshrl.u32 %v2698, 7
  %v2700 = vsub.s32 %v2697, %v2699
  %v2701 = vrot.slane %v2694, %v2700
  %v2702 = vcombine.low %v1061, %v1253
  %v2704 = vunpack.c.l.s4 1934713408
  %v2705 = vunpack.c.0.s8 %v2704
  %v2706 = vlaneseq
  %v2707 = vshrl.u32 %v2706, 7
  %v2708 = vsub.s32 %v2705, %v2707
  %v2709 = vrot.slane %v2702, %v2708
  %v2710 = vcombine.low %v1445, %v1637
  %v2712 = vunpack.c.l.s4 1934713408
  %v2713 = vunpack.c.0.s8 %v2712
  %v2714 = vlaneseq
  %v2715 = vshrl.u32 %v2714, 7
  %v2716 = vsub.s32 %v2713, %v2715
  %v2717 = vrot.slane %v2710, %v2716
  %v2718 = vcombine.low %v300, %v501
  %v2720 = vunpack.c.l.s4 1934713408
  %v2721 = vunpack.c.0.s8 %v2720
  %v2722 = vlaneseq
  %v2723 = vshrl.u32 %v2722, 7
  %v2724 = vsub.s32 %v2721, %v2723
  %v2725 = vrot.slane %v2718, %v2724
  %v2726 = vcombine.low %v693, %v885
  %v2728 = vunpack.c.l.s4 1934713408
  %v2729 = vunpack.c.0.s8 %v2728
  %v2730 = vlaneseq
  %v2731 = vshrl.u32 %v2730, 7
  %v2732 = vsub.s32 %v2729, %v2731
  %v2733 = vrot.slane %v2726, %v2732
  %v2734 = vcombine.low %v1077, %v1269
  %v2736 = vunpack.c.l.s4 1934713408
  %v2737 = vunpack.c.0.s8 %v2736
  %v2738 = vlaneseq
  %v2739 = vshrl.u32 %v2738, 7
  %v2740 = vsub.s32 %v2737, %v2739
  %v2741 = vrot.slane %v2734, %v2740
  %v2742 = vcombine.low %v1461, %v1653
  %v2744 = vunpack.c.l.s4 1934713408
  %v2745 = vunpack.c.0.s8 %v2744
  %v2746 = vlaneseq
  %v2747 = vshrl.u32 %v2746, 7
  %v2748 = vsub.s32 %v2745, %v2747
  %v2749 = vrot.slane %v2742, %v2748
  %v2750 = vcombine.low %v70, %v391
  %v2752 = vunpack.c.l.s4 1934713408
  %v2753 = vunpack.c.0.s8 %v2752
  %v2754 = vlaneseq
  %v2755 = vshrl.u32 %v2754, 7
  %v2756 = vsub.s32 %v2753, %v2755
  %v2757 = vrot.slane %v2750, %v2756
  %v2758 = vcombine.low %v583, %v775
  %v2760 = vunpack.c.l.s4 1934713408
  %v2761 = vunpack.c.0.s8 %v2760
  %v2762 = vlaneseq
  %v2763 = vshrl.u32 %v2762, 7
  %v2764 = vsub.s32 %v2761, %v2763
  %v2765 = vrot.slane %v2758, %v2764
  %v2766 = vcombine.low %v967, %v1159
  %v2768 = vunpack.c.l.s4 1934713408
  %v2769 = vunpack.c.0.s8 %v2768
  %v2770 = vlaneseq
  %v2771 = vshrl.u32 %v2770, 7
  %v2772 = vsub.s32 %v2769, %v2771
  %v2773 = vrot.slane %v2766, %v2772
  %v2774 = vcombine.low %v1351, %v1543
  %v2776 = vunpack.c.l.s4 1934713408
  %v2777 = vunpack.c.0.s8 %v2776
  %v2778 = vlaneseq
  %v2779 = vshrl.u32 %v2778, 7
  %v2780 = vsub.s32 %v2777, %v2779
  %v2781 = vrot.slane %v2774, %v2780
  %v2782 = vcombine.low %v104, %v407
  %v2784 = vunpack.c.l.s4 1934713408
  %v2785 = vunpack.c.0.s8 %v2784
  %v2786 = vlaneseq
  %v2787 = vshrl.u32 %v2786, 7
  %v2788 = vsub.s32 %v2785, %v2787
  %v2789 = vrot.slane %v2782, %v2788
  %v2790 = vcombine.low %v599, %v791
  %v2792 = vunpack.c.l.s4 1934713408
  %v2793 = vunpack.c.0.s8 %v2792
  %v2794 = vlaneseq
  %v2795 = vshrl.u32 %v2794, 7
  %v2796 = vsub.s32 %v2793, %v2795
  %v2797 = vrot.slane %v2790, %v2796
  %v2798 = vcombine.low %v983, %v1175
  %v2800 = vunpack.c.l.s4 1934713408
  %v2801 = vunpack.c.0.s8 %v2800
  %v2802 = vlaneseq
  %v2803 = vshrl.u32 %v2802, 7
  %v2804 = vsub.s32 %v2801, %v2803
  %v2805 = vrot.slane %v2798, %v2804
  %v2806 = vcombine.low %v1367, %v1559
  %v2808 = vunpack.c.l.s4 1934713408
  %v2809 = vunpack.c.0.s8 %v2808
  %v2810 = vlaneseq
  %v2811 = vshrl.u32 %v2810, 7
  %v2812 = vsub.s32 %v2809, %v2811
  %v2813 = vrot.slane %v2806, %v2812
  %v2814 = vcombine.low %v138, %v423
  %v2816 = vunpack.c.l.s4 1934713408
  %v2817 = vunpack.c.0.s8 %v2816
  %v2818 = vlaneseq
  %v2819 = vshrl.u32 %v2818, 7
  %v2820 = vsub.s32 %v2817, %v2819
  %v2821 = vrot.slane %v2814, %v2820
  %v2822 = vcombine.low %v615, %v807
  %v2824 = vunpack.c.l.s4 1934713408
  %v2825 = vunpack.c.0.s8 %v2824
  %v2826 = vlaneseq
  %v2827 = vshrl.u32 %v2826, 7
  %v2828 = vsub.s32 %v2825, %v2827
  %v2829 = vrot.slane %v2822, %v2828
  %v2830 = vcombine.low %v999, %v1191
  %v2832 = vunpack.c.l.s4 1934713408
  %v2833 = vunpack.c.0.s8 %v2832
  %v2834 = vlaneseq
  %v2835 = vshrl.u32 %v2834, 7
  %v2836 = vsub.s32 %v2833, %v2835
  %v2837 = vrot.slane %v2830, %v2836
  %v2838 = vcombine.low %v1383, %v1575
  %v2840 = vunpack.c.l.s4 1934713408
  %v2841 = vunpack.c.0.s8 %v2840
  %v2842 = vlaneseq
  %v2843 = vshrl.u32 %v2842, 7
  %v2844 = vsub.s32 %v2841, %v2843
  %v2845 = vrot.slane %v2838, %v2844
  %v2846 = vcombine.low %v172, %v439
  %v2848 = vunpack.c.l.s4 1934713408
  %v2849 = vunpack.c.0.s8 %v2848
  %v2850 = vlaneseq
  %v2851 = vshrl.u32 %v2850, 7
  %v2852 = vsub.s32 %v2849, %v2851
  %v2853 = vrot.slane %v2846, %v2852
  %v2854 = vcombine.low %v631, %v823
  %v2856 = vunpack.c.l.s4 1934713408
  %v2857 = vunpack.c.0.s8 %v2856
  %v2858 = vlaneseq
  %v2859 = vshrl.u32 %v2858, 7
  %v2860 = vsub.s32 %v2857, %v2859
  %v2861 = vrot.slane %v2854, %v2860
  %v2862 = vcombine.low %v1015, %v1207
  %v2864 = vunpack.c.l.s4 1934713408
  %v2865 = vunpack.c.0.s8 %v2864
  %v2866 = vlaneseq
  %v2867 = vshrl.u32 %v2866, 7
  %v2868 = vsub.s32 %v2865, %v2867
  %v2869 = vrot.slane %v2862, %v2868
  %v2870 = vcombine.low %v1399, %v1591
  %v2872 = vunpack.c.l.s4 1934713408
  %v2873 = vunpack.c.0.s8 %v2872
  %v2874 = vlaneseq
  %v2875 = vshrl.u32 %v2874, 7
  %v2876 = vsub.s32 %v2873, %v2875
  %v2877 = vrot.slane %v2870, %v2876
  %v2878 = vcombine.low %v206, %v455
  %v2880 = vunpack.c.l.s4 1934713408
  %v2881 = vunpack.c.0.s8 %v2880
  %v2882 = vlaneseq
  %v2883 = vshrl.u32 %v2882, 7
  %v2884 = vsub.s32 %v2881, %v2883
  %v2885 = vrot.slane %v2878, %v2884
  %v2886 = vcombine.low %v647, %v839
  %v2888 = vunpack.c.l.s4 1934713408
  %v2889 = vunpack.c.0.s8 %v2888
  %v2890 = vlaneseq
  %v2891 = vshrl.u32 %v2890, 7
  %v2892 = vsub.s32 %v2889, %v2891
  %v2893 = vrot.slane %v2886, %v2892
  %v2894 = vcombine.low %v1031, %v1223
  %v2896 = vunpack.c.l.s4 1934713408
  %v2897 = vunpack.c.0.s8 %v2896
  %v2898 = vlaneseq
  %v2899 = vshrl.u32 %v2898, 7
  %v2900 = vsub.s32 %v2897, %v2899
  %v2901 = vrot.slane %v2894, %v2900
  %v2902 = vcombine.low %v1415, %v1607
  %v2904 = vunpack.c.l.s4 1934713408
  %v2905 = vunpack.c.0.s8 %v2904
  %v2906 = vlaneseq
  %v2907 = vshrl.u32 %v2906, 7
  %v2908 = vsub.s32 %v2905, %v2907
  %v2909 = vrot.slane %v2902, %v2908
  %v2910 = vcombine.low %v240, %v471
  %v2912 = vunpack.c.l.s4 1934713408
  %v2913 = vunpack.c.0.s8 %v2912
  %v2914 = vlaneseq
  %v2915 = vshrl.u32 %v2914, 7
  %v2916 = vsub.s32 %v2913, %v2915
  %v2917 = vrot.slane %v2910, %v2916
  %v2918 = vcombine.low %v663, %v855
  %v2920 = vunpack.c.l.s4 1934713408
  %v2921 = vunpack.c.0.s8 %v2920
  %v2922 = vlaneseq
  %v2923 = vshrl.u32 %v2922, 7
  %v2924 = vsub.s32 %v2921, %v2923
  %v2925 = vrot.slane %v2918, %v2924
  %v2926 = vcombine.low %v1047, %v1239
  %v2928 = vunpack.c.l.s4 1934713408
  %v2929 = vunpack.c.0.s8 %v2928
  %v2930 = vlaneseq
  %v2931 = vshrl.u32 %v2930, 7
  %v2932 = vsub.s32 %v2929, %v2931
  %v2933 = vrot.slane %v2926, %v2932
  %v2934 = vcombine.low %v1431, %v1623
  %v2936 = vunpack.c.l.s4 1934713408
  %v2937 = vunpack.c.0.s8 %v2936
  %v2938 = vlaneseq
  %v2939 = vshrl.u32 %v2938, 7
  %v2940 = vsub.s32 %v2937, %v2939
  %v2941 = vrot.slane %v2934, %v2940
  %v2942 = vcombine.low %v274, %v487
  %v2944 = vunpack.c.l.s4 1934713408
  %v2945 = vunpack.c.0.s8 %v2944
  %v2946 = vlaneseq
  %v2947 = vshrl.u32 %v2946, 7
  %v2948 = vsub.s32 %v2945, %v2947
  %v2949 = vrot.slane %v2942, %v2948
  %v2950 = vcombine.low %v679, %v871
  %v2952 = vunpack.c.l.s4 1934713408
  %v2953 = vunpack.c.0.s8 %v2952
  %v2954 = vlaneseq
  %v2955 = vshrl.u32 %v2954, 7
  %v2956 = vsub.s32 %v2953, %v2955
  %v2957 = vrot.slane %v2950, %v2956
  %v2958 = vcombine.low %v1063, %v1255
  %v2960 = vunpack.c.l.s4 1934713408
  %v2961 = vunpack.c.0.s8 %v2960
  %v2962 = vlaneseq
  %v2963 = vshrl.u32 %v2962, 7
  %v2964 = vsub.s32 %v2961, %v2963
  %v2965 = vrot.slane %v2958, %v2964
  %v2966 = vcombine.low %v1447, %v1639
  %v2968 = vunpack.c.l.s4 1934713408
  %v2969 = vunpack.c.0.s8 %v2968
  %v2970 = vlaneseq
  %v2971 = vshrl.u32 %v2970, 7
  %v2972 = vsub.s32 %v2969, %v2971
  %v2973 = vrot.slane %v2966, %v2972
  %v2974 = vcombine.low %v308, %v503
  %v2976 = vunpack.c.l.s4 1934713408
  %v2977 = vunpack.c.0.s8 %v2976
  %v2978 = vlaneseq
  %v2979 = vshrl.u32 %v2978, 7
  %v2980 = vsub.s32 %v2977, %v2979
  %v2981 = vrot.slane %v2974, %v2980
  %v2982 = vcombine.low %v695, %v887
  %v2984 = vunpack.c.l.s4 1934713408
  %v2985 = vunpack.c.0.s8 %v2984
  %v2986 = vlaneseq
  %v2987 = vshrl.u32 %v2986, 7
  %v2988 = vsub.s32 %v2985, %v2987
  %v2989 = vrot.slane %v2982, %v2988
  %v2990 = vcombine.low %v1079, %v1271
  %v2992 = vunpack.c.l.s4 1934713408
  %v2993 = vunpack.c.0.s8 %v2992
  %v2994 = vlaneseq
  %v2995 = vshrl.u32 %v2994, 7
  %v2996 = vsub.s32 %v2993, %v2995
  %v2997 = vrot.slane %v2990, %v2996
  %v2998 = vcombine.low %v1463, %v1655
  %v3000 = vunpack.c.l.s4 1934713408
  %v3001 = vunpack.c.0.s8 %v3000
  %v3002 = vlaneseq
  %v3003 = vshrl.u32 %v3002, 7
  %v3004 = vsub.s32 %v3001, %v3003
  %v3005 = vrot.slane %v2998, %v3004
  %v3006 = vcombine.low %v78, %v393
  %v3008 = vunpack.c.l.s4 1934713408
  %v3009 = vunpack.c.0.s8 %v3008
  %v3010 = vlaneseq
  %v3011 = vshrl.u32 %v3010, 7
  %v3012 = vsub.s32 %v3009, %v3011
  %v3013 = vrot.slane %v3006, %v3012
  %v3014 = vcombine.low %v585, %v777
  %v3016 = vunpack.c.l.s4 1934713408
  %v3017 = vunpack.c.0.s8 %v3016
  %v3018 = vlaneseq
  %v3019 = vshrl.u32 %v3018, 7
  %v3020 = vsub.s32 %v3017, %v3019
  %v3021 = vrot.slane %v3014, %v3020
  %v3022 = vcombine.low %v969, %v1161
  %v3024 = vunpack.c.l.s4 1934713408
  %v3025 = vunpack.c.0.s8 %v3024
  %v3026 = vlaneseq
  %v3027 = vshrl.u32 %v3026, 7
  %v3028 = vsub.s32 %v3025, %v3027
  %v3029 = vrot.slane %v3022, %v3028
  %v3030 = vcombine.low %v1353, %v1545
  %v3032 = vunpack.c.l.s4 1934713408
  %v3033 = vunpack.c.0.s8 %v3032
  %v3034 = vlaneseq
  %v3035 = vshrl.u32 %v3034, 7
  %v3036 = vsub.s32 %v3033, %v3035
  %v3037 = vrot.slane %v3030, %v3036
  %v3038 = vcombine.low %v112, %v409
  %v3040 = vunpack.c.l.s4 1934713408
  %v3041 = vunpack.c.0.s8 %v3040
  %v3042 = vlaneseq
  %v3043 = vshrl.u32 %v3042, 7
  %v3044 = vsub.s32 %v3041, %v3043
  %v3045 = vrot.slane %v3038, %v3044
  %v3046 = vcombine.low %v601, %v793
  %v3048 = vunpack.c.l.s4 1934713408
  %v3049 = vunpack.c.0.s8 %v3048
  %v3050 = vlaneseq
  %v3051 = vshrl.u32 %v3050, 7
  %v3052 = vsub.s32 %v3049, %v3051
  %v3053 = vrot.slane %v3046, %v3052
  %v3054 = vcombine.low %v985, %v1177
  %v3056 = vunpack.c.l.s4 1934713408
  %v3057 = vunpack.c.0.s8 %v3056
  %v3058 = vlaneseq
  %v3059 = vshrl.u32 %v3058, 7
  %v3060 = vsub.s32 %v3057, %v3059
  %v3061 = vrot.slane %v3054, %v3060
  %v3062 = vcombine.low %v1369, %v1561
  %v3064 = vunpack.c.l.s4 1934713408
  %v3065 = vunpack.c.0.s8 %v3064
  %v3066 = vlaneseq
  %v3067 = vshrl.u32 %v3066, 7
  %v3068 = vsub.s32 %v3065, %v3067
  %v3069 = vrot.slane %v3062, %v3068
  %v3070 = vcombine.low %v146, %v425
  %v3072 = vunpack.c.l.s4 1934713408
  %v3073 = vunpack.c.0.s8 %v3072
  %v3074 = vlaneseq
  %v3075 = vshrl.u32 %v3074, 7
  %v3076 = vsub.s32 %v3073, %v3075
  %v3077 = vrot.slane %v3070, %v3076
  %v3078 = vcombine.low %v617, %v809
  %v3080 = vunpack.c.l.s4 1934713408
  %v3081 = vunpack.c.0.s8 %v3080
  %v3082 = vlaneseq
  %v3083 = vshrl.u32 %v3082, 7
  %v3084 = vsub.s32 %v3081, %v3083
  %v3085 = vrot.slane %v3078, %v3084
  %v3086 = vcombine.low %v1001, %v1193
  %v3088 = vunpack.c.l.s4 1934713408
  %v3089 = vunpack.c.0.s8 %v3088
  %v3090 = vlaneseq
  %v3091 = vshrl.u32 %v3090, 7
  %v3092 = vsub.s32 %v3089, %v3091
  %v3093 = vrot.slane %v3086, %v3092
  %v3094 = vcombine.low %v1385, %v1577
  %v3096 = vunpack.c.l.s4 1934713408
  %v3097 = vunpack.c.0.s8 %v3096
  %v3098 = vlaneseq
  %v3099 = vshrl.u32 %v3098, 7
  %v3100 = vsub.s32 %v3097, %v3099
  %v3101 = vrot.slane %v3094, %v3100
  %v3102 = vcombine.low %v180, %v441
  %v3104 = vunpack.c.l.s4 1934713408
  %v3105 = vunpack.c.0.s8 %v3104
  %v3106 = vlaneseq
  %v3107 = vshrl.u32 %v3106, 7
  %v3108 = vsub.s32 %v3105, %v3107
  %v3109 = vrot.slane %v3102, %v3108
  %v3110 = vcombine.low %v633, %v825
  %v3112 = vunpack.c.l.s4 1934713408
  %v3113 = vunpack.c.0.s8 %v3112
  %v3114 = vlaneseq
  %v3115 = vshrl.u32 %v3114, 7
  %v3116 = vsub.s32 %v3113, %v3115
  %v3117 = vrot.slane %v3110, %v3116
  %v3118 = vcombine.low %v1017, %v1209
  %v3120 = vunpack.c.l.s4 1934713408
  %v3121 = vunpack.c.0.s8 %v3120
  %v3122 = vlaneseq
  %v3123 = vshrl.u32 %v3122, 7
  %v3124 = vsub.s32 %v3121, %v3123
  %v3125 = vrot.slane %v3118, %v3124
  %v3126 = vcombine.low %v1401, %v1593
  %v3128 = vunpack.c.l.s4 1934713408
  %v3129 = vunpack.c.0.s8 %v3128
  %v3130 = vlaneseq
  %v3131 = vshrl.u32 %v3130, 7
  %v3132 = vsub.s32 %v3129, %v3131
  %v3133 = vrot.slane %v3126, %v3132
  %v3134 = vcombine.low %v214, %v457
  %v3136 = vunpack.c.l.s4 1934713408
  %v3137 = vunpack.c.0.s8 %v3136
  %v3138 = vlaneseq
  %v3139 = vshrl.u32 %v3138, 7
  %v3140 = vsub.s32 %v3137, %v3139
  %v3141 = vrot.slane %v3134, %v3140
  %v3142 = vcombine.low %v649, %v841
  %v3144 = vunpack.c.l.s4 1934713408
  %v3145 = vunpack.c.0.s8 %v3144
  %v3146 = vlaneseq
  %v3147 = vshrl.u32 %v3146, 7
  %v3148 = vsub.s32 %v3145, %v3147
  %v3149 = vrot.slane %v3142, %v3148
  %v3150 = vcombine.low %v1033, %v1225
  %v3152 = vunpack.c.l.s4 1934713408
  %v3153 = vunpack.c.0.s8 %v3152
  %v3154 = vlaneseq
  %v3155 = vshrl.u32 %v3154, 7
  %v3156 = vsub.s32 %v3153, %v3155
  %v3157 = vrot.slane %v3150, %v3156
  %v3158 = vcombine.low %v1417, %v1609
  %v3160 = vunpack.c.l.s4 1934713408
  %v3161 = vunpack.c.0.s8 %v3160
  %v3162 = vlaneseq
  %v3163 = vshrl.u32 %v3162, 7
  %v3164 = vsub.s32 %v3161, %v3163
  %v3165 = vrot.slane %v3158, %v3164
  %v3166 = vcombine.low %v248, %v473
  %v3168 = vunpack.c.l.s4 1934713408
  %v3169 = vunpack.c.0.s8 %v3168
  %v3170 = vlaneseq
  %v3171 = vshrl.u32 %v3170, 7
  %v3172 = vsub.s32 %v3169, %v3171
  %v3173 = vrot.slane %v3166, %v3172
  %v3174 = vcombine.low %v665, %v857
  %v3176 = vunpack.c.l.s4 1934713408
  %v3177 = vunpack.c.0.s8 %v3176
  %v3178 = vlaneseq
  %v3179 = vshrl.u32 %v3178, 7
  %v3180 = vsub.s32 %v3177, %v3179
  %v3181 = vrot.slane %v3174, %v3180
  %v3182 = vcombine.low %v1049, %v1241
  %v3184 = vunpack.c.l.s4 1934713408
  %v3185 = vunpack.c.0.s8 %v3184
  %v3186 = vlaneseq
  %v3187 = vshrl.u32 %v3186, 7
  %v3188 = vsub.s32 %v3185, %v3187
  %v3189 = vrot.slane %v3182, %v3188
  %v3190 = vcombine.low %v1433, %v1625
  %v3192 = vunpack.c.l.s4 1934713408
  %v3193 = vunpack.c.0.s8 %v3192
  %v3194 = vlaneseq
  %v3195 = vshrl.u32 %v3194, 7
  %v3196 = vsub.s32 %v3193, %v3195
  %v3197 = vrot.slane %v3190, %v3196
  %v3198 = vcombine.low %v282, %v489
  %v3200 = vunpack.c.l.s4 1934713408
  %v3201 = vunpack.c.0.s8 %v3200
  %v3202 = vlaneseq
  %v3203 = vshrl.u32 %v3202, 7
  %v3204 = vsub.s32 %v3201, %v3203
  %v3205 = vrot.slane %v3198, %v3204
  %v3206 = vcombine.low %v681, %v873
  %v3208 = vunpack.c.l.s4 1934713408
  %v3209 = vunpack.c.0.s8 %v3208
  %v3210 = vlaneseq
  %v3211 = vshrl.u32 %v3210, 7
  %v3212 = vsub.s32 %v3209, %v3211
  %v3213 = vrot.slane %v3206, %v3212
  %v3214 = vcombine.low %v1065, %v1257
  %v3216 = vunpack.c.l.s4 1934713408
  %v3217 = vunpack.c.0.s8 %v3216
  %v3218 = vlaneseq
  %v3219 = vshrl.u32 %v3218, 7
  %v3220 = vsub.s32 %v3217, %v3219
  %v3221 = vrot.slane %v3214, %v3220
  %v3222 = vcombine.low %v1449, %v1641
  %v3224 = vunpack.c.l.s4 1934713408
  %v3225 = vunpack.c.0.s8 %v3224
  %v3226 = vlaneseq
  %v3227 = vshrl.u32 %v3226, 7
  %v3228 = vsub.s32 %v3225, %v3227
  %v3229 = vrot.slane %v3222, %v3228
  %v3230 = vcombine.low %v316, %v505
  %v3232 = vunpack.c.l.s4 1934713408
  %v3233 = vunpack.c.0.s8 %v3232
  %v3234 = vlaneseq
  %v3235 = vshrl.u32 %v3234, 7
  %v3236 = vsub.s32 %v3233, %v3235
  %v3237 = vrot.slane %v3230, %v3236
  %v3238 = vcombine.low %v697, %v889
  %v3240 = vunpack.c.l.s4 1934713408
  %v3241 = vunpack.c.0.s8 %v3240
  %v3242 = vlaneseq
  %v3243 = vshrl.u32 %v3242, 7
  %v3244 = vsub.s32 %v3241, %v3243
  %v3245 = vrot.slane %v3238, %v3244
  %v3246 = vcombine.low %v1081, %v1273
  %v3248 = vunpack.c.l.s4 1934713408
  %v3249 = vunpack.c.0.s8 %v3248
  %v3250 = vlaneseq
  %v3251 = vshrl.u32 %v3250, 7
  %v3252 = vsub.s32 %v3249, %v3251
  %v3253 = vrot.slane %v3246, %v3252
  %v3254 = vcombine.low %v1465, %v1657
  %v3256 = vunpack.c.l.s4 1934713408
  %v3257 = vunpack.c.0.s8 %v3256
  %v3258 = vlaneseq
  %v3259 = vshrl.u32 %v3258, 7
  %v3260 = vsub.s32 %v3257, %v3259
  %v3261 = vrot.slane %v3254, %v3260
  %v3262 = vcombine.low %v77, %v395
  %v3264 = vunpack.c.l.s4 1934713408
  %v3265 = vunpack.c.0.s8 %v3264
  %v3266 = vlaneseq
  %v3267 = vshrl.u32 %v3266, 7
  %v3268 = vsub.s32 %v3265, %v3267
  %v3269 = vrot.slane %v3262, %v3268
  %v3270 = vcombine.low %v587, %v779
  %v3272 = vunpack.c.l.s4 1934713408
  %v3273 = vunpack.c.0.s8 %v3272
  %v3274 = vlaneseq
  %v3275 = vshrl.u32 %v3274, 7
  %v3276 = vsub.s32 %v3273, %v3275
  %v3277 = vrot.slane %v3270, %v3276
  %v3278 = vcombine.low %v971, %v1163
  %v3280 = vunpack.c.l.s4 1934713408
  %v3281 = vunpack.c.0.s8 %v3280
  %v3282 = vlaneseq
  %v3283 = vshrl.u32 %v3282, 7
  %v3284 = vsub.s32 %v3281, %v3283
  %v3285 = vrot.slane %v3278, %v3284
  %v3286 = vcombine.low %v1355, %v1547
  %v3288 = vunpack.c.l.s4 1934713408
  %v3289 = vunpack.c.0.s8 %v3288
  %v3290 = vlaneseq
  %v3291 = vshrl.u32 %v3290, 7
  %v3292 = vsub.s32 %v3289, %v3291
  %v3293 = vrot.slane %v3286, %v3292
  %v3294 = vcombine.low %v111, %v411
  %v3296 = vunpack.c.l.s4 1934713408
  %v3297 = vunpack.c.0.s8 %v3296
  %v3298 = vlaneseq
  %v3299 = vshrl.u32 %v3298, 7
  %v3300 = vsub.s32 %v3297, %v3299
  %v3301 = vrot.slane %v3294, %v3300
  %v3302 = vcombine.low %v603, %v795
  %v3304 = vunpack.c.l.s4 1934713408
  %v3305 = vunpack.c.0.s8 %v3304
  %v3306 = vlaneseq
  %v3307 = vshrl.u32 %v3306, 7
  %v3308 = vsub.s32 %v3305, %v3307
  %v3309 = vrot.slane %v3302, %v3308
  %v3310 = vcombine.low %v987, %v1179
  %v3312 = vunpack.c.l.s4 1934713408
  %v3313 = vunpack.c.0.s8 %v3312
  %v3314 = vlaneseq
  %v3315 = vshrl.u32 %v3314, 7
  %v3316 = vsub.s32 %v3313, %v3315
  %v3317 = vrot.slane %v3310, %v3316
  %v3318 = vcombine.low %v1371, %v1563
  %v3320 = vunpack.c.l.s4 1934713408
  %v3321 = vunpack.c.0.s8 %v3320
  %v3322 = vlaneseq
  %v3323 = vshrl.u32 %v3322, 7
  %v3324 = vsub.s32 %v3321, %v3323
  %v3325 = vrot.slane %v3318, %v3324
  %v3326 = vcombine.low %v145, %v427
  %v3328 = vunpack.c.l.s4 1934713408
  %v3329 = vunpack.c.0.s8 %v3328
  %v3330 = vlaneseq
  %v3331 = vshrl.u32 %v3330, 7
  %v3332 = vsub.s32 %v3329, %v3331
  %v3333 = vrot.slane %v3326, %v3332
  %v3334 = vcombine.low %v619, %v811
  %v3336 = vunpack.c.l.s4 1934713408
  %v3337 = vunpack.c.0.s8 %v3336
  %v3338 = vlaneseq
  %v3339 = vshrl.u32 %v3338, 7
  %v3340 = vsub.s32 %v3337, %v3339
  %v3341 = vrot.slane %v3334, %v3340
  %v3342 = vcombine.low %v1003, %v1195
  %v3344 = vunpack.c.l.s4 1934713408
  %v3345 = vunpack.c.0.s8 %v3344
  %v3346 = vlaneseq
  %v3347 = vshrl.u32 %v3346, 7
  %v3348 = vsub.s32 %v3345, %v3347
  %v3349 = vrot.slane %v3342, %v3348
  %v3350 = vcombine.low %v1387, %v1579
  %v3352 = vunpack.c.l.s4 1934713408
  %v3353 = vunpack.c.0.s8 %v3352
  %v3354 = vlaneseq
  %v3355 = vshrl.u32 %v3354, 7
  %v3356 = vsub.s32 %v3353, %v3355
  %v3357 = vrot.slane %v3350, %v3356
  %v3358 = vcombine.low %v179, %v443
  %v3360 = vunpack.c.l.s4 1934713408
  %v3361 = vunpack.c.0.s8 %v3360
  %v3362 = vlaneseq
  %v3363 = vshrl.u32 %v3362, 7
  %v3364 = vsub.s32 %v3361, %v3363
  %v3365 = vrot.slane %v3358, %v3364
  %v3366 = vcombine.low %v635, %v827
  %v3368 = vunpack.c.l.s4 1934713408
  %v3369 = vunpack.c.0.s8 %v3368
  %v3370 = vlaneseq
  %v3371 = vshrl.u32 %v3370, 7
  %v3372 = vsub.s32 %v3369, %v3371
  %v3373 = vrot.slane %v3366, %v3372
  %v3374 = vcombine.low %v1019, %v1211
  %v3376 = vunpack.c.l.s4 1934713408
  %v3377 = vunpack.c.0.s8 %v3376
  %v3378 = vlaneseq
  %v3379 = vshrl.u32 %v3378, 7
  %v3380 = vsub.s32 %v3377, %v3379
  %v3381 = vrot.slane %v3374, %v3380
  %v3382 = vcombine.low %v1403, %v1595
  %v3384 = vunpack.c.l.s4 1934713408
  %v3385 = vunpack.c.0.s8 %v3384
  %v3386 = vlaneseq
  %v3387 = vshrl.u32 %v3386, 7
  %v3388 = vsub.s32 %v3385, %v3387
  %v3389 = vrot.slane %v3382, %v3388
  %v3390 = vcombine.low %v213, %v459
  %v3392 = vunpack.c.l.s4 1934713408
  %v3393 = vunpack.c.0.s8 %v3392
  %v3394 = vlaneseq
  %v3395 = vshrl.u32 %v3394, 7
  %v3396 = vsub.s32 %v3393, %v3395
  %v3397 = vrot.slane %v3390, %v3396
  %v3398 = vcombine.low %v651, %v843
  %v3400 = vunpack.c.l.s4 1934713408
  %v3401 = vunpack.c.0.s8 %v3400
  %v3402 = vlaneseq
  %v3403 = vshrl.u32 %v3402, 7
  %v3404 = vsub.s32 %v3401, %v3403
  %v3405 = vrot.slane %v3398, %v3404
  %v3406 = vcombine.low %v1035, %v1227
  %v3408 = vunpack.c.l.s4 1934713408
  %v3409 = vunpack.c.0.s8 %v3408
  %v3410 = vlaneseq
  %v3411 = vshrl.u32 %v3410, 7
  %v3412 = vsub.s32 %v3409, %v3411
  %v3413 = vrot.slane %v3406, %v3412
  %v3414 = vcombine.low %v1419, %v1611
  %v3416 = vunpack.c.l.s4 1934713408
  %v3417 = vunpack.c.0.s8 %v3416
  %v3418 = vlaneseq
  %v3419 = vshrl.u32 %v3418, 7
  %v3420 = vsub.s32 %v3417, %v3419
  %v3421 = vrot.slane %v3414, %v3420
  %v3422 = vcombine.low %v247, %v475
  %v3424 = vunpack.c.l.s4 1934713408
  %v3425 = vunpack.c.0.s8 %v3424
  %v3426 = vlaneseq
  %v3427 = vshrl.u32 %v3426, 7
  %v3428 = vsub.s32 %v3425, %v3427
  %v3429 = vrot.slane %v3422, %v3428
  %v3430 = vcombine.low %v667, %v859
  %v3432 = vunpack.c.l.s4 1934713408
  %v3433 = vunpack.c.0.s8 %v3432
  %v3434 = vlaneseq
  %v3435 = vshrl.u32 %v3434, 7
  %v3436 = vsub.s32 %v3433, %v3435
  %v3437 = vrot.slane %v3430, %v3436
  %v3438 = vcombine.low %v1051, %v1243
  %v3440 = vunpack.c.l.s4 1934713408
  %v3441 = vunpack.c.0.s8 %v3440
  %v3442 = vlaneseq
  %v3443 = vshrl.u32 %v3442, 7
  %v3444 = vsub.s32 %v3441, %v3443
  %v3445 = vrot.slane %v3438, %v3444
  %v3446 = vcombine.low %v1435, %v1627
  %v3448 = vunpack.c.l.s4 1934713408
  %v3449 = vunpack.c.0.s8 %v3448
  %v3450 = vlaneseq
  %v3451 = vshrl.u32 %v3450, 7
  %v3452 = vsub.s32 %v3449, %v3451
  %v3453 = vrot.slane %v3446, %v3452
  %v3454 = vcombine.low %v281, %v491
  %v3456 = vunpack.c.l.s4 1934713408
  %v3457 = vunpack.c.0.s8 %v3456
  %v3458 = vlaneseq
  %v3459 = vshrl.u32 %v3458, 7
  %v3460 = vsub.s32 %v3457, %v3459
  %v3461 = vrot.slane %v3454, %v3460
  %v3462 = vcombine.low %v683, %v875
  %v3464 = vunpack.c.l.s4 1934713408
  %v3465 = vunpack.c.0.s8 %v3464
  %v3466 = vlaneseq
  %v3467 = vshrl.u32 %v3466, 7
  %v3468 = vsub.s32 %v3465, %v3467
  %v3469 = vrot.slane %v3462, %v3468
  %v3470 = vcombine.low %v1067, %v1259
  %v3472 = vunpack.c.l.s4 1934713408
  %v3473 = vunpack.c.0.s8 %v3472
  %v3474 = vlaneseq
  %v3475 = vshrl.u32 %v3474, 7
  %v3476 = vsub.s32 %v3473, %v3475
  %v3477 = vrot.slane %v3470, %v3476
  %v3478 = vcombine.low %v1451, %v1643
  %v3480 = vunpack.c.l.s4 1934713408
  %v3481 = vunpack.c.0.s8 %v3480
  %v3482 = vlaneseq
  %v3483 = vshrl.u32 %v3482, 7
  %v3484 = vsub.s32 %v3481, %v3483
  %v3485 = vrot.slane %v3478, %v3484
  %v3486 = vcombine.low %v315, %v507
  %v3488 = vunpack.c.l.s4 1934713408
  %v3489 = vunpack.c.0.s8 %v3488
  %v3490 = vlaneseq
  %v3491 = vshrl.u32 %v3490, 7
  %v3492 = vsub.s32 %v3489, %v3491
  %v3493 = vrot.slane %v3486, %v3492
  %v3494 = vcombine.low %v699, %v891
  %v3496 = vunpack.c.l.s4 1934713408
  %v3497 = vunpack.c.0.s8 %v3496
  %v3498 = vlaneseq
  %v3499 = vshrl.u32 %v3498, 7
  %v3500 = vsub.s32 %v3497, %v3499
  %v3501 = vrot.slane %v3494, %v3500
  %v3502 = vcombine.low %v1083, %v1275
  %v3504 = vunpack.c.l.s4 1934713408
  %v3505 = vunpack.c.0.s8 %v3504
  %v3506 = vlaneseq
  %v3507 = vshrl.u32 %v3506, 7
  %v3508 = vsub.s32 %v3505, %v3507
  %v3509 = vrot.slane %v3502, %v3508
  %v3510 = vcombine.low %v1467, %v1659
  %v3512 = vunpack.c.l.s4 1934713408
  %v3513 = vunpack.c.0.s8 %v3512
  %v3514 = vlaneseq
  %v3515 = vshrl.u32 %v3514, 7
  %v3516 = vsub.s32 %v3513, %v3515
  %v3517 = vrot.slane %v3510, %v3516
  %v3518 = vcombine.low %v79, %v397
  %v3520 = vunpack.c.l.s4 1934713408
  %v3521 = vunpack.c.0.s8 %v3520
  %v3522 = vlaneseq
  %v3523 = vshrl.u32 %v3522, 7
  %v3524 = vsub.s32 %v3521, %v3523
  %v3525 = vrot.slane %v3518, %v3524
  %v3526 = vcombine.low %v589, %v781
  %v3528 = vunpack.c.l.s4 1934713408
  %v3529 = vunpack.c.0.s8 %v3528
  %v3530 = vlaneseq
  %v3531 = vshrl.u32 %v3530, 7
  %v3532 = vsub.s32 %v3529, %v3531
  %v3533 = vrot.slane %v3526, %v3532
  %v3534 = vcombine.low %v973, %v1165
  %v3536 = vunpack.c.l.s4 1934713408
  %v3537 = vunpack.c.0.s8 %v3536
  %v3538 = vlaneseq
  %v3539 = vshrl.u32 %v3538, 7
  %v3540 = vsub.s32 %v3537, %v3539
  %v3541 = vrot.slane %v3534, %v3540
  %v3542 = vcombine.low %v1357, %v1549
  %v3544 = vunpack.c.l.s4 1934713408
  %v3545 = vunpack.c.0.s8 %v3544
  %v3546 = vlaneseq
  %v3547 = vshrl.u32 %v3546, 7
  %v3548 = vsub.s32 %v3545, %v3547
  %v3549 = vrot.slane %v3542, %v3548
  %v3550 = vcombine.low %v113, %v413
  %v3552 = vunpack.c.l.s4 1934713408
  %v3553 = vunpack.c.0.s8 %v3552
  %v3554 = vlaneseq
  %v3555 = vshrl.u32 %v3554, 7
  %v3556 = vsub.s32 %v3553, %v3555
  %v3557 = vrot.slane %v3550, %v3556
  %v3558 = vcombine.low %v605, %v797
  %v3560 = vunpack.c.l.s4 1934713408
  %v3561 = vunpack.c.0.s8 %v3560
  %v3562 = vlaneseq
  %v3563 = vshrl.u32 %v3562, 7
  %v3564 = vsub.s32 %v3561, %v3563
  %v3565 = vrot.slane %v3558, %v3564
  %v3566 = vcombine.low %v989, %v1181
  %v3568 = vunpack.c.l.s4 1934713408
  %v3569 = vunpack.c.0.s8 %v3568
  %v3570 = vlaneseq
  %v3571 = vshrl.u32 %v3570, 7
  %v3572 = vsub.s32 %v3569, %v3571
  %v3573 = vrot.slane %v3566, %v3572
  %v3574 = vcombine.low %v1373, %v1565
  %v3576 = vunpack.c.l.s4 1934713408
  %v3577 = vunpack.c.0.s8 %v3576
  %v3578 = vlaneseq
  %v3579 = vshrl.u32 %v3578, 7
  %v3580 = vsub.s32 %v3577, %v3579
  %v3581 = vrot.slane %v3574, %v3580
  %v3582 = vcombine.low %v147, %v429
  %v3584 = vunpack.c.l.s4 1934713408
  %v3585 = vunpack.c.0.s8 %v3584
  %v3586 = vlaneseq
  %v3587 = vshrl.u32 %v3586, 7
  %v3588 = vsub.s32 %v3585, %v3587
  %v3589 = vrot.slane %v3582, %v3588
  %v3590 = vcombine.low %v621, %v813
  %v3592 = vunpack.c.l.s4 1934713408
  %v3593 = vunpack.c.0.s8 %v3592
  %v3594 = vlaneseq
  %v3595 = vshrl.u32 %v3594, 7
  %v3596 = vsub.s32 %v3593, %v3595
  %v3597 = vrot.slane %v3590, %v3596
  %v3598 = vcombine.low %v1005, %v1197
  %v3600 = vunpack.c.l.s4 1934713408
  %v3601 = vunpack.c.0.s8 %v3600
  %v3602 = vlaneseq
  %v3603 = vshrl.u32 %v3602, 7
  %v3604 = vsub.s32 %v3601, %v3603
  %v3605 = vrot.slane %v3598, %v3604
  %v3606 = vcombine.low %v1389, %v1581
  %v3608 = vunpack.c.l.s4 1934713408
  %v3609 = vunpack.c.0.s8 %v3608
  %v3610 = vlaneseq
  %v3611 = vshrl.u32 %v3610, 7
  %v3612 = vsub.s32 %v3609, %v3611
  %v3613 = vrot.slane %v3606, %v3612
  %v3614 = vcombine.low %v181, %v445
  %v3616 = vunpack.c.l.s4 1934713408
  %v3617 = vunpack.c.0.s8 %v3616
  %v3618 = vlaneseq
  %v3619 = vshrl.u32 %v3618, 7
  %v3620 = vsub.s32 %v3617, %v3619
  %v3621 = vrot.slane %v3614, %v3620
  %v3622 = vcombine.low %v637, %v829
  %v3624 = vunpack.c.l.s4 1934713408
  %v3625 = vunpack.c.0.s8 %v3624
  %v3626 = vlaneseq
  %v3627 = vshrl.u32 %v3626, 7
  %v3628 = vsub.s32 %v3625, %v3627
  %v3629 = vrot.slane %v3622, %v3628
  %v3630 = vcombine.low %v1021, %v1213
  %v3632 = vunpack.c.l.s4 1934713408
  %v3633 = vunpack.c.0.s8 %v3632
  %v3634 = vlaneseq
  %v3635 = vshrl.u32 %v3634, 7
  %v3636 = vsub.s32 %v3633, %v3635
  %v3637 = vrot.slane %v3630, %v3636
  %v3638 = vcombine.low %v1405, %v1597
  %v3640 = vunpack.c.l.s4 1934713408
  %v3641 = vunpack.c.0.s8 %v3640
  %v3642 = vlaneseq
  %v3643 = vshrl.u32 %v3642, 7
  %v3644 = vsub.s32 %v3641, %v3643
  %v3645 = vrot.slane %v3638, %v3644
  %v3646 = vcombine.low %v215, %v461
  %v3648 = vunpack.c.l.s4 1934713408
  %v3649 = vunpack.c.0.s8 %v3648
  %v3650 = vlaneseq
  %v3651 = vshrl.u32 %v3650, 7
  %v3652 = vsub.s32 %v3649, %v3651
  %v3653 = vrot.slane %v3646, %v3652
  %v3654 = vcombine.low %v653, %v845
  %v3656 = vunpack.c.l.s4 1934713408
  %v3657 = vunpack.c.0.s8 %v3656
  %v3658 = vlaneseq
  %v3659 = vshrl.u32 %v3658, 7
  %v3660 = vsub.s32 %v3657, %v3659
  %v3661 = vrot.slane %v3654, %v3660
  %v3662 = vcombine.low %v1037, %v1229
  %v3664 = vunpack.c.l.s4 1934713408
  %v3665 = vunpack.c.0.s8 %v3664
  %v3666 = vlaneseq
  %v3667 = vshrl.u32 %v3666, 7
  %v3668 = vsub.s32 %v3665, %v3667
  %v3669 = vrot.slane %v3662, %v3668
  %v3670 = vcombine.low %v1421, %v1613
  %v3672 = vunpack.c.l.s4 1934713408
  %v3673 = vunpack.c.0.s8 %v3672
  %v3674 = vlaneseq
  %v3675 = vshrl.u32 %v3674, 7
  %v3676 = vsub.s32 %v3673, %v3675
  %v3677 = vrot.slane %v3670, %v3676
  %v3678 = vcombine.low %v249, %v477
  %v3680 = vunpack.c.l.s4 1934713408
  %v3681 = vunpack.c.0.s8 %v3680
  %v3682 = vlaneseq
  %v3683 = vshrl.u32 %v3682, 7
  %v3684 = vsub.s32 %v3681, %v3683
  %v3685 = vrot.slane %v3678, %v3684
  %v3686 = vcombine.low %v669, %v861
  %v3688 = vunpack.c.l.s4 1934713408
  %v3689 = vunpack.c.0.s8 %v3688
  %v3690 = vlaneseq
  %v3691 = vshrl.u32 %v3690, 7
  %v3692 = vsub.s32 %v3689, %v3691
  %v3693 = vrot.slane %v3686, %v3692
  %v3694 = vcombine.low %v1053, %v1245
  %v3696 = vunpack.c.l.s4 1934713408
  %v3697 = vunpack.c.0.s8 %v3696
  %v3698 = vlaneseq
  %v3699 = vshrl.u32 %v3698, 7
  %v3700 = vsub.s32 %v3697, %v3699
  %v3701 = vrot.slane %v3694, %v3700
  %v3702 = vcombine.low %v1437, %v1629
  %v3704 = vunpack.c.l.s4 1934713408
  %v3705 = vunpack.c.0.s8 %v3704
  %v3706 = vlaneseq
  %v3707 = vshrl.u32 %v3706, 7
  %v3708 = vsub.s32 %v3705, %v3707
  %v3709 = vrot.slane %v3702, %v3708
  %v3710 = vcombine.low %v283, %v493
  %v3712 = vunpack.c.l.s4 1934713408
  %v3713 = vunpack.c.0.s8 %v3712
  %v3714 = vlaneseq
  %v3715 = vshrl.u32 %v3714, 7
  %v3716 = vsub.s32 %v3713, %v3715
  %v3717 = vrot.slane %v3710, %v3716
  %v3718 = vcombine.low %v685, %v877
  %v3720 = vunpack.c.l.s4 1934713408
  %v3721 = vunpack.c.0.s8 %v3720
  %v3722 = vlaneseq
  %v3723 = vshrl.u32 %v3722, 7
  %v3724 = vsub.s32 %v3721, %v3723
  %v3725 = vrot.slane %v3718, %v3724
  %v3726 = vcombine.low %v1069, %v1261
  %v3728 = vunpack.c.l.s4 1934713408
  %v3729 = vunpack.c.0.s8 %v3728
  %v3730 = vlaneseq
  %v3731 = vshrl.u32 %v3730, 7
  %v3732 = vsub.s32 %v3729, %v3731
  %v3733 = vrot.slane %v3726, %v3732
  %v3734 = vcombine.low %v1453, %v1645
  %v3736 = vunpack.c.l.s4 1934713408
  %v3737 = vunpack.c.0.s8 %v3736
  %v3738 = vlaneseq
  %v3739 = vshrl.u32 %v3738, 7
  %v3740 = vsub.s32 %v3737, %v3739
  %v3741 = vrot.slane %v3734, %v3740
  %v3742 = vcombine.low %v317, %v509
  %v3744 = vunpack.c.l.s4 1934713408
  %v3745 = vunpack.c.0.s8 %v3744
  %v3746 = vlaneseq
  %v3747 = vshrl.u32 %v3746, 7
  %v3748 = vsub.s32 %v3745, %v3747
  %v3749 = vrot.slane %v3742, %v3748
  %v3750 = vcombine.low %v701, %v893
  %v3752 = vunpack.c.l.s4 1934713408
  %v3753 = vunpack.c.0.s8 %v3752
  %v3754 = vlaneseq
  %v3755 = vshrl.u32 %v3754, 7
  %v3756 = vsub.s32 %v3753, %v3755
  %v3757 = vrot.slane %v3750, %v3756
  %v3758 = vcombine.low %v1085, %v1277
  %v3760 = vunpack.c.l.s4 1934713408
  %v3761 = vunpack.c.0.s8 %v3760
  %v3762 = vlaneseq
  %v3763 = vshrl.u32 %v3762, 7
  %v3764 = vsub.s32 %v3761, %v3763
  %v3765 = vrot.slane %v3758, %v3764
  %v3766 = vcombine.low %v1469, %v1661
  %v3768 = vunpack.c.l.s4 1934713408
  %v3769 = vunpack.c.0.s8 %v3768
  %v3770 = vlaneseq
  %v3771 = vshrl.u32 %v3770, 7
  %v3772 = vsub.s32 %v3769, %v3771
  %v3773 = vrot.slane %v3766, %v3772
  %v3774 = vld [vmem:[%s0] sm:$0xff]
  %v3775 = vld [vmem:[%s1] sm:$0xff]
  %3777 = vset.pattern.permute.xlu0 0
  %3778 = vperm.xlu0 %3777, %v3775
  %v3779 = vpop.permute.xlu0 %3778
  %v4037 = vcombine.low %v1733, %v1741
  %v4038 = vcombine.low %v1749, %v1757
  %v4040 = vunpack.c.l.s4 1983009808
  %v4041 = vunpack.c.0.s8 %v4040
  %v4042 = vlaneseq
  %v4043 = vshrl.u32 %v4042, 7
  %v4044 = vsub.s32 %v4041, %v4043
  %v4045 = vrot.slane %v4037, %v4044
  %v4047 = vunpack.c.l.s4 1983009808
  %v4048 = vunpack.c.0.s8 %v4047
  %v4049 = vlaneseq
  %v4050 = vshrl.u32 %v4049, 7
  %v4051 = vsub.s32 %v4048, %v4050
  %v4052 = vrot.slane %v4038, %v4051
  %v4053 = vcombine.low %v4045, %v4052
  %v4054 = vcombine.low %v1989, %v1997
  %v4055 = vcombine.low %v2005, %v2013
  %v4057 = vunpack.c.l.s4 1983009808
  %v4058 = vunpack.c.0.s8 %v4057
  %v4059 = vlaneseq
  %v4060 = vshrl.u32 %v4059, 7
  %v4061 = vsub.s32 %v4058, %v4060
  %v4062 = vrot.slane %v4054, %v4061
  %v4064 = vunpack.c.l.s4 1983009808
  %v4065 = vunpack.c.0.s8 %v4064
  %v4066 = vlaneseq
  %v4067 = vshrl.u32 %v4066, 7
  %v4068 = vsub.s32 %v4065, %v4067
  %v4069 = vrot.slane %v4055, %v4068
  %v4070 = vcombine.low %v4062, %v4069
  %v4071 = vcombine.low %v2245, %v2253
  %v4072 = vcombine.low %v2261, %v2269
  %v4074 = vunpack.c.l.s4 1983009808
  %v4075 = vunpack.c.0.s8 %v4074
  %v4076 = vlaneseq
  %v4077 = vshrl.u32 %v4076, 7
  %v4078 = vsub.s32 %v4075, %v4077
  %v4079 = vrot.slane %v4071, %v4078
  %v4081 = vunpack.c.l.s4 1983009808
  %v4082 = vunpack.c.0.s8 %v4081
  %v4083 = vlaneseq
  %v4084 = vshrl.u32 %v4083, 7
  %v4085 = vsub.s32 %v4082, %v4084
  %v4086 = vrot.slane %v4072, %v4085
  %v4087 = vcombine.low %v4079, %v4086
  %v4088 = vcombine.low %v2501, %v2509
  %v4089 = vcombine.low %v2517, %v2525
  %v4091 = vunpack.c.l.s4 1983009808
  %v4092 = vunpack.c.0.s8 %v4091
  %v4093 = vlaneseq
  %v4094 = vshrl.u32 %v4093, 7
  %v4095 = vsub.s32 %v4092, %v4094
  %v4096 = vrot.slane %v4088, %v4095
  %v4098 = vunpack.c.l.s4 1983009808
  %v4099 = vunpack.c.0.s8 %v4098
  %v4100 = vlaneseq
  %v4101 = vshrl.u32 %v4100, 7
  %v4102 = vsub.s32 %v4099, %v4101
  %v4103 = vrot.slane %v4089, %v4102
  %v4104 = vcombine.low %v4096, %v4103
  %v4105 = vcombine.low %v2757, %v2765
  %v4106 = vcombine.low %v2773, %v2781
  %v4108 = vunpack.c.l.s4 1983009808
  %v4109 = vunpack.c.0.s8 %v4108
  %v4110 = vlaneseq
  %v4111 = vshrl.u32 %v4110, 7
  %v4112 = vsub.s32 %v4109, %v4111
  %v4113 = vrot.slane %v4105, %v4112
  %v4115 = vunpack.c.l.s4 1983009808
  %v4116 = vunpack.c.0.s8 %v4115
  %v4117 = vlaneseq
  %v4118 = vshrl.u32 %v4117, 7
  %v4119 = vsub.s32 %v4116, %v4118
  %v4120 = vrot.slane %v4106, %v4119
  %v4121 = vcombine.low %v4113, %v4120
  %v4122 = vcombine.low %v3013, %v3021
  %v4123 = vcombine.low %v3029, %v3037
  %v4125 = vunpack.c.l.s4 1983009808
  %v4126 = vunpack.c.0.s8 %v4125
  %v4127 = vlaneseq
  %v4128 = vshrl.u32 %v4127, 7
  %v4129 = vsub.s32 %v4126, %v4128
  %v4130 = vrot.slane %v4122, %v4129
  %v4132 = vunpack.c.l.s4 1983009808
  %v4133 = vunpack.c.0.s8 %v4132
  %v4134 = vlaneseq
  %v4135 = vshrl.u32 %v4134, 7
  %v4136 = vsub.s32 %v4133, %v4135
  %v4137 = vrot.slane %v4123, %v4136
  %v4138 = vcombine.low %v4130, %v4137
  %v4139 = vcombine.low %v3269, %v3277
  %v4140 = vcombine.low %v3285, %v3293
  %v4142 = vunpack.c.l.s4 1983009808
  %v4143 = vunpack.c.0.s8 %v4142
  %v4144 = vlaneseq
  %v4145 = vshrl.u32 %v4144, 7
  %v4146 = vsub.s32 %v4143, %v4145
  %v4147 = vrot.slane %v4139, %v4146
  %v4149 = vunpack.c.l.s4 1983009808
  %v4150 = vunpack.c.0.s8 %v4149
  %v4151 = vlaneseq
  %v4152 = vshrl.u32 %v4151, 7
  %v4153 = vsub.s32 %v4150, %v4152
  %v4154 = vrot.slane %v4140, %v4153
  %v4155 = vcombine.low %v4147, %v4154
  %v4156 = vcombine.low %v3525, %v3533
  %v4157 = vcombine.low %v3541, %v3549
  %v4159 = vunpack.c.l.s4 1983009808
  %v4160 = vunpack.c.0.s8 %v4159
  %v4161 = vlaneseq
  %v4162 = vshrl.u32 %v4161, 7
  %v4163 = vsub.s32 %v4160, %v4162
  %v4164 = vrot.slane %v4156, %v4163
  %v4166 = vunpack.c.l.s4 1983009808
  %v4167 = vunpack.c.0.s8 %v4166
  %v4168 = vlaneseq
  %v4169 = vshrl.u32 %v4168, 7
  %v4170 = vsub.s32 %v4167, %v4169
  %v4171 = vrot.slane %v4157, %v4170
  %v4172 = vcombine.low %v4164, %v4171
  %v4173 = vcombine.low %v1765, %v1773
  %v4174 = vcombine.low %v1781, %v1789
  %v4176 = vunpack.c.l.s4 1983009808
  %v4177 = vunpack.c.0.s8 %v4176
  %v4178 = vlaneseq
  %v4179 = vshrl.u32 %v4178, 7
  %v4180 = vsub.s32 %v4177, %v4179
  %v4181 = vrot.slane %v4173, %v4180
  %v4183 = vunpack.c.l.s4 1983009808
  %v4184 = vunpack.c.0.s8 %v4183
  %v4185 = vlaneseq
  %v4186 = vshrl.u32 %v4185, 7
  %v4187 = vsub.s32 %v4184, %v4186
  %v4188 = vrot.slane %v4174, %v4187
  %v4189 = vcombine.low %v4181, %v4188
  %v4190 = vcombine.low %v2021, %v2029
  %v4191 = vcombine.low %v2037, %v2045
  %v4193 = vunpack.c.l.s4 1983009808
  %v4194 = vunpack.c.0.s8 %v4193
  %v4195 = vlaneseq
  %v4196 = vshrl.u32 %v4195, 7
  %v4197 = vsub.s32 %v4194, %v4196
  %v4198 = vrot.slane %v4190, %v4197
  %v4200 = vunpack.c.l.s4 1983009808
  %v4201 = vunpack.c.0.s8 %v4200
  %v4202 = vlaneseq
  %v4203 = vshrl.u32 %v4202, 7
  %v4204 = vsub.s32 %v4201, %v4203
  %v4205 = vrot.slane %v4191, %v4204
  %v4206 = vcombine.low %v4198, %v4205
  %v4207 = vcombine.low %v2277, %v2285
  %v4208 = vcombine.low %v2293, %v2301
  %v4210 = vunpack.c.l.s4 1983009808
  %v4211 = vunpack.c.0.s8 %v4210
  %v4212 = vlaneseq
  %v4213 = vshrl.u32 %v4212, 7
  %v4214 = vsub.s32 %v4211, %v4213
  %v4215 = vrot.slane %v4207, %v4214
  %v4217 = vunpack.c.l.s4 1983009808
  %v4218 = vunpack.c.0.s8 %v4217
  %v4219 = vlaneseq
  %v4220 = vshrl.u32 %v4219, 7
  %v4221 = vsub.s32 %v4218, %v4220
  %v4222 = vrot.slane %v4208, %v4221
  %v4223 = vcombine.low %v4215, %v4222
  %v4224 = vcombine.low %v2533, %v2541
  %v4225 = vcombine.low %v2549, %v2557
  %v4227 = vunpack.c.l.s4 1983009808
  %v4228 = vunpack.c.0.s8 %v4227
  %v4229 = vlaneseq
  %v4230 = vshrl.u32 %v4229, 7
  %v4231 = vsub.s32 %v4228, %v4230
  %v4232 = vrot.slane %v4224, %v4231
  %v4234 = vunpack.c.l.s4 1983009808
  %v4235 = vunpack.c.0.s8 %v4234
  %v4236 = vlaneseq
  %v4237 = vshrl.u32 %v4236, 7
  %v4238 = vsub.s32 %v4235, %v4237
  %v4239 = vrot.slane %v4225, %v4238
  %v4240 = vcombine.low %v4232, %v4239
  %v4241 = vcombine.low %v2789, %v2797
  %v4242 = vcombine.low %v2805, %v2813
  %v4244 = vunpack.c.l.s4 1983009808
  %v4245 = vunpack.c.0.s8 %v4244
  %v4246 = vlaneseq
  %v4247 = vshrl.u32 %v4246, 7
  %v4248 = vsub.s32 %v4245, %v4247
  %v4249 = vrot.slane %v4241, %v4248
  %v4251 = vunpack.c.l.s4 1983009808
  %v4252 = vunpack.c.0.s8 %v4251
  %v4253 = vlaneseq
  %v4254 = vshrl.u32 %v4253, 7
  %v4255 = vsub.s32 %v4252, %v4254
  %v4256 = vrot.slane %v4242, %v4255
  %v4257 = vcombine.low %v4249, %v4256
  %v4258 = vcombine.low %v3045, %v3053
  %v4259 = vcombine.low %v3061, %v3069
  %v4261 = vunpack.c.l.s4 1983009808
  %v4262 = vunpack.c.0.s8 %v4261
  %v4263 = vlaneseq
  %v4264 = vshrl.u32 %v4263, 7
  %v4265 = vsub.s32 %v4262, %v4264
  %v4266 = vrot.slane %v4258, %v4265
  %v4268 = vunpack.c.l.s4 1983009808
  %v4269 = vunpack.c.0.s8 %v4268
  %v4270 = vlaneseq
  %v4271 = vshrl.u32 %v4270, 7
  %v4272 = vsub.s32 %v4269, %v4271
  %v4273 = vrot.slane %v4259, %v4272
  %v4274 = vcombine.low %v4266, %v4273
  %v4275 = vcombine.low %v3301, %v3309
  %v4276 = vcombine.low %v3317, %v3325
  %v4278 = vunpack.c.l.s4 1983009808
  %v4279 = vunpack.c.0.s8 %v4278
  %v4280 = vlaneseq
  %v4281 = vshrl.u32 %v4280, 7
  %v4282 = vsub.s32 %v4279, %v4281
  %v4283 = vrot.slane %v4275, %v4282
  %v4285 = vunpack.c.l.s4 1983009808
  %v4286 = vunpack.c.0.s8 %v4285
  %v4287 = vlaneseq
  %v4288 = vshrl.u32 %v4287, 7
  %v4289 = vsub.s32 %v4286, %v4288
  %v4290 = vrot.slane %v4276, %v4289
  %v4291 = vcombine.low %v4283, %v4290
  %v4292 = vcombine.low %v3557, %v3565
  %v4293 = vcombine.low %v3573, %v3581
  %v4295 = vunpack.c.l.s4 1983009808
  %v4296 = vunpack.c.0.s8 %v4295
  %v4297 = vlaneseq
  %v4298 = vshrl.u32 %v4297, 7
  %v4299 = vsub.s32 %v4296, %v4298
  %v4300 = vrot.slane %v4292, %v4299
  %v4302 = vunpack.c.l.s4 1983009808
  %v4303 = vunpack.c.0.s8 %v4302
  %v4304 = vlaneseq
  %v4305 = vshrl.u32 %v4304, 7
  %v4306 = vsub.s32 %v4303, %v4305
  %v4307 = vrot.slane %v4293, %v4306
  %v4308 = vcombine.low %v4300, %v4307
  %v4309 = vcombine.low %v1797, %v1805
  %v4310 = vcombine.low %v1813, %v1821
  %v4312 = vunpack.c.l.s4 1983009808
  %v4313 = vunpack.c.0.s8 %v4312
  %v4314 = vlaneseq
  %v4315 = vshrl.u32 %v4314, 7
  %v4316 = vsub.s32 %v4313, %v4315
  %v4317 = vrot.slane %v4309, %v4316
  %v4319 = vunpack.c.l.s4 1983009808
  %v4320 = vunpack.c.0.s8 %v4319
  %v4321 = vlaneseq
  %v4322 = vshrl.u32 %v4321, 7
  %v4323 = vsub.s32 %v4320, %v4322
  %v4324 = vrot.slane %v4310, %v4323
  %v4325 = vcombine.low %v4317, %v4324
  %v4326 = vcombine.low %v2053, %v2061
  %v4327 = vcombine.low %v2069, %v2077
  %v4329 = vunpack.c.l.s4 1983009808
  %v4330 = vunpack.c.0.s8 %v4329
  %v4331 = vlaneseq
  %v4332 = vshrl.u32 %v4331, 7
  %v4333 = vsub.s32 %v4330, %v4332
  %v4334 = vrot.slane %v4326, %v4333
  %v4336 = vunpack.c.l.s4 1983009808
  %v4337 = vunpack.c.0.s8 %v4336
  %v4338 = vlaneseq
  %v4339 = vshrl.u32 %v4338, 7
  %v4340 = vsub.s32 %v4337, %v4339
  %v4341 = vrot.slane %v4327, %v4340
  %v4342 = vcombine.low %v4334, %v4341
  %v4343 = vcombine.low %v2309, %v2317
  %v4344 = vcombine.low %v2325, %v2333
  %v4346 = vunpack.c.l.s4 1983009808
  %v4347 = vunpack.c.0.s8 %v4346
  %v4348 = vlaneseq
  %v4349 = vshrl.u32 %v4348, 7
  %v4350 = vsub.s32 %v4347, %v4349
  %v4351 = vrot.slane %v4343, %v4350
  %v4353 = vunpack.c.l.s4 1983009808
  %v4354 = vunpack.c.0.s8 %v4353
  %v4355 = vlaneseq
  %v4356 = vshrl.u32 %v4355, 7
  %v4357 = vsub.s32 %v4354, %v4356
  %v4358 = vrot.slane %v4344, %v4357
  %v4359 = vcombine.low %v4351, %v4358
  %v4360 = vcombine.low %v2565, %v2573
  %v4361 = vcombine.low %v2581, %v2589
  %v4363 = vunpack.c.l.s4 1983009808
  %v4364 = vunpack.c.0.s8 %v4363
  %v4365 = vlaneseq
  %v4366 = vshrl.u32 %v4365, 7
  %v4367 = vsub.s32 %v4364, %v4366
  %v4368 = vrot.slane %v4360, %v4367
  %v4370 = vunpack.c.l.s4 1983009808
  %v4371 = vunpack.c.0.s8 %v4370
  %v4372 = vlaneseq
  %v4373 = vshrl.u32 %v4372, 7
  %v4374 = vsub.s32 %v4371, %v4373
  %v4375 = vrot.slane %v4361, %v4374
  %v4376 = vcombine.low %v4368, %v4375
  %v4377 = vcombine.low %v2821, %v2829
  %v4378 = vcombine.low %v2837, %v2845
  %v4380 = vunpack.c.l.s4 1983009808
  %v4381 = vunpack.c.0.s8 %v4380
  %v4382 = vlaneseq
  %v4383 = vshrl.u32 %v4382, 7
  %v4384 = vsub.s32 %v4381, %v4383
  %v4385 = vrot.slane %v4377, %v4384
  %v4387 = vunpack.c.l.s4 1983009808
  %v4388 = vunpack.c.0.s8 %v4387
  %v4389 = vlaneseq
  %v4390 = vshrl.u32 %v4389, 7
  %v4391 = vsub.s32 %v4388, %v4390
  %v4392 = vrot.slane %v4378, %v4391
  %v4393 = vcombine.low %v4385, %v4392
  %v4394 = vcombine.low %v3077, %v3085
  %v4395 = vcombine.low %v3093, %v3101
  %v4397 = vunpack.c.l.s4 1983009808
  %v4398 = vunpack.c.0.s8 %v4397
  %v4399 = vlaneseq
  %v4400 = vshrl.u32 %v4399, 7
  %v4401 = vsub.s32 %v4398, %v4400
  %v4402 = vrot.slane %v4394, %v4401
  %v4404 = vunpack.c.l.s4 1983009808
  %v4405 = vunpack.c.0.s8 %v4404
  %v4406 = vlaneseq
  %v4407 = vshrl.u32 %v4406, 7
  %v4408 = vsub.s32 %v4405, %v4407
  %v4409 = vrot.slane %v4395, %v4408
  %v4410 = vcombine.low %v4402, %v4409
  %v4411 = vcombine.low %v3333, %v3341
  %v4412 = vcombine.low %v3349, %v3357
  %v4414 = vunpack.c.l.s4 1983009808
  %v4415 = vunpack.c.0.s8 %v4414
  %v4416 = vlaneseq
  %v4417 = vshrl.u32 %v4416, 7
  %v4418 = vsub.s32 %v4415, %v4417
  %v4419 = vrot.slane %v4411, %v4418
  %v4421 = vunpack.c.l.s4 1983009808
  %v4422 = vunpack.c.0.s8 %v4421
  %v4423 = vlaneseq
  %v4424 = vshrl.u32 %v4423, 7
  %v4425 = vsub.s32 %v4422, %v4424
  %v4426 = vrot.slane %v4412, %v4425
  %v4427 = vcombine.low %v4419, %v4426
  %v4428 = vcombine.low %v3589, %v3597
  %v4429 = vcombine.low %v3605, %v3613
  %v4431 = vunpack.c.l.s4 1983009808
  %v4432 = vunpack.c.0.s8 %v4431
  %v4433 = vlaneseq
  %v4434 = vshrl.u32 %v4433, 7
  %v4435 = vsub.s32 %v4432, %v4434
  %v4436 = vrot.slane %v4428, %v4435
  %v4438 = vunpack.c.l.s4 1983009808
  %v4439 = vunpack.c.0.s8 %v4438
  %v4440 = vlaneseq
  %v4441 = vshrl.u32 %v4440, 7
  %v4442 = vsub.s32 %v4439, %v4441
  %v4443 = vrot.slane %v4429, %v4442
  %v4444 = vcombine.low %v4436, %v4443
  %v4445 = vcombine.low %v1829, %v1837
  %v4446 = vcombine.low %v1845, %v1853
  %v4448 = vunpack.c.l.s4 1983009808
  %v4449 = vunpack.c.0.s8 %v4448
  %v4450 = vlaneseq
  %v4451 = vshrl.u32 %v4450, 7
  %v4452 = vsub.s32 %v4449, %v4451
  %v4453 = vrot.slane %v4445, %v4452
  %v4455 = vunpack.c.l.s4 1983009808
  %v4456 = vunpack.c.0.s8 %v4455
  %v4457 = vlaneseq
  %v4458 = vshrl.u32 %v4457, 7
  %v4459 = vsub.s32 %v4456, %v4458
  %v4460 = vrot.slane %v4446, %v4459
  %v4461 = vcombine.low %v4453, %v4460
  %v4462 = vcombine.low %v2085, %v2093
  %v4463 = vcombine.low %v2101, %v2109
  %v4465 = vunpack.c.l.s4 1983009808
  %v4466 = vunpack.c.0.s8 %v4465
  %v4467 = vlaneseq
  %v4468 = vshrl.u32 %v4467, 7
  %v4469 = vsub.s32 %v4466, %v4468
  %v4470 = vrot.slane %v4462, %v4469
  %v4472 = vunpack.c.l.s4 1983009808
  %v4473 = vunpack.c.0.s8 %v4472
  %v4474 = vlaneseq
  %v4475 = vshrl.u32 %v4474, 7
  %v4476 = vsub.s32 %v4473, %v4475
  %v4477 = vrot.slane %v4463, %v4476
  %v4478 = vcombine.low %v4470, %v4477
  %v4479 = vcombine.low %v2341, %v2349
  %v4480 = vcombine.low %v2357, %v2365
  %v4482 = vunpack.c.l.s4 1983009808
  %v4483 = vunpack.c.0.s8 %v4482
  %v4484 = vlaneseq
  %v4485 = vshrl.u32 %v4484, 7
  %v4486 = vsub.s32 %v4483, %v4485
  %v4487 = vrot.slane %v4479, %v4486
  %v4489 = vunpack.c.l.s4 1983009808
  %v4490 = vunpack.c.0.s8 %v4489
  %v4491 = vlaneseq
  %v4492 = vshrl.u32 %v4491, 7
  %v4493 = vsub.s32 %v4490, %v4492
  %v4494 = vrot.slane %v4480, %v4493
  %v4495 = vcombine.low %v4487, %v4494
  %v4496 = vcombine.low %v2597, %v2605
  %v4497 = vcombine.low %v2613, %v2621
  %v4499 = vunpack.c.l.s4 1983009808
  %v4500 = vunpack.c.0.s8 %v4499
  %v4501 = vlaneseq
  %v4502 = vshrl.u32 %v4501, 7
  %v4503 = vsub.s32 %v4500, %v4502
  %v4504 = vrot.slane %v4496, %v4503
  %v4506 = vunpack.c.l.s4 1983009808
  %v4507 = vunpack.c.0.s8 %v4506
  %v4508 = vlaneseq
  %v4509 = vshrl.u32 %v4508, 7
  %v4510 = vsub.s32 %v4507, %v4509
  %v4511 = vrot.slane %v4497, %v4510
  %v4512 = vcombine.low %v4504, %v4511
  %v4513 = vcombine.low %v2853, %v2861
  %v4514 = vcombine.low %v2869, %v2877
  %v4516 = vunpack.c.l.s4 1983009808
  %v4517 = vunpack.c.0.s8 %v4516
  %v4518 = vlaneseq
  %v4519 = vshrl.u32 %v4518, 7
  %v4520 = vsub.s32 %v4517, %v4519
  %v4521 = vrot.slane %v4513, %v4520
  %v4523 = vunpack.c.l.s4 1983009808
  %v4524 = vunpack.c.0.s8 %v4523
  %v4525 = vlaneseq
  %v4526 = vshrl.u32 %v4525, 7
  %v4527 = vsub.s32 %v4524, %v4526
  %v4528 = vrot.slane %v4514, %v4527
  %v4529 = vcombine.low %v4521, %v4528
  %v4530 = vcombine.low %v3109, %v3117
  %v4531 = vcombine.low %v3125, %v3133
  %v4533 = vunpack.c.l.s4 1983009808
  %v4534 = vunpack.c.0.s8 %v4533
  %v4535 = vlaneseq
  %v4536 = vshrl.u32 %v4535, 7
  %v4537 = vsub.s32 %v4534, %v4536
  %v4538 = vrot.slane %v4530, %v4537
  %v4540 = vunpack.c.l.s4 1983009808
  %v4541 = vunpack.c.0.s8 %v4540
  %v4542 = vlaneseq
  %v4543 = vshrl.u32 %v4542, 7
  %v4544 = vsub.s32 %v4541, %v4543
  %v4545 = vrot.slane %v4531, %v4544
  %v4546 = vcombine.low %v4538, %v4545
  %v4547 = vcombine.low %v3365, %v3373
  %v4548 = vcombine.low %v3381, %v3389
  %v4550 = vunpack.c.l.s4 1983009808
  %v4551 = vunpack.c.0.s8 %v4550
  %v4552 = vlaneseq
  %v4553 = vshrl.u32 %v4552, 7
  %v4554 = vsub.s32 %v4551, %v4553
  %v4555 = vrot.slane %v4547, %v4554
  %v4557 = vunpack.c.l.s4 1983009808
  %v4558 = vunpack.c.0.s8 %v4557
  %v4559 = vlaneseq
  %v4560 = vshrl.u32 %v4559, 7
  %v4561 = vsub.s32 %v4558, %v4560
  %v4562 = vrot.slane %v4548, %v4561
  %v4563 = vcombine.low %v4555, %v4562
  %v4564 = vcombine.low %v3621, %v3629
  %v4565 = vcombine.low %v3637, %v3645
  %v4567 = vunpack.c.l.s4 1983009808
  %v4568 = vunpack.c.0.s8 %v4567
  %v4569 = vlaneseq
  %v4570 = vshrl.u32 %v4569, 7
  %v4571 = vsub.s32 %v4568, %v4570
  %v4572 = vrot.slane %v4564, %v4571
  %v4574 = vunpack.c.l.s4 1983009808
  %v4575 = vunpack.c.0.s8 %v4574
  %v4576 = vlaneseq
  %v4577 = vshrl.u32 %v4576, 7
  %v4578 = vsub.s32 %v4575, %v4577
  %v4579 = vrot.slane %v4565, %v4578
  %v4580 = vcombine.low %v4572, %v4579
  %v4581 = vcombine.low %v1861, %v1869
  %v4582 = vcombine.low %v1877, %v1885
  %v4584 = vunpack.c.l.s4 1983009808
  %v4585 = vunpack.c.0.s8 %v4584
  %v4586 = vlaneseq
  %v4587 = vshrl.u32 %v4586, 7
  %v4588 = vsub.s32 %v4585, %v4587
  %v4589 = vrot.slane %v4581, %v4588
  %v4591 = vunpack.c.l.s4 1983009808
  %v4592 = vunpack.c.0.s8 %v4591
  %v4593 = vlaneseq
  %v4594 = vshrl.u32 %v4593, 7
  %v4595 = vsub.s32 %v4592, %v4594
  %v4596 = vrot.slane %v4582, %v4595
  %v4597 = vcombine.low %v4589, %v4596
  %v4598 = vcombine.low %v2117, %v2125
  %v4599 = vcombine.low %v2133, %v2141
  %v4601 = vunpack.c.l.s4 1983009808
  %v4602 = vunpack.c.0.s8 %v4601
  %v4603 = vlaneseq
  %v4604 = vshrl.u32 %v4603, 7
  %v4605 = vsub.s32 %v4602, %v4604
  %v4606 = vrot.slane %v4598, %v4605
  %v4608 = vunpack.c.l.s4 1983009808
  %v4609 = vunpack.c.0.s8 %v4608
  %v4610 = vlaneseq
  %v4611 = vshrl.u32 %v4610, 7
  %v4612 = vsub.s32 %v4609, %v4611
  %v4613 = vrot.slane %v4599, %v4612
  %v4614 = vcombine.low %v4606, %v4613
  %v4615 = vcombine.low %v2373, %v2381
  %v4616 = vcombine.low %v2389, %v2397
  %v4618 = vunpack.c.l.s4 1983009808
  %v4619 = vunpack.c.0.s8 %v4618
  %v4620 = vlaneseq
  %v4621 = vshrl.u32 %v4620, 7
  %v4622 = vsub.s32 %v4619, %v4621
  %v4623 = vrot.slane %v4615, %v4622
  %v4625 = vunpack.c.l.s4 1983009808
  %v4626 = vunpack.c.0.s8 %v4625
  %v4627 = vlaneseq
  %v4628 = vshrl.u32 %v4627, 7
  %v4629 = vsub.s32 %v4626, %v4628
  %v4630 = vrot.slane %v4616, %v4629
  %v4631 = vcombine.low %v4623, %v4630
  %v4632 = vcombine.low %v2629, %v2637
  %v4633 = vcombine.low %v2645, %v2653
  %v4635 = vunpack.c.l.s4 1983009808
  %v4636 = vunpack.c.0.s8 %v4635
  %v4637 = vlaneseq
  %v4638 = vshrl.u32 %v4637, 7
  %v4639 = vsub.s32 %v4636, %v4638
  %v4640 = vrot.slane %v4632, %v4639
  %v4642 = vunpack.c.l.s4 1983009808
  %v4643 = vunpack.c.0.s8 %v4642
  %v4644 = vlaneseq
  %v4645 = vshrl.u32 %v4644, 7
  %v4646 = vsub.s32 %v4643, %v4645
  %v4647 = vrot.slane %v4633, %v4646
  %v4648 = vcombine.low %v4640, %v4647
  %v4649 = vcombine.low %v2885, %v2893
  %v4650 = vcombine.low %v2901, %v2909
  %v4652 = vunpack.c.l.s4 1983009808
  %v4653 = vunpack.c.0.s8 %v4652
  %v4654 = vlaneseq
  %v4655 = vshrl.u32 %v4654, 7
  %v4656 = vsub.s32 %v4653, %v4655
  %v4657 = vrot.slane %v4649, %v4656
  %v4659 = vunpack.c.l.s4 1983009808
  %v4660 = vunpack.c.0.s8 %v4659
  %v4661 = vlaneseq
  %v4662 = vshrl.u32 %v4661, 7
  %v4663 = vsub.s32 %v4660, %v4662
  %v4664 = vrot.slane %v4650, %v4663
  %v4665 = vcombine.low %v4657, %v4664
  %v4666 = vcombine.low %v3141, %v3149
  %v4667 = vcombine.low %v3157, %v3165
  %v4669 = vunpack.c.l.s4 1983009808
  %v4670 = vunpack.c.0.s8 %v4669
  %v4671 = vlaneseq
  %v4672 = vshrl.u32 %v4671, 7
  %v4673 = vsub.s32 %v4670, %v4672
  %v4674 = vrot.slane %v4666, %v4673
  %v4676 = vunpack.c.l.s4 1983009808
  %v4677 = vunpack.c.0.s8 %v4676
  %v4678 = vlaneseq
  %v4679 = vshrl.u32 %v4678, 7
  %v4680 = vsub.s32 %v4677, %v4679
  %v4681 = vrot.slane %v4667, %v4680
  %v4682 = vcombine.low %v4674, %v4681
  %v4683 = vcombine.low %v3397, %v3405
  %v4684 = vcombine.low %v3413, %v3421
  %v4686 = vunpack.c.l.s4 1983009808
  %v4687 = vunpack.c.0.s8 %v4686
  %v4688 = vlaneseq
  %v4689 = vshrl.u32 %v4688, 7
  %v4690 = vsub.s32 %v4687, %v4689
  %v4691 = vrot.slane %v4683, %v4690
  %v4693 = vunpack.c.l.s4 1983009808
  %v4694 = vunpack.c.0.s8 %v4693
  %v4695 = vlaneseq
  %v4696 = vshrl.u32 %v4695, 7
  %v4697 = vsub.s32 %v4694, %v4696
  %v4698 = vrot.slane %v4684, %v4697
  %v4699 = vcombine.low %v4691, %v4698
  %v4700 = vcombine.low %v3653, %v3661
  %v4701 = vcombine.low %v3669, %v3677
  %v4703 = vunpack.c.l.s4 1983009808
  %v4704 = vunpack.c.0.s8 %v4703
  %v4705 = vlaneseq
  %v4706 = vshrl.u32 %v4705, 7
  %v4707 = vsub.s32 %v4704, %v4706
  %v4708 = vrot.slane %v4700, %v4707
  %v4710 = vunpack.c.l.s4 1983009808
  %v4711 = vunpack.c.0.s8 %v4710
  %v4712 = vlaneseq
  %v4713 = vshrl.u32 %v4712, 7
  %v4714 = vsub.s32 %v4711, %v4713
  %v4715 = vrot.slane %v4701, %v4714
  %v4716 = vcombine.low %v4708, %v4715
  %v4717 = vcombine.low %v1893, %v1901
  %v4718 = vcombine.low %v1909, %v1917
  %v4720 = vunpack.c.l.s4 1983009808
  %v4721 = vunpack.c.0.s8 %v4720
  %v4722 = vlaneseq
  %v4723 = vshrl.u32 %v4722, 7
  %v4724 = vsub.s32 %v4721, %v4723
  %v4725 = vrot.slane %v4717, %v4724
  %v4727 = vunpack.c.l.s4 1983009808
  %v4728 = vunpack.c.0.s8 %v4727
  %v4729 = vlaneseq
  %v4730 = vshrl.u32 %v4729, 7
  %v4731 = vsub.s32 %v4728, %v4730
  %v4732 = vrot.slane %v4718, %v4731
  %v4733 = vcombine.low %v4725, %v4732
  %v4734 = vcombine.low %v2149, %v2157
  %v4735 = vcombine.low %v2165, %v2173
  %v4737 = vunpack.c.l.s4 1983009808
  %v4738 = vunpack.c.0.s8 %v4737
  %v4739 = vlaneseq
  %v4740 = vshrl.u32 %v4739, 7
  %v4741 = vsub.s32 %v4738, %v4740
  %v4742 = vrot.slane %v4734, %v4741
  %v4744 = vunpack.c.l.s4 1983009808
  %v4745 = vunpack.c.0.s8 %v4744
  %v4746 = vlaneseq
  %v4747 = vshrl.u32 %v4746, 7
  %v4748 = vsub.s32 %v4745, %v4747
  %v4749 = vrot.slane %v4735, %v4748
  %v4750 = vcombine.low %v4742, %v4749
  %v4751 = vcombine.low %v2405, %v2413
  %v4752 = vcombine.low %v2421, %v2429
  %v4754 = vunpack.c.l.s4 1983009808
  %v4755 = vunpack.c.0.s8 %v4754
  %v4756 = vlaneseq
  %v4757 = vshrl.u32 %v4756, 7
  %v4758 = vsub.s32 %v4755, %v4757
  %v4759 = vrot.slane %v4751, %v4758
  %v4761 = vunpack.c.l.s4 1983009808
  %v4762 = vunpack.c.0.s8 %v4761
  %v4763 = vlaneseq
  %v4764 = vshrl.u32 %v4763, 7
  %v4765 = vsub.s32 %v4762, %v4764
  %v4766 = vrot.slane %v4752, %v4765
  %v4767 = vcombine.low %v4759, %v4766
  %v4768 = vcombine.low %v2661, %v2669
  %v4769 = vcombine.low %v2677, %v2685
  %v4771 = vunpack.c.l.s4 1983009808
  %v4772 = vunpack.c.0.s8 %v4771
  %v4773 = vlaneseq
  %v4774 = vshrl.u32 %v4773, 7
  %v4775 = vsub.s32 %v4772, %v4774
  %v4776 = vrot.slane %v4768, %v4775
  %v4778 = vunpack.c.l.s4 1983009808
  %v4779 = vunpack.c.0.s8 %v4778
  %v4780 = vlaneseq
  %v4781 = vshrl.u32 %v4780, 7
  %v4782 = vsub.s32 %v4779, %v4781
  %v4783 = vrot.slane %v4769, %v4782
  %v4784 = vcombine.low %v4776, %v4783
  %v4785 = vcombine.low %v2917, %v2925
  %v4786 = vcombine.low %v2933, %v2941
  %v4788 = vunpack.c.l.s4 1983009808
  %v4789 = vunpack.c.0.s8 %v4788
  %v4790 = vlaneseq
  %v4791 = vshrl.u32 %v4790, 7
  %v4792 = vsub.s32 %v4789, %v4791
  %v4793 = vrot.slane %v4785, %v4792
  %v4795 = vunpack.c.l.s4 1983009808
  %v4796 = vunpack.c.0.s8 %v4795
  %v4797 = vlaneseq
  %v4798 = vshrl.u32 %v4797, 7
  %v4799 = vsub.s32 %v4796, %v4798
  %v4800 = vrot.slane %v4786, %v4799
  %v4801 = vcombine.low %v4793, %v4800
  %v4802 = vcombine.low %v3173, %v3181
  %v4803 = vcombine.low %v3189, %v3197
  %v4805 = vunpack.c.l.s4 1983009808
  %v4806 = vunpack.c.0.s8 %v4805
  %v4807 = vlaneseq
  %v4808 = vshrl.u32 %v4807, 7
  %v4809 = vsub.s32 %v4806, %v4808
  %v4810 = vrot.slane %v4802, %v4809
  %v4812 = vunpack.c.l.s4 1983009808
  %v4813 = vunpack.c.0.s8 %v4812
  %v4814 = vlaneseq
  %v4815 = vshrl.u32 %v4814, 7
  %v4816 = vsub.s32 %v4813, %v4815
  %v4817 = vrot.slane %v4803, %v4816
  %v4818 = vcombine.low %v4810, %v4817
  %v4819 = vcombine.low %v3429, %v3437
  %v4820 = vcombine.low %v3445, %v3453
  %v4822 = vunpack.c.l.s4 1983009808
  %v4823 = vunpack.c.0.s8 %v4822
  %v4824 = vlaneseq
  %v4825 = vshrl.u32 %v4824, 7
  %v4826 = vsub.s32 %v4823, %v4825
  %v4827 = vrot.slane %v4819, %v4826
  %v4829 = vunpack.c.l.s4 1983009808
  %v4830 = vunpack.c.0.s8 %v4829
  %v4831 = vlaneseq
  %v4832 = vshrl.u32 %v4831, 7
  %v4833 = vsub.s32 %v4830, %v4832
  %v4834 = vrot.slane %v4820, %v4833
  %v4835 = vcombine.low %v4827, %v4834
  %v4836 = vcombine.low %v3685, %v3693
  %v4837 = vcombine.low %v3701, %v3709
  %v4839 = vunpack.c.l.s4 1983009808
  %v4840 = vunpack.c.0.s8 %v4839
  %v4841 = vlaneseq
  %v4842 = vshrl.u32 %v4841, 7
  %v4843 = vsub.s32 %v4840, %v4842
  %v4844 = vrot.slane %v4836, %v4843
  %v4846 = vunpack.c.l.s4 1983009808
  %v4847 = vunpack.c.0.s8 %v4846
  %v4848 = vlaneseq
  %v4849 = vshrl.u32 %v4848, 7
  %v4850 = vsub.s32 %v4847, %v4849
  %v4851 = vrot.slane %v4837, %v4850
  %v4852 = vcombine.low %v4844, %v4851
  %v4853 = vcombine.low %v1925, %v1933
  %v4854 = vcombine.low %v1941, %v1949
  %v4856 = vunpack.c.l.s4 1983009808
  %v4857 = vunpack.c.0.s8 %v4856
  %v4858 = vlaneseq
  %v4859 = vshrl.u32 %v4858, 7
  %v4860 = vsub.s32 %v4857, %v4859
  %v4861 = vrot.slane %v4853, %v4860
  %v4863 = vunpack.c.l.s4 1983009808
  %v4864 = vunpack.c.0.s8 %v4863
  %v4865 = vlaneseq
  %v4866 = vshrl.u32 %v4865, 7
  %v4867 = vsub.s32 %v4864, %v4866
  %v4868 = vrot.slane %v4854, %v4867
  %v4869 = vcombine.low %v4861, %v4868
  %v4870 = vcombine.low %v2181, %v2189
  %v4871 = vcombine.low %v2197, %v2205
  %v4873 = vunpack.c.l.s4 1983009808
  %v4874 = vunpack.c.0.s8 %v4873
  %v4875 = vlaneseq
  %v4876 = vshrl.u32 %v4875, 7
  %v4877 = vsub.s32 %v4874, %v4876
  %v4878 = vrot.slane %v4870, %v4877
  %v4880 = vunpack.c.l.s4 1983009808
  %v4881 = vunpack.c.0.s8 %v4880
  %v4882 = vlaneseq
  %v4883 = vshrl.u32 %v4882, 7
  %v4884 = vsub.s32 %v4881, %v4883
  %v4885 = vrot.slane %v4871, %v4884
  %v4886 = vcombine.low %v4878, %v4885
  %v4887 = vcombine.low %v2437, %v2445
  %v4888 = vcombine.low %v2453, %v2461
  %v4890 = vunpack.c.l.s4 1983009808
  %v4891 = vunpack.c.0.s8 %v4890
  %v4892 = vlaneseq
  %v4893 = vshrl.u32 %v4892, 7
  %v4894 = vsub.s32 %v4891, %v4893
  %v4895 = vrot.slane %v4887, %v4894
  %v4897 = vunpack.c.l.s4 1983009808
  %v4898 = vunpack.c.0.s8 %v4897
  %v4899 = vlaneseq
  %v4900 = vshrl.u32 %v4899, 7
  %v4901 = vsub.s32 %v4898, %v4900
  %v4902 = vrot.slane %v4888, %v4901
  %v4903 = vcombine.low %v4895, %v4902
  %v4904 = vcombine.low %v2693, %v2701
  %v4905 = vcombine.low %v2709, %v2717
  %v4907 = vunpack.c.l.s4 1983009808
  %v4908 = vunpack.c.0.s8 %v4907
  %v4909 = vlaneseq
  %v4910 = vshrl.u32 %v4909, 7
  %v4911 = vsub.s32 %v4908, %v4910
  %v4912 = vrot.slane %v4904, %v4911
  %v4914 = vunpack.c.l.s4 1983009808
  %v4915 = vunpack.c.0.s8 %v4914
  %v4916 = vlaneseq
  %v4917 = vshrl.u32 %v4916, 7
  %v4918 = vsub.s32 %v4915, %v4917
  %v4919 = vrot.slane %v4905, %v4918
  %v4920 = vcombine.low %v4912, %v4919
  %v4921 = vcombine.low %v2949, %v2957
  %v4922 = vcombine.low %v2965, %v2973
  %v4924 = vunpack.c.l.s4 1983009808
  %v4925 = vunpack.c.0.s8 %v4924
  %v4926 = vlaneseq
  %v4927 = vshrl.u32 %v4926, 7
  %v4928 = vsub.s32 %v4925, %v4927
  %v4929 = vrot.slane %v4921, %v4928
  %v4931 = vunpack.c.l.s4 1983009808
  %v4932 = vunpack.c.0.s8 %v4931
  %v4933 = vlaneseq
  %v4934 = vshrl.u32 %v4933, 7
  %v4935 = vsub.s32 %v4932, %v4934
  %v4936 = vrot.slane %v4922, %v4935
  %v4937 = vcombine.low %v4929, %v4936
  %v4938 = vcombine.low %v3205, %v3213
  %v4939 = vcombine.low %v3221, %v3229
  %v4941 = vunpack.c.l.s4 1983009808
  %v4942 = vunpack.c.0.s8 %v4941
  %v4943 = vlaneseq
  %v4944 = vshrl.u32 %v4943, 7
  %v4945 = vsub.s32 %v4942, %v4944
  %v4946 = vrot.slane %v4938, %v4945
  %v4948 = vunpack.c.l.s4 1983009808
  %v4949 = vunpack.c.0.s8 %v4948
  %v4950 = vlaneseq
  %v4951 = vshrl.u32 %v4950, 7
  %v4952 = vsub.s32 %v4949, %v4951
  %v4953 = vrot.slane %v4939, %v4952
  %v4954 = vcombine.low %v4946, %v4953
  %v4955 = vcombine.low %v3461, %v3469
  %v4956 = vcombine.low %v3477, %v3485
  %v4958 = vunpack.c.l.s4 1983009808
  %v4959 = vunpack.c.0.s8 %v4958
  %v4960 = vlaneseq
  %v4961 = vshrl.u32 %v4960, 7
  %v4962 = vsub.s32 %v4959, %v4961
  %v4963 = vrot.slane %v4955, %v4962
  %v4965 = vunpack.c.l.s4 1983009808
  %v4966 = vunpack.c.0.s8 %v4965
  %v4967 = vlaneseq
  %v4968 = vshrl.u32 %v4967, 7
  %v4969 = vsub.s32 %v4966, %v4968
  %v4970 = vrot.slane %v4956, %v4969
  %v4971 = vcombine.low %v4963, %v4970
  %v4972 = vcombine.low %v3717, %v3725
  %v4973 = vcombine.low %v3733, %v3741
  %v4975 = vunpack.c.l.s4 1983009808
  %v4976 = vunpack.c.0.s8 %v4975
  %v4977 = vlaneseq
  %v4978 = vshrl.u32 %v4977, 7
  %v4979 = vsub.s32 %v4976, %v4978
  %v4980 = vrot.slane %v4972, %v4979
  %v4982 = vunpack.c.l.s4 1983009808
  %v4983 = vunpack.c.0.s8 %v4982
  %v4984 = vlaneseq
  %v4985 = vshrl.u32 %v4984, 7
  %v4986 = vsub.s32 %v4983, %v4985
  %v4987 = vrot.slane %v4973, %v4986
  %v4988 = vcombine.low %v4980, %v4987
  %v4989 = vcombine.low %v1957, %v1965
  %v4990 = vcombine.low %v1973, %v1981
  %v4992 = vunpack.c.l.s4 1983009808
  %v4993 = vunpack.c.0.s8 %v4992
  %v4994 = vlaneseq
  %v4995 = vshrl.u32 %v4994, 7
  %v4996 = vsub.s32 %v4993, %v4995
  %v4997 = vrot.slane %v4989, %v4996
  %v4999 = vunpack.c.l.s4 1983009808
  %v5000 = vunpack.c.0.s8 %v4999
  %v5001 = vlaneseq
  %v5002 = vshrl.u32 %v5001, 7
  %v5003 = vsub.s32 %v5000, %v5002
  %v5004 = vrot.slane %v4990, %v5003
  %v5005 = vcombine.low %v4997, %v5004
  %v5006 = vcombine.low %v2213, %v2221
  %v5007 = vcombine.low %v2229, %v2237
  %v5009 = vunpack.c.l.s4 1983009808
  %v5010 = vunpack.c.0.s8 %v5009
  %v5011 = vlaneseq
  %v5012 = vshrl.u32 %v5011, 7
  %v5013 = vsub.s32 %v5010, %v5012
  %v5014 = vrot.slane %v5006, %v5013
  %v5016 = vunpack.c.l.s4 1983009808
  %v5017 = vunpack.c.0.s8 %v5016
  %v5018 = vlaneseq
  %v5019 = vshrl.u32 %v5018, 7
  %v5020 = vsub.s32 %v5017, %v5019
  %v5021 = vrot.slane %v5007, %v5020
  %v5022 = vcombine.low %v5014, %v5021
  %v5023 = vcombine.low %v2469, %v2477
  %v5024 = vcombine.low %v2485, %v2493
  %v5026 = vunpack.c.l.s4 1983009808
  %v5027 = vunpack.c.0.s8 %v5026
  %v5028 = vlaneseq
  %v5029 = vshrl.u32 %v5028, 7
  %v5030 = vsub.s32 %v5027, %v5029
  %v5031 = vrot.slane %v5023, %v5030
  %v5033 = vunpack.c.l.s4 1983009808
  %v5034 = vunpack.c.0.s8 %v5033
  %v5035 = vlaneseq
  %v5036 = vshrl.u32 %v5035, 7
  %v5037 = vsub.s32 %v5034, %v5036
  %v5038 = vrot.slane %v5024, %v5037
  %v5039 = vcombine.low %v5031, %v5038
  %v5040 = vcombine.low %v2725, %v2733
  %v5041 = vcombine.low %v2741, %v2749
  %v5043 = vunpack.c.l.s4 1983009808
  %v5044 = vunpack.c.0.s8 %v5043
  %v5045 = vlaneseq
  %v5046 = vshrl.u32 %v5045, 7
  %v5047 = vsub.s32 %v5044, %v5046
  %v5048 = vrot.slane %v5040, %v5047
  %v5050 = vunpack.c.l.s4 1983009808
  %v5051 = vunpack.c.0.s8 %v5050
  %v5052 = vlaneseq
  %v5053 = vshrl.u32 %v5052, 7
  %v5054 = vsub.s32 %v5051, %v5053
  %v5055 = vrot.slane %v5041, %v5054
  %v5056 = vcombine.low %v5048, %v5055
  %v5057 = vcombine.low %v2981, %v2989
  %v5058 = vcombine.low %v2997, %v3005
  %v5060 = vunpack.c.l.s4 1983009808
  %v5061 = vunpack.c.0.s8 %v5060
  %v5062 = vlaneseq
  %v5063 = vshrl.u32 %v5062, 7
  %v5064 = vsub.s32 %v5061, %v5063
  %v5065 = vrot.slane %v5057, %v5064
  %v5067 = vunpack.c.l.s4 1983009808
  %v5068 = vunpack.c.0.s8 %v5067
  %v5069 = vlaneseq
  %v5070 = vshrl.u32 %v5069, 7
  %v5071 = vsub.s32 %v5068, %v5070
  %v5072 = vrot.slane %v5058, %v5071
  %v5073 = vcombine.low %v5065, %v5072
  %v5074 = vcombine.low %v3237, %v3245
  %v5075 = vcombine.low %v3253, %v3261
  %v5077 = vunpack.c.l.s4 1983009808
  %v5078 = vunpack.c.0.s8 %v5077
  %v5079 = vlaneseq
  %v5080 = vshrl.u32 %v5079, 7
  %v5081 = vsub.s32 %v5078, %v5080
  %v5082 = vrot.slane %v5074, %v5081
  %v5084 = vunpack.c.l.s4 1983009808
  %v5085 = vunpack.c.0.s8 %v5084
  %v5086 = vlaneseq
  %v5087 = vshrl.u32 %v5086, 7
  %v5088 = vsub.s32 %v5085, %v5087
  %v5089 = vrot.slane %v5075, %v5088
  %v5090 = vcombine.low %v5082, %v5089
  %v5091 = vcombine.low %v3493, %v3501
  %v5092 = vcombine.low %v3509, %v3517
  %v5094 = vunpack.c.l.s4 1983009808
  %v5095 = vunpack.c.0.s8 %v5094
  %v5096 = vlaneseq
  %v5097 = vshrl.u32 %v5096, 7
  %v5098 = vsub.s32 %v5095, %v5097
  %v5099 = vrot.slane %v5091, %v5098
  %v5101 = vunpack.c.l.s4 1983009808
  %v5102 = vunpack.c.0.s8 %v5101
  %v5103 = vlaneseq
  %v5104 = vshrl.u32 %v5103, 7
  %v5105 = vsub.s32 %v5102, %v5104
  %v5106 = vrot.slane %v5092, %v5105
  %v5107 = vcombine.low %v5099, %v5106
  %v5108 = vcombine.low %v3749, %v3757
  %v5109 = vcombine.low %v3765, %v3773
  %v5111 = vunpack.c.l.s4 1983009808
  %v5112 = vunpack.c.0.s8 %v5111
  %v5113 = vlaneseq
  %v5114 = vshrl.u32 %v5113, 7
  %v5115 = vsub.s32 %v5112, %v5114
  %v5116 = vrot.slane %v5108, %v5115
  %v5118 = vunpack.c.l.s4 1983009808
  %v5119 = vunpack.c.0.s8 %v5118
  %v5120 = vlaneseq
  %v5121 = vshrl.u32 %v5120, 7
  %v5122 = vsub.s32 %v5119, %v5121
  %v5123 = vrot.slane %v5109, %v5122
  %v5124 = vcombine.low %v5116, %v5123
  %5125 = vset.pattern.permute.xlu0 0
  %5126 = vperm.xlu0 %5125, %v4053
  %v5127 = vpop.permute.xlu0 %5126
  %5128 = vset.pattern.permute.xlu0 0
  %5129 = vperm.xlu0 %5128, %v4070
  %v5130 = vpop.permute.xlu0 %5129
  %5131 = vset.pattern.permute.xlu0 0
  %5132 = vperm.xlu0 %5131, %v4087
  %v5133 = vpop.permute.xlu0 %5132
  %5134 = vset.pattern.permute.xlu0 0
  %5135 = vperm.xlu0 %5134, %v4104
  %v5136 = vpop.permute.xlu0 %5135
  %5137 = vset.pattern.permute.xlu0 0
  %5138 = vperm.xlu0 %5137, %v4121
  %v5139 = vpop.permute.xlu0 %5138
  %5140 = vset.pattern.permute.xlu0 0
  %5141 = vperm.xlu0 %5140, %v4138
  %v5142 = vpop.permute.xlu0 %5141
  %5143 = vset.pattern.permute.xlu0 0
  %5144 = vperm.xlu0 %5143, %v4155
  %v5145 = vpop.permute.xlu0 %5144
  %5146 = vset.pattern.permute.xlu0 0
  %5147 = vperm.xlu0 %5146, %v4172
  %v5148 = vpop.permute.xlu0 %5147
  %5149 = vset.pattern.permute.xlu0 0
  %5150 = vperm.xlu0 %5149, %v4189
  %v5151 = vpop.permute.xlu0 %5150
  %5152 = vset.pattern.permute.xlu0 0
  %5153 = vperm.xlu0 %5152, %v4206
  %v5154 = vpop.permute.xlu0 %5153
  %5155 = vset.pattern.permute.xlu0 0
  %5156 = vperm.xlu0 %5155, %v4223
  %v5157 = vpop.permute.xlu0 %5156
  %5158 = vset.pattern.permute.xlu0 0
  %5159 = vperm.xlu0 %5158, %v4240
  %v5160 = vpop.permute.xlu0 %5159
  %5161 = vset.pattern.permute.xlu0 0
  %5162 = vperm.xlu0 %5161, %v4257
  %v5163 = vpop.permute.xlu0 %5162
  %5164 = vset.pattern.permute.xlu0 0
  %5165 = vperm.xlu0 %5164, %v4274
  %v5166 = vpop.permute.xlu0 %5165
  %5167 = vset.pattern.permute.xlu0 0
  %5168 = vperm.xlu0 %5167, %v4291
  %v5169 = vpop.permute.xlu0 %5168
  %5170 = vset.pattern.permute.xlu0 0
  %5171 = vperm.xlu0 %5170, %v4308
  %v5172 = vpop.permute.xlu0 %5171
  %5173 = vset.pattern.permute.xlu0 0
  %5174 = vperm.xlu0 %5173, %v4325
  %v5175 = vpop.permute.xlu0 %5174
  %5176 = vset.pattern.permute.xlu0 0
  %5177 = vperm.xlu0 %5176, %v4342
  %v5178 = vpop.permute.xlu0 %5177
  %5179 = vset.pattern.permute.xlu0 0
  %5180 = vperm.xlu0 %5179, %v4359
  %v5181 = vpop.permute.xlu0 %5180
  %5182 = vset.pattern.permute.xlu0 0
  %5183 = vperm.xlu0 %5182, %v4376
  %v5184 = vpop.permute.xlu0 %5183
  %5185 = vset.pattern.permute.xlu0 0
  %5186 = vperm.xlu0 %5185, %v4393
  %v5187 = vpop.permute.xlu0 %5186
  %5188 = vset.pattern.permute.xlu0 0
  %5189 = vperm.xlu0 %5188, %v4410
  %v5190 = vpop.permute.xlu0 %5189
  %5191 = vset.pattern.permute.xlu0 0
  %5192 = vperm.xlu0 %5191, %v4427
  %v5193 = vpop.permute.xlu0 %5192
  %5194 = vset.pattern.permute.xlu0 0
  %5195 = vperm.xlu0 %5194, %v4444
  %v5196 = vpop.permute.xlu0 %5195
  %5197 = vset.pattern.permute.xlu0 0
  %5198 = vperm.xlu0 %5197, %v4461
  %v5199 = vpop.permute.xlu0 %5198
  %5200 = vset.pattern.permute.xlu0 0
  %5201 = vperm.xlu0 %5200, %v4478
  %v5202 = vpop.permute.xlu0 %5201
  %5203 = vset.pattern.permute.xlu0 0
  %5204 = vperm.xlu0 %5203, %v4495
  %v5205 = vpop.permute.xlu0 %5204
  %5206 = vset.pattern.permute.xlu0 0
  %5207 = vperm.xlu0 %5206, %v4512
  %v5208 = vpop.permute.xlu0 %5207
  %5209 = vset.pattern.permute.xlu0 0
  %5210 = vperm.xlu0 %5209, %v4529
  %v5211 = vpop.permute.xlu0 %5210
  %5212 = vset.pattern.permute.xlu0 0
  %5213 = vperm.xlu0 %5212, %v4546
  %v5214 = vpop.permute.xlu0 %5213
  %5215 = vset.pattern.permute.xlu0 0
  %5216 = vperm.xlu0 %5215, %v4563
  %v5217 = vpop.permute.xlu0 %5216
  %5218 = vset.pattern.permute.xlu0 0
  %5219 = vperm.xlu0 %5218, %v4580
  %v5220 = vpop.permute.xlu0 %5219
  %5221 = vset.pattern.permute.xlu0 0
  %5222 = vperm.xlu0 %5221, %v4597
  %v5223 = vpop.permute.xlu0 %5222
  %5224 = vset.pattern.permute.xlu0 0
  %5225 = vperm.xlu0 %5224, %v4614
  %v5226 = vpop.permute.xlu0 %5225
  %5227 = vset.pattern.permute.xlu0 0
  %5228 = vperm.xlu0 %5227, %v4631
  %v5229 = vpop.permute.xlu0 %5228
  %5230 = vset.pattern.permute.xlu0 0
  %5231 = vperm.xlu0 %5230, %v4648
  %v5232 = vpop.permute.xlu0 %5231
  %5233 = vset.pattern.permute.xlu0 0
  %5234 = vperm.xlu0 %5233, %v4665
  %v5235 = vpop.permute.xlu0 %5234
  %5236 = vset.pattern.permute.xlu0 0
  %5237 = vperm.xlu0 %5236, %v4682
  %v5238 = vpop.permute.xlu0 %5237
  %5239 = vset.pattern.permute.xlu0 0
  %5240 = vperm.xlu0 %5239, %v4699
  %v5241 = vpop.permute.xlu0 %5240
  %5242 = vset.pattern.permute.xlu0 0
  %5243 = vperm.xlu0 %5242, %v4716
  %v5244 = vpop.permute.xlu0 %5243
  %5245 = vset.pattern.permute.xlu0 0
  %5246 = vperm.xlu0 %5245, %v4733
  %v5247 = vpop.permute.xlu0 %5246
  %5248 = vset.pattern.permute.xlu0 0
  %5249 = vperm.xlu0 %5248, %v4750
  %v5250 = vpop.permute.xlu0 %5249
  %5251 = vset.pattern.permute.xlu0 0
  %5252 = vperm.xlu0 %5251, %v4767
  %v5253 = vpop.permute.xlu0 %5252
  %5254 = vset.pattern.permute.xlu0 0
  %5255 = vperm.xlu0 %5254, %v4784
  %v5256 = vpop.permute.xlu0 %5255
  %5257 = vset.pattern.permute.xlu0 0
  %5258 = vperm.xlu0 %5257, %v4801
  %v5259 = vpop.permute.xlu0 %5258
  %5260 = vset.pattern.permute.xlu0 0
  %5261 = vperm.xlu0 %5260, %v4818
  %v5262 = vpop.permute.xlu0 %5261
  %5263 = vset.pattern.permute.xlu0 0
  %5264 = vperm.xlu0 %5263, %v4835
  %v5265 = vpop.permute.xlu0 %5264
  %5266 = vset.pattern.permute.xlu0 0
  %5267 = vperm.xlu0 %5266, %v4852
  %v5268 = vpop.permute.xlu0 %5267
  %5269 = vset.pattern.permute.xlu0 0
  %5270 = vperm.xlu0 %5269, %v4869
  %v5271 = vpop.permute.xlu0 %5270
  %5272 = vset.pattern.permute.xlu0 0
  %5273 = vperm.xlu0 %5272, %v4886
  %v5274 = vpop.permute.xlu0 %5273
  %5275 = vset.pattern.permute.xlu0 0
  %5276 = vperm.xlu0 %5275, %v4903
  %v5277 = vpop.permute.xlu0 %5276
  %5278 = vset.pattern.permute.xlu0 0
  %5279 = vperm.xlu0 %5278, %v4920
  %v5280 = vpop.permute.xlu0 %5279
  %5281 = vset.pattern.permute.xlu0 0
  %5282 = vperm.xlu0 %5281, %v4937
  %v5283 = vpop.permute.xlu0 %5282
  %5284 = vset.pattern.permute.xlu0 0
  %5285 = vperm.xlu0 %5284, %v4954
  %v5286 = vpop.permute.xlu0 %5285
  %5287 = vset.pattern.permute.xlu0 0
  %5288 = vperm.xlu0 %5287, %v4971
  %v5289 = vpop.permute.xlu0 %5288
  %5290 = vset.pattern.permute.xlu0 0
  %5291 = vperm.xlu0 %5290, %v4988
  %v5292 = vpop.permute.xlu0 %5291
  %5293 = vset.pattern.permute.xlu0 0
  %5294 = vperm.xlu0 %5293, %v5005
  %v5295 = vpop.permute.xlu0 %5294
  %5296 = vset.pattern.permute.xlu0 0
  %5297 = vperm.xlu0 %5296, %v5022
  %v5298 = vpop.permute.xlu0 %5297
  %5299 = vset.pattern.permute.xlu0 0
  %5300 = vperm.xlu0 %5299, %v5039
  %v5301 = vpop.permute.xlu0 %5300
  %5302 = vset.pattern.permute.xlu0 0
  %5303 = vperm.xlu0 %5302, %v5056
  %v5304 = vpop.permute.xlu0 %5303
  %5305 = vset.pattern.permute.xlu0 0
  %5306 = vperm.xlu0 %5305, %v5073
  %v5307 = vpop.permute.xlu0 %5306
  %5308 = vset.pattern.permute.xlu0 0
  %5309 = vperm.xlu0 %5308, %v5090
  %v5310 = vpop.permute.xlu0 %5309
  %5311 = vset.pattern.permute.xlu0 0
  %5312 = vperm.xlu0 %5311, %v5107
  %v5313 = vpop.permute.xlu0 %5312
  %5314 = vset.pattern.permute.xlu0 0
  %5315 = vperm.xlu0 %5314, %v5124
  %v5316 = vpop.permute.xlu0 %5315
  %v5317 = vlaneseq
  %v5318 = vand.u32 %v5317, 127
  %v5319 = vlaneseq
  %v5320 = vshrl.u32 %v5319, 7
  %v5321 = vsub.s32 %v5318, %v5320
  %v5322 = vrot.slane %v5127, %v5321
  %v5323 = vadd.s32 %v5318, 4294967288
  %v5324 = vlaneseq
  %v5325 = vshrl.u32 %v5324, 7
  %v5326 = vsub.s32 %v5323, %v5325
  %v5327 = vrot.slane %v5130, %v5326
  %vm5328 = vcmask 130112
  %v5329 = vsel %vm5328, %v5327, %v5322
  %v5330 = vadd.s32 %v5318, 4294967280
  %v5331 = vlaneseq
  %v5332 = vshrl.u32 %v5331, 7
  %v5333 = vsub.s32 %v5330, %v5332
  %v5334 = vrot.slane %v5133, %v5333
  %vm5335 = vcmask 195712
  %v5336 = vsel %vm5335, %v5334, %v5329
  %v5337 = vadd.s32 %v5318, 4294967272
  %v5338 = vlaneseq
  %v5339 = vshrl.u32 %v5338, 7
  %v5340 = vsub.s32 %v5337, %v5339
  %v5341 = vrot.slane %v5136, %v5340
  %vm5342 = vcmask 261312
  %v5343 = vsel %vm5342, %v5341, %v5336
  %v5344 = vadd.s32 %v5318, 4294967264
  %v5345 = vlaneseq
  %v5346 = vshrl.u32 %v5345, 7
  %v5347 = vsub.s32 %v5344, %v5346
  %v5348 = vrot.slane %v5139, %v5347
  %vm5349 = vcmask 326912
  %v5350 = vsel %vm5349, %v5348, %v5343
  %v5351 = vadd.s32 %v5318, 4294967256
  %v5352 = vlaneseq
  %v5353 = vshrl.u32 %v5352, 7
  %v5354 = vsub.s32 %v5351, %v5353
  %v5355 = vrot.slane %v5142, %v5354
  %vm5356 = vcmask 392512
  %v5357 = vsel %vm5356, %v5355, %v5350
  %v5358 = vadd.s32 %v5318, 4294967248
  %v5359 = vlaneseq
  %v5360 = vshrl.u32 %v5359, 7
  %v5361 = vsub.s32 %v5358, %v5360
  %v5362 = vrot.slane %v5145, %v5361
  %vm5363 = vcmask 458112
  %v5364 = vsel %vm5363, %v5362, %v5357
  %v5365 = vadd.s32 %v5318, 4294967240
  %v5366 = vlaneseq
  %v5367 = vshrl.u32 %v5366, 7
  %v5368 = vsub.s32 %v5365, %v5367
  %v5369 = vrot.slane %v5148, %v5368
  %vm5370 = vcmask 523712
  %v5371 = vsel %vm5370, %v5369, %v5364
  %v5372 = vadd.s32 %v5318, 4294967232
  %v5373 = vlaneseq
  %v5374 = vshrl.u32 %v5373, 7
  %v5375 = vsub.s32 %v5372, %v5374
  %v5376 = vrot.slane %v5151, %v5375
  %vm5377 = vcmask 589312
  %v5378 = vsel %vm5377, %v5376, %v5371
  %v5379 = vadd.s32 %v5318, 4294967224
  %v5380 = vlaneseq
  %v5381 = vshrl.u32 %v5380, 7
  %v5382 = vsub.s32 %v5379, %v5381
  %v5383 = vrot.slane %v5154, %v5382
  %vm5384 = vcmask 654912
  %v5385 = vsel %vm5384, %v5383, %v5378
  %v5386 = vadd.s32 %v5318, 4294967216
  %v5387 = vlaneseq
  %v5388 = vshrl.u32 %v5387, 7
  %v5389 = vsub.s32 %v5386, %v5388
  %v5390 = vrot.slane %v5157, %v5389
  %vm5391 = vcmask 720512
  %v5392 = vsel %vm5391, %v5390, %v5385
  %v5393 = vadd.s32 %v5318, 4294967208
  %v5394 = vlaneseq
  %v5395 = vshrl.u32 %v5394, 7
  %v5396 = vsub.s32 %v5393, %v5395
  %v5397 = vrot.slane %v5160, %v5396
  %vm5398 = vcmask 786112
  %v5399 = vsel %vm5398, %v5397, %v5392
  %v5400 = vadd.s32 %v5318, 4294967200
  %v5401 = vlaneseq
  %v5402 = vshrl.u32 %v5401, 7
  %v5403 = vsub.s32 %v5400, %v5402
  %v5404 = vrot.slane %v5163, %v5403
  %vm5405 = vcmask 851712
  %v5406 = vsel %vm5405, %v5404, %v5399
  %v5407 = vadd.s32 %v5318, 4294967192
  %v5408 = vlaneseq
  %v5409 = vshrl.u32 %v5408, 7
  %v5410 = vsub.s32 %v5407, %v5409
  %v5411 = vrot.slane %v5166, %v5410
  %vm5412 = vcmask 917312
  %v5413 = vsel %vm5412, %v5411, %v5406
  %v5414 = vadd.s32 %v5318, 4294967184
  %v5415 = vlaneseq
  %v5416 = vshrl.u32 %v5415, 7
  %v5417 = vsub.s32 %v5414, %v5416
  %v5418 = vrot.slane %v5169, %v5417
  %vm5419 = vcmask 982912
  %v5420 = vsel %vm5419, %v5418, %v5413
  %v5421 = vadd.s32 %v5318, 4294967176
  %v5422 = vlaneseq
  %v5423 = vshrl.u32 %v5422, 7
  %v5424 = vsub.s32 %v5421, %v5423
  %v5425 = vrot.slane %v5172, %v5424
  %vm5426 = vcmask 1048512
  %v5427 = vsel %vm5426, %v5425, %v5420
  %v5428 = vlaneseq
  %v5429 = vshrl.u32 %v5428, 7
  %v5430 = vsub.s32 %v5318, %v5429
  %v5431 = vrot.slane %v5175, %v5430
  %v5432 = vlaneseq
  %v5433 = vshrl.u32 %v5432, 7
  %v5434 = vsub.s32 %v5323, %v5433
  %v5435 = vrot.slane %v5178, %v5434
  %v5436 = vsel %vm5328, %v5435, %v5431
  %v5437 = vlaneseq
  %v5438 = vshrl.u32 %v5437, 7
  %v5439 = vsub.s32 %v5330, %v5438
  %v5440 = vrot.slane %v5181, %v5439
  %v5441 = vsel %vm5335, %v5440, %v5436
  %v5442 = vlaneseq
  %v5443 = vshrl.u32 %v5442, 7
  %v5444 = vsub.s32 %v5337, %v5443
  %v5445 = vrot.slane %v5184, %v5444
  %v5446 = vsel %vm5342, %v5445, %v5441
  %v5447 = vlaneseq
  %v5448 = vshrl.u32 %v5447, 7
  %v5449 = vsub.s32 %v5344, %v5448
  %v5450 = vrot.slane %v5187, %v5449
  %v5451 = vsel %vm5349, %v5450, %v5446
  %v5452 = vlaneseq
  %v5453 = vshrl.u32 %v5452, 7
  %v5454 = vsub.s32 %v5351, %v5453
  %v5455 = vrot.slane %v5190, %v5454
  %v5456 = vsel %vm5356, %v5455, %v5451
  %v5457 = vlaneseq
  %v5458 = vshrl.u32 %v5457, 7
  %v5459 = vsub.s32 %v5358, %v5458
  %v5460 = vrot.slane %v5193, %v5459
  %v5461 = vsel %vm5363, %v5460, %v5456
  %v5462 = vlaneseq
  %v5463 = vshrl.u32 %v5462, 7
  %v5464 = vsub.s32 %v5365, %v5463
  %v5465 = vrot.slane %v5196, %v5464
  %v5466 = vsel %vm5370, %v5465, %v5461
  %v5467 = vlaneseq
  %v5468 = vshrl.u32 %v5467, 7
  %v5469 = vsub.s32 %v5372, %v5468
  %v5470 = vrot.slane %v5199, %v5469
  %v5471 = vsel %vm5377, %v5470, %v5466
  %v5472 = vlaneseq
  %v5473 = vshrl.u32 %v5472, 7
  %v5474 = vsub.s32 %v5379, %v5473
  %v5475 = vrot.slane %v5202, %v5474
  %v5476 = vsel %vm5384, %v5475, %v5471
  %v5477 = vlaneseq
  %v5478 = vshrl.u32 %v5477, 7
  %v5479 = vsub.s32 %v5386, %v5478
  %v5480 = vrot.slane %v5205, %v5479
  %v5481 = vsel %vm5391, %v5480, %v5476
  %v5482 = vlaneseq
  %v5483 = vshrl.u32 %v5482, 7
  %v5484 = vsub.s32 %v5393, %v5483
  %v5485 = vrot.slane %v5208, %v5484
  %v5486 = vsel %vm5398, %v5485, %v5481
  %v5487 = vlaneseq
  %v5488 = vshrl.u32 %v5487, 7
  %v5489 = vsub.s32 %v5400, %v5488
  %v5490 = vrot.slane %v5211, %v5489
  %v5491 = vsel %vm5405, %v5490, %v5486
  %v5492 = vlaneseq
  %v5493 = vshrl.u32 %v5492, 7
  %v5494 = vsub.s32 %v5407, %v5493
  %v5495 = vrot.slane %v5214, %v5494
  %v5496 = vsel %vm5412, %v5495, %v5491
  %v5497 = vlaneseq
  %v5498 = vshrl.u32 %v5497, 7
  %v5499 = vsub.s32 %v5414, %v5498
  %v5500 = vrot.slane %v5217, %v5499
  %v5501 = vsel %vm5419, %v5500, %v5496
  %v5502 = vlaneseq
  %v5503 = vshrl.u32 %v5502, 7
  %v5504 = vsub.s32 %v5421, %v5503
  %v5505 = vrot.slane %v5220, %v5504
  %v5506 = vsel %vm5426, %v5505, %v5501
  %v5507 = vlaneseq
  %v5508 = vshrl.u32 %v5507, 7
  %v5509 = vsub.s32 %v5318, %v5508
  %v5510 = vrot.slane %v5223, %v5509
  %v5511 = vlaneseq
  %v5512 = vshrl.u32 %v5511, 7
  %v5513 = vsub.s32 %v5323, %v5512
  %v5514 = vrot.slane %v5226, %v5513
  %v5515 = vsel %vm5328, %v5514, %v5510
  %v5516 = vlaneseq
  %v5517 = vshrl.u32 %v5516, 7
  %v5518 = vsub.s32 %v5330, %v5517
  %v5519 = vrot.slane %v5229, %v5518
  %v5520 = vsel %vm5335, %v5519, %v5515
  %v5521 = vlaneseq
  %v5522 = vshrl.u32 %v5521, 7
  %v5523 = vsub.s32 %v5337, %v5522
  %v5524 = vrot.slane %v5232, %v5523
  %v5525 = vsel %vm5342, %v5524, %v5520
  %v5526 = vlaneseq
  %v5527 = vshrl.u32 %v5526, 7
  %v5528 = vsub.s32 %v5344, %v5527
  %v5529 = vrot.slane %v5235, %v5528
  %v5530 = vsel %vm5349, %v5529, %v5525
  %v5531 = vlaneseq
  %v5532 = vshrl.u32 %v5531, 7
  %v5533 = vsub.s32 %v5351, %v5532
  %v5534 = vrot.slane %v5238, %v5533
  %v5535 = vsel %vm5356, %v5534, %v5530
  %v5536 = vlaneseq
  %v5537 = vshrl.u32 %v5536, 7
  %v5538 = vsub.s32 %v5358, %v5537
  %v5539 = vrot.slane %v5241, %v5538
  %v5540 = vsel %vm5363, %v5539, %v5535
  %v5541 = vlaneseq
  %v5542 = vshrl.u32 %v5541, 7
  %v5543 = vsub.s32 %v5365, %v5542
  %v5544 = vrot.slane %v5244, %v5543
  %v5545 = vsel %vm5370, %v5544, %v5540
  %v5546 = vlaneseq
  %v5547 = vshrl.u32 %v5546, 7
  %v5548 = vsub.s32 %v5372, %v5547
  %v5549 = vrot.slane %v5247, %v5548
  %v5550 = vsel %vm5377, %v5549, %v5545
  %v5551 = vlaneseq
  %v5552 = vshrl.u32 %v5551, 7
  %v5553 = vsub.s32 %v5379, %v5552
  %v5554 = vrot.slane %v5250, %v5553
  %v5555 = vsel %vm5384, %v5554, %v5550
  %v5556 = vlaneseq
  %v5557 = vshrl.u32 %v5556, 7
  %v5558 = vsub.s32 %v5386, %v5557
  %v5559 = vrot.slane %v5253, %v5558
  %v5560 = vsel %vm5391, %v5559, %v5555
  %v5561 = vlaneseq
  %v5562 = vshrl.u32 %v5561, 7
  %v5563 = vsub.s32 %v5393, %v5562
  %v5564 = vrot.slane %v5256, %v5563
  %v5565 = vsel %vm5398, %v5564, %v5560
  %v5566 = vlaneseq
  %v5567 = vshrl.u32 %v5566, 7
  %v5568 = vsub.s32 %v5400, %v5567
  %v5569 = vrot.slane %v5259, %v5568
  %v5570 = vsel %vm5405, %v5569, %v5565
  %v5571 = vlaneseq
  %v5572 = vshrl.u32 %v5571, 7
  %v5573 = vsub.s32 %v5407, %v5572
  %v5574 = vrot.slane %v5262, %v5573
  %v5575 = vsel %vm5412, %v5574, %v5570
  %v5576 = vlaneseq
  %v5577 = vshrl.u32 %v5576, 7
  %v5578 = vsub.s32 %v5414, %v5577
  %v5579 = vrot.slane %v5265, %v5578
  %v5580 = vsel %vm5419, %v5579, %v5575
  %v5581 = vlaneseq
  %v5582 = vshrl.u32 %v5581, 7
  %v5583 = vsub.s32 %v5421, %v5582
  %v5584 = vrot.slane %v5268, %v5583
  %v5585 = vsel %vm5426, %v5584, %v5580
  %v5586 = vlaneseq
  %v5587 = vshrl.u32 %v5586, 7
  %v5588 = vsub.s32 %v5318, %v5587
  %v5589 = vrot.slane %v5271, %v5588
  %v5590 = vlaneseq
  %v5591 = vshrl.u32 %v5590, 7
  %v5592 = vsub.s32 %v5323, %v5591
  %v5593 = vrot.slane %v5274, %v5592
  %v5594 = vsel %vm5328, %v5593, %v5589
  %v5595 = vlaneseq
  %v5596 = vshrl.u32 %v5595, 7
  %v5597 = vsub.s32 %v5330, %v5596
  %v5598 = vrot.slane %v5277, %v5597
  %v5599 = vsel %vm5335, %v5598, %v5594
  %v5600 = vlaneseq
  %v5601 = vshrl.u32 %v5600, 7
  %v5602 = vsub.s32 %v5337, %v5601
  %v5603 = vrot.slane %v5280, %v5602
  %v5604 = vsel %vm5342, %v5603, %v5599
  %v5605 = vlaneseq
  %v5606 = vshrl.u32 %v5605, 7
  %v5607 = vsub.s32 %v5344, %v5606
  %v5608 = vrot.slane %v5283, %v5607
  %v5609 = vsel %vm5349, %v5608, %v5604
  %v5610 = vlaneseq
  %v5611 = vshrl.u32 %v5610, 7
  %v5612 = vsub.s32 %v5351, %v5611
  %v5613 = vrot.slane %v5286, %v5612
  %v5614 = vsel %vm5356, %v5613, %v5609
  %v5615 = vlaneseq
  %v5616 = vshrl.u32 %v5615, 7
  %v5617 = vsub.s32 %v5358, %v5616
  %v5618 = vrot.slane %v5289, %v5617
  %v5619 = vsel %vm5363, %v5618, %v5614
  %v5620 = vlaneseq
  %v5621 = vshrl.u32 %v5620, 7
  %v5622 = vsub.s32 %v5365, %v5621
  %v5623 = vrot.slane %v5292, %v5622
  %v5624 = vsel %vm5370, %v5623, %v5619
  %v5625 = vlaneseq
  %v5626 = vshrl.u32 %v5625, 7
  %v5627 = vsub.s32 %v5372, %v5626
  %v5628 = vrot.slane %v5295, %v5627
  %v5629 = vsel %vm5377, %v5628, %v5624
  %v5630 = vlaneseq
  %v5631 = vshrl.u32 %v5630, 7
  %v5632 = vsub.s32 %v5379, %v5631
  %v5633 = vrot.slane %v5298, %v5632
  %v5634 = vsel %vm5384, %v5633, %v5629
  %v5635 = vlaneseq
  %v5636 = vshrl.u32 %v5635, 7
  %v5637 = vsub.s32 %v5386, %v5636
  %v5638 = vrot.slane %v5301, %v5637
  %v5639 = vsel %vm5391, %v5638, %v5634
  %v5640 = vlaneseq
  %v5641 = vshrl.u32 %v5640, 7
  %v5642 = vsub.s32 %v5393, %v5641
  %v5643 = vrot.slane %v5304, %v5642
  %v5644 = vsel %vm5398, %v5643, %v5639
  %v5645 = vlaneseq
  %v5646 = vshrl.u32 %v5645, 7
  %v5647 = vsub.s32 %v5400, %v5646
  %v5648 = vrot.slane %v5307, %v5647
  %v5649 = vsel %vm5405, %v5648, %v5644
  %v5650 = vlaneseq
  %v5651 = vshrl.u32 %v5650, 7
  %v5652 = vsub.s32 %v5407, %v5651
  %v5653 = vrot.slane %v5310, %v5652
  %v5654 = vsel %vm5412, %v5653, %v5649
  %v5655 = vlaneseq
  %v5656 = vshrl.u32 %v5655, 7
  %v5657 = vsub.s32 %v5414, %v5656
  %v5658 = vrot.slane %v5313, %v5657
  %v5659 = vsel %vm5419, %v5658, %v5654
  %v5660 = vlaneseq
  %v5661 = vshrl.u32 %v5660, 7
  %v5662 = vsub.s32 %v5421, %v5661
  %v5663 = vrot.slane %v5316, %v5662
  %v5664 = vsel %vm5426, %v5663, %v5659
  %vm5665 = vcmask 1041409
  %v5666 = vsel %vm5665, %v5506, %v5427
  %vm5667 = vcmask 1042434
  %v5668 = vsel %vm5667, %v5585, %v5666
  %vm5669 = vcmask 1043459
  %v5670 = vsel %vm5669, %v5664, %v5668
  %vm5671 = vcmask 31744
  %v5673 = vsel %vm5671, %v3774, 0
  %vm5675 = vcmask 1043456
  %v5676 = vsel %vm5675, %v5670, 0
  %5678 = vmatprep.subr.mxu0 0.0
  %5679 = vmatpush1.msra.mxu0 0.0
  %5680 = vmatprep.subr.mxu0 0.0
  %5681 = vmatpush1.msra.mxu0 0.0
  %5682 = vmatprep.subr.mxu0 0.0
  %5683 = vmatpush1.msra.mxu0 0.0
  %5684 = vmatprep.subr.mxu0 0.0
  %5685 = vmatpush1.msra.mxu0 0.0
  %5686 = vmatprep.subr.mxu0 0.0
  %5687 = vmatpush1.msra.mxu0 0.0
  %5688 = vmatprep.subr.mxu0 0.0
  %5689 = vmatpush1.msra.mxu0 0.0
  %5690 = vmatprep.subr.mxu0 0.0
  %5691 = vmatpush1.msra.mxu0 0.0
  %5692 = vmatprep.subr.mxu0 0.0
  %5693 = vmatpush1.msra.mxu0 0.0
  %5694 = vmatprep.subr.mxu0 0.0
  %5695 = vmatpush1.msra.mxu0 0.0
  %5696 = vmatprep.subr.mxu0 0.0
  %5697 = vmatpush1.msra.mxu0 0.0
  %5698 = vmatprep.subr.mxu0 0.0
  %5699 = vmatpush1.msra.mxu0 0.0
  %5700 = vmatprep.subr.mxu0 0.0
  %5701 = vmatpush1.msra.mxu0 0.0
  %5702 = vmatprep.subr.mxu0 0.0
  %5703 = vmatpush1.msra.mxu0 0.0
  %5704 = vmatprep.subr.mxu0 0.0
  %5705 = vmatpush1.msra.mxu0 0.0
  %5706 = vmatprep.subr.mxu0 0.0
  %5707 = vmatpush1.msra.mxu0 0.0
  %5708 = vmatprep.subr.mxu0 0.0
  %5709 = vmatpush1.msra.mxu0 %v5676
  %5710 = vmatprep.subr.mxu0 0.0
  %5711 = vmatpush2.msra.mxu0 0.0
  %5712 = vmatprep.subr.mxu0 0.0
  %5713 = vmatpush2.msra.mxu0 0.0
  %5714 = vmatprep.subr.mxu0 0.0
  %5715 = vmatpush2.msra.mxu0 0.0
  %5716 = vmatprep.subr.mxu0 0.0
  %5717 = vmatpush2.msra.mxu0 0.0
  %5718 = vmatprep.subr.mxu0 0.0
  %5719 = vmatpush2.msra.mxu0 0.0
  %5720 = vmatprep.subr.mxu0 0.0
  %5721 = vmatpush2.msra.mxu0 0.0
  %5722 = vmatprep.subr.mxu0 0.0
  %5723 = vmatpush2.msra.mxu0 0.0
  %5724 = vmatprep.subr.mxu0 0.0
  %5725 = vmatpush2.msra.mxu0 0.0
  %5726 = vmatprep.subr.mxu0 0.0
  %5727 = vmatpush2.msra.mxu0 0.0
  %5728 = vmatprep.subr.mxu0 0.0
  %5729 = vmatpush2.msra.mxu0 0.0
  %5730 = vmatprep.subr.mxu0 0.0
  %5731 = vmatpush2.msra.mxu0 0.0
  %5732 = vmatprep.subr.mxu0 0.0
  %5733 = vmatpush2.msra.mxu0 0.0
  %5734 = vmatprep.subr.mxu0 0.0
  %5735 = vmatpush2.msra.mxu0 0.0
  %5736 = vmatprep.subr.mxu0 0.0
  %5737 = vmatpush2.msra.mxu0 0.0
  %5738 = vmatprep.subr.mxu0 0.0
  %5739 = vmatpush2.msra.mxu0 0.0
  %5740 = vmatprep.subr.mxu0 0.0
  %5741 = vmatpush2.msra.mxu0 0.0
  %5742 = vmatprep.mubr.f32.mxu0 0.0
  %5743 = vmatmul.mubr.f32.gmra.mxu0 %v5673
  %v5744 = vpop.f32.mrf.mxu0
  %v5745 = vadd.f32 %v3779, %v5744
  %v5746 = vpop.f32.mrf.mxu0
  %5747 = vdwg.mxu0
  %5748 = vst [vmem:[%s3] sm:$0xff] %v5745
  // Predicated region
  $region14: #{_downsample_forward.1} parent=0 // pred_check
    _
  $region15: #{_downsample_forward.1} parent=0 // pred_check_branch
    %5750 = sbr.rel (0) target = $region17
  $region16: #{_downsample_forward.1} parent=0 // pred_region
    _
  $region17: #{_downsample_forward.1} parent=0 // pred_fallthru
    _
  // Predicated region
  $region18: #{_downsample_forward.1} parent=0 // pred_check
    _
  $region19: #{_downsample_forward.1} parent=0 // pred_check_branch
    %5752 = sbr.rel (0) target = $region21
  $region20: #{_downsample_forward.1} parent=0 // pred_region
    _
  $region21: #{_downsample_forward.1} parent=0 // pred_fallthru
    _

</llo_original>
